<compile_context>
chip_gen: v7x
topology: tpu7x:2x2x1
jax: 0.10.0
libtpu: 0.0.40
codegen_flags: <defaults>
</compile_context>

<pallas_src>
import functools

import jax
import jax.numpy as jnp
import numpy as np
from jax import lax
from jax.experimental import pallas as pl
from jax.experimental.pallas import tpu as pltpu

EXPANSION = 4
BN_EPS = 1e-5
LANE = 128              # pad channel dims to multiples of the TPU lane width
DEFAULT_BLOCK_M = 512   # pixel rows per grid step for the 1x1-matmul kernels
                        # (~85% of HBM roofline on v6e; also fine for v5e/v7x)


# ----------------------------------------------------------------------------
# small helpers
# ----------------------------------------------------------------------------
def _round_up(x, m):
    return (x + m - 1) // m * m


def _pad_to(a, shape):
    """Zero-pad `a` up to `shape` (each target dim >= source dim)."""
    pads = [(0, s - d) for s, d in zip(shape, a.shape)]
    if all(p == (0, 0) for p in pads):
        return a
    return jnp.pad(a, pads)


def _vmem_limit_bytes():
    """Per-generation scoped-VMEM budget: ~75% of physical, <=100 MiB.

    -> ~96 MiB on v5e/v6e (128 MiB physical), ~48 MiB on v7x (64 MiB physical).
    """
    try:
        cap = int(pltpu.get_tpu_info().vmem_capacity_bytes)
    except Exception:
        return None
    return min(cap * 3 // 4, 100 * 1024 * 1024)


def _compiler_params():
    # All grid axes here write disjoint output tiles -> parallel (megacore).
    return pltpu.CompilerParams(
        dimension_semantics=("parallel",),
        vmem_limit_bytes=_vmem_limit_bytes(),
    )


def _pinned_spec(block_shape):
    """Grid-invariant operand pinned at block (0, ..., 0) (stays VMEM-resident)."""
    ndim = len(block_shape)
    return pl.BlockSpec(block_shape, lambda i: (0,) * ndim)


def _cost(flops, out_bytes, *arrays):
    bytes_accessed = int(out_bytes) + sum(int(a.size) * a.dtype.itemsize for a in arrays)
    return pl.CostEstimate(flops=int(flops), transcendentals=0,
                           bytes_accessed=int(bytes_accessed))


# ----------------------------------------------------------------------------
# Pallas kernels
# ----------------------------------------------------------------------------
def _fused_conv1_conv2_kernel(x_ref, w1_ref, b1_ref, w2_ref, b2_ref, o_ref,
                              trip_ref, *, h, w):
    """conv1(1x1)+bn1+relu -> conv2(3x3,pad=1)+bn2+relu, fused, one image.

    x_ref   : (1, h, w, Cin_p)  bf16 NHWC input image
    w1_ref  : (Cin_p, P)        bf16 conv1 weight (bn1 scale folded in)
    b1_ref  : (1, P)            f32 folded bn1 bias
    w2_ref  : (3, 3*P, P)       bf16 conv2 taps; per dh the 3 dw taps are
                                concatenated along K (bn2 scale folded in)
    b2_ref  : (1, P)            f32 folded bn2 bias
    o_ref   : (h*w, P)          bf16 output pixel slab for this image
    trip_ref: (h+2, w, 3*P)     bf16 VMEM scratch: spatially padded y1 with the
                                three horizontal shifts concatenated on lanes
    """
    p = o_ref.shape[-1]
    cin = x_ref.shape[-1]

    # ---- conv1 (1x1) + bn1 + relu : one MXU matmul, f32 accumulate ----------
    y1 = jnp.dot(x_ref[...].reshape(h * w, cin), w1_ref[...],
                 preferred_element_type=jnp.float32)
    y1 = jnp.maximum(y1 + b1_ref[...], 0.0).reshape(h, w, p)

    # ---- stage the dw-concatenated, zero-padded y1 slab in VMEM -------------
    # trip[r, j, dw*P:(dw+1)*P] == y1_padded[r, j+dw];  y1 never leaves VMEM and
    # only 3 shifted copies are built (instead of 9 per-tap patches).
    zcol = jnp.zeros((h, 1, p), jnp.float32)
    left = jnp.concatenate([zcol, y1[:, :w - 1, :]], axis=1)    # y1[:, j-1]
    right = jnp.concatenate([y1[:, 1:, :], zcol], axis=1)       # y1[:, j+1]
    zrow = jnp.zeros((1, w, 3 * p), jnp.bfloat16)
    trip_ref[0:1] = zrow                                        # top halo row
    trip_ref[h + 1:h + 2] = zrow                                # bottom halo row
    trip_ref[1:h + 1, :, 0:p] = left.astype(jnp.bfloat16)
    trip_ref[1:h + 1, :, p:2 * p] = y1.astype(jnp.bfloat16)
    trip_ref[1:h + 1, :, 2 * p:3 * p] = right.astype(jnp.bfloat16)

    # ---- conv2 (3x3, pad=1) + bn2 + relu : 3 MXU matmuls with K = 3*P -------
    acc = jnp.zeros((h * w, p), jnp.float32)
    for dh in range(3):                                         # unrolled
        slab = trip_ref[dh:dh + h].reshape(h * w, 3 * p)
        acc = acc + jnp.dot(slab, w2_ref[dh], preferred_element_type=jnp.float32)
    o_ref[...] = jnp.maximum(acc + b2_ref[...], 0.0).astype(o_ref.dtype)


def _matmul_bias_res_relu_kernel(y_ref, w3_ref, b3_ref, res_ref, o_ref):
    """o = relu(y @ w3 + b3 + residual)   (identity-shortcut path, bf16 I/O)."""
    acc = jnp.dot(y_ref[...], w3_ref[...], preferred_element_type=jnp.float32)
    out = acc + b3_ref[...] + res_ref[...].astype(jnp.float32)
    o_ref[...] = jnp.maximum(out, 0.0).astype(o_ref.dtype)


def _dual_matmul_bias_relu_kernel(y_ref, w3_ref, x_ref, ws_ref, b_ref, o_ref):
    """o = relu(y @ w3 + x @ ws + b)   (fused conv3 + projection shortcut)."""
    acc = jnp.dot(y_ref[...], w3_ref[...], preferred_element_type=jnp.float32)
    acc = acc + jnp.dot(x_ref[...], ws_ref[...], preferred_element_type=jnp.float32)
    o_ref[...] = jnp.maximum(acc + b_ref[...], 0.0).astype(o_ref.dtype)


# ----------------------------------------------------------------------------
# pallas_call wrappers
# ----------------------------------------------------------------------------
def fused_conv1_conv2(x_nhwc, w1, b1, w2_taps, b2, *, out_dtype=jnp.bfloat16):
    n, h, w, cin_p = x_nhwc.shape
    p = w1.shape[1]
    assert w1.shape == (cin_p, p) and w2_taps.shape == (3, 3 * p, p)
    assert cin_p % LANE == 0 and p % LANE == 0
    assert w % 8 == 0, "TODO(synk): W not a multiple of 8 (7x7 maps) needs H-tiling"
    cost = _cost(2 * n * h * w * p * (cin_p + 9 * p),
                 n * h * w * p * np.dtype(out_dtype).itemsize,
                 x_nhwc, w1, b1, w2_taps, b2)
    return pl.pallas_call(
        functools.partial(_fused_conv1_conv2_kernel, h=h, w=w),
        out_shape=jax.ShapeDtypeStruct((n * h * w, p), out_dtype),
        grid=(n,),
        in_specs=[
            pl.BlockSpec((1, h, w, cin_p), lambda b: (b, 0, 0, 0)),
            _pinned_spec((cin_p, p)),        # conv1 weight (VMEM resident)
            _pinned_spec((1, p)),            # bn1 bias
            _pinned_spec((3, 3 * p, p)),     # conv2 packed taps
            _pinned_spec((1, p)),            # bn2 bias
        ],
        out_specs=pl.BlockSpec((h * w, p), lambda b: (b, 0)),
        scratch_shapes=[pltpu.VMEM((h + 2, w, 3 * p), jnp.bfloat16)],
        compiler_params=_compiler_params(),
        cost_estimate=cost,
    )(x_nhwc, w1, b1, w2_taps, b2)


def matmul_bias_res_relu(y2, w3, b3, res, *, block_m, out_dtype=jnp.bfloat16):
    m, k = y2.shape
    _, nn = w3.shape
    assert res.shape == (m, nn) and m % block_m == 0
    assert k % LANE == 0 and nn % LANE == 0
    cost = _cost(2 * m * k * nn, m * nn * np.dtype(out_dtype).itemsize,
                 y2, w3, b3, res)
    return pl.pallas_call(
        _matmul_bias_res_relu_kernel,
        out_shape=jax.ShapeDtypeStruct((m, nn), out_dtype),
        grid=(m // block_m,),
        in_specs=[
            pl.BlockSpec((block_m, k), lambda i: (i, 0)),
            _pinned_spec((k, nn)),
            _pinned_spec((1, nn)),
            pl.BlockSpec((block_m, nn), lambda i: (i, 0)),     # bf16 residual
        ],
        out_specs=pl.BlockSpec((block_m, nn), lambda i: (i, 0)),
        compiler_params=_compiler_params(),
        cost_estimate=cost,
    )(y2, w3, b3, res)


def dual_matmul_bias_relu(y2, w3, x2d, ws, bias, *, block_m, out_dtype=jnp.bfloat16):
    m, k3 = y2.shape
    _, nn = w3.shape
    m2, ksc = x2d.shape
    assert m2 == m and ws.shape == (ksc, nn) and m % block_m == 0
    assert k3 % LANE == 0 and ksc % LANE == 0 and nn % LANE == 0
    cost = _cost(2 * m * nn * (k3 + ksc), m * nn * np.dtype(out_dtype).itemsize,
                 y2, w3, x2d, ws, bias)
    return pl.pallas_call(
        _dual_matmul_bias_relu_kernel,
        out_shape=jax.ShapeDtypeStruct((m, nn), out_dtype),
        grid=(m // block_m,),
        in_specs=[
            pl.BlockSpec((block_m, k3), lambda i: (i, 0)),
            _pinned_spec((k3, nn)),
            pl.BlockSpec((block_m, ksc), lambda i: (i, 0)),
            _pinned_spec((ksc, nn)),
            _pinned_spec((1, nn)),
        ],
        out_specs=pl.BlockSpec((block_m, nn), lambda i: (i, 0)),
        compiler_params=_compiler_params(),
        cost_estimate=cost,
    )(y2, w3, x2d, ws, bias)


# ----------------------------------------------------------------------------
# Parameter construction (deterministic, synthetic) + BN folding
# ----------------------------------------------------------------------------
def fold_bn(gamma, beta, mean, var, eps=BN_EPS):
    scale = gamma / jnp.sqrt(var + eps)
    bias = beta - mean * scale
    return scale, bias


def init_bn(key, c):
    k1, k2, k3, k4 = jax.random.split(key, 4)
    gamma = jax.random.uniform(k1, (c,), jnp.float32, 0.5, 1.5)
    beta = 0.1 * jax.random.normal(k2, (c,), jnp.float32)
    mean = 0.1 * jax.random.normal(k3, (c,), jnp.float32)
    var = jax.random.uniform(k4, (c,), jnp.float32, 0.5, 1.5)
    return gamma, beta, mean, var


def init_params(key, in_planes, planes, stride=1):
    out_planes = EXPANSION * planes
    keys = jax.random.split(key, 8)
    p = {
        "conv1_w": 0.2 * jax.random.normal(keys[0], (planes, in_planes, 1, 1), jnp.float32),
        "bn1": init_bn(keys[1], planes),
        "conv2_w": 0.2 * jax.random.normal(keys[2], (planes, planes, 3, 3), jnp.float32),
        "bn2": init_bn(keys[3], planes),
        "conv3_w": 0.2 * jax.random.normal(keys[4], (out_planes, planes, 1, 1), jnp.float32),
        "bn3": init_bn(keys[5], out_planes),
    }
    if stride != 1 or in_planes != out_planes:
        p["shortcut_conv_w"] = 0.2 * jax.random.normal(
            keys[6], (out_planes, in_planes, 1, 1), jnp.float32
        )
        p["shortcut_bn"] = init_bn(keys[7], out_planes)
    return p


# ----------------------------------------------------------------------------
# Bottleneck forward (Pallas path)
# ----------------------------------------------------------------------------
def bottleneck_forward(x_nchw, params, planes, stride=1, block_m=DEFAULT_BLOCK_M):
    assert stride == 1, "only stride=1 implemented in the Pallas path"
    n, cin, h, w = x_nchw.shape
    p = planes
    out_planes = EXPANSION * p

    cin_p = _round_up(cin, LANE)
    p_p = _round_up(p, LANE)
    op_p = _round_up(out_planes, LANE)
    m = n * h * w
    block_m = min(block_m, _round_up(m, 8))
    m_p = _round_up(m, block_m)

    # ---- NCHW -> NHWC bf16 lane-dense layout: one cast + one channel pad ----
    x_nhwc = _pad_to(jnp.transpose(x_nchw, (0, 2, 3, 1)).astype(jnp.bfloat16),
                     (n, h, w, cin_p))
    x2d = _pad_to(x_nhwc.reshape(m, cin_p), (m_p, cin_p))      # free reshape

    # ---- fold eval-mode BN: scale into the f32 conv weights (before the bf16
    #      cast), only a per-channel bias stays in the kernel epilogues --------
    s1, b1 = fold_bn(*params["bn1"])
    s2, b2 = fold_bn(*params["bn2"])
    s3, b3 = fold_bn(*params["bn3"])

    w1 = params["conv1_w"][:, :, 0, 0].T * s1[None, :]                  # (cin, p)
    w1 = _pad_to(w1, (cin_p, p_p)).astype(jnp.bfloat16)
    b1 = _pad_to(b1[None, :], (1, p_p))

    w2 = jnp.transpose(params["conv2_w"], (2, 3, 1, 0)) * s2[None, None, None, :]
    w2 = _pad_to(w2, (3, 3, p_p, p_p)).reshape(3, 3 * p_p, p_p).astype(jnp.bfloat16)
    b2 = _pad_to(b2[None, :], (1, p_p))

    w3 = params["conv3_w"][:, :, 0, 0].T * s3[None, :]                  # (p, op)
    w3 = _pad_to(w3, (p_p, op_p)).astype(jnp.bfloat16)
    b3 = _pad_to(b3[None, :], (1, op_p))

    # ---- conv1+bn1+relu+conv2+bn2+relu : one fused kernel (no y1 HBM trip) --
    y2 = fused_conv1_conv2(x_nhwc, w1, b1, w2, b2)                      # (m, p_p) bf16
    y2 = _pad_to(y2, (m_p, p_p))      # no-op when block_m divides n*h*w

    # ---- conv3+bn3 + shortcut + add + relu : one fused kernel, bf16 out -----
    if "shortcut_conv_w" in params:
        ss, bs = fold_bn(*params["shortcut_bn"])
        ws = params["shortcut_conv_w"][:, :, 0, 0].T * ss[None, :]
        ws = _pad_to(ws, (cin_p, op_p)).astype(jnp.bfloat16)
        bias = b3 + _pad_to(bs[None, :], (1, op_p))            # combined biases
        out2d = dual_matmul_bias_relu(y2, w3, x2d, ws, bias, block_m=block_m)
    else:
        assert cin == out_planes, "identity shortcut requires in_planes == EXPANSION*planes"
        out2d = matmul_bias_res_relu(y2, w3, b3, x2d, block_m=block_m)

    out = out2d[:m, :out_planes].reshape(n, h, w, out_planes).transpose(0, 3, 1, 2)
    return out   # bf16 NCHW


# ----------------------------------------------------------------------------
# Pure-JAX reference (matches PyTorch eval-mode forward) for verification
# ----------------------------------------------------------------------------
def _conv_nchw(x, w, stride, padding):
    return lax.conv_general_dilated(
        x, w, (stride, stride), padding,
        dimension_numbers=("NCHW", "OIHW", "NCHW"),
    )


def _bn_nchw(x, bn):
    g, b, m, v = bn
    return (g[None, :, None, None] * (x - m[None, :, None, None])
            / jnp.sqrt(v[None, :, None, None] + BN_EPS) + b[None, :, None, None])


def bottleneck_reference(x, params, stride=1):
    out = jax.nn.relu(_bn_nchw(_conv_nchw(x, params["conv1_w"], 1, ((0, 0), (0, 0))), params["bn1"]))
    out = jax.nn.relu(_bn_nchw(_conv_nchw(out, params["conv2_w"], stride, ((1, 1), (1, 1))), params["bn2"]))
    out = _bn_nchw(_conv_nchw(out, params["conv3_w"], 1, ((0, 0), (0, 0))), params["bn3"])
    if "shortcut_conv_w" in params:
        sc = _bn_nchw(_conv_nchw(x, params["shortcut_conv_w"], stride, ((0, 0), (0, 0))),
                      params["shortcut_bn"])
    else:
        sc = x
    return jax.nn.relu(out + sc)


# ----------------------------------------------------------------------------
if __name__ == "__main__":
    key = jax.random.PRNGKey(0)
    k_param, k_param2, k_x, k_x2 = jax.random.split(key, 4)

    n, h, w = 2, 16, 16

    # Config A: projection shortcut (in_planes != EXPANSION*planes) -> fused
    # conv3 + shortcut dual-matmul kernel.
    in_planes, planes = 4, 4
    params = init_params(k_param, in_planes, planes, 1)
    x = jax.random.normal(k_x, (n, in_planes, h, w), jnp.float32)
    fwd_a = jax.jit(functools.partial(bottleneck_forward, planes=planes, stride=1))
    out = jax.block_until_ready(fwd_a(x, params))
    ref = jax.block_until_ready(bottleneck_reference(x, params, 1))
    assert out.shape == (n, EXPANSION * planes, h, w), out.shape
    # bf16 activations/weights/outputs -> looser tolerance than pure f32.
    np.testing.assert_allclose(np.asarray(out.astype(jnp.float32)), np.asarray(ref),
                               rtol=4e-2, atol=4e-2)

    # Config B: identity shortcut (in_planes == EXPANSION*planes) -> residual path.
    in_planes_b, planes_b = 16, 4
    params_b = init_params(k_param2, in_planes_b, planes_b, 1)
    x_b = jax.random.normal(k_x2, (n, in_planes_b, h, w), jnp.float32)
    fwd_b = jax.jit(functools.partial(bottleneck_forward, planes=planes_b, stride=1))
    out_b = jax.block_until_ready(fwd_b(x_b, params_b))
    ref_b = jax.block_until_ready(bottleneck_reference(x_b, params_b, 1))
    np.testing.assert_allclose(np.asarray(out_b.astype(jnp.float32)), np.asarray(ref_b),
                               rtol=4e-2, atol=4e-2)

    print("KERNEL_OK")
</pallas_src>

<mosaic_0001>
module attributes {stable_mosaic.version = 11 : i64} {
  func.func @_fused_conv1_conv2_kernel(%arg0: i32, %arg1: memref<1x16x16x128xbf16, #tpu.memory_space<vmem>>, %arg2: memref<128x128xbf16, #tpu.memory_space<vmem>>, %arg3: memref<1x128xf32, #tpu.memory_space<vmem>>, %arg4: memref<3x384x128xbf16, #tpu.memory_space<vmem>>, %arg5: memref<1x128xf32, #tpu.memory_space<vmem>>, %arg6: memref<256x128xbf16, #tpu.memory_space<vmem>>, %arg7: memref<18x16x384xbf16, #tpu.memory_space<vmem>>) attributes {dimension_semantics = [#tpu.dimension_semantics<parallel>], iteration_bounds = array<i64: 2>, scalar_prefetch = 0 : i64, scratch_operands = 1 : i64, tpu.core_type = #tpu.core_type<tc>, window_params = [{transform_indices = @transform_0, window_bounds = array<i64: 1, 16, 16, 128>}, {pipeline_mode = #tpu.pipeline_mode<synchronous>, transform_indices = @transform_1, window_bounds = array<i64: 128, 128>}, {pipeline_mode = #tpu.pipeline_mode<synchronous>, transform_indices = @transform_2, window_bounds = array<i64: 1, 128>}, {pipeline_mode = #tpu.pipeline_mode<synchronous>, transform_indices = @transform_3, window_bounds = array<i64: 3, 384, 128>}, {pipeline_mode = #tpu.pipeline_mode<synchronous>, transform_indices = @transform_4, window_bounds = array<i64: 1, 128>}, {transform_indices = @transform_5, window_bounds = array<i64: 256, 128>}]} {
    %c0 = arith.constant 0 : index
    %c0_0 = arith.constant 0 : index
    %c0_1 = arith.constant 0 : index
    %c0_2 = arith.constant 0 : index
    %0 = vector.load %arg1[%c0, %c0_0, %c0_1, %c0_2] : memref<1x16x16x128xbf16, #tpu.memory_space<vmem>>, vector<1x16x16x128xbf16>
    %1 = vector.shape_cast %0 : vector<1x16x16x128xbf16> to vector<256x128xbf16>
    %c0_3 = arith.constant 0 : index
    %c0_4 = arith.constant 0 : index
    %2 = vector.load %arg2[%c0_3, %c0_4] : memref<128x128xbf16, #tpu.memory_space<vmem>>, vector<128x128xbf16>
    %cst = arith.constant dense<0.000000e+00> : vector<256x128xf32>
    %3 = tpu.matmul %1, %2, %cst {dimension_numbers = #tpu.dot_dimension_numbers<[1], [0], [0], [1], [0, 0, 1, 1], [], []>} : vector<256x128xbf16>, vector<128x128xbf16>, vector<256x128xf32> -> vector<256x128xf32>
    %c0_5 = arith.constant 0 : index
    %c0_6 = arith.constant 0 : index
    %4 = vector.load %arg3[%c0_5, %c0_6] : memref<1x128xf32, #tpu.memory_space<vmem>>, vector<1x128xf32>
    %5 = vector.broadcast %4 : vector<1x128xf32> to vector<256x128xf32>
    %6 = arith.addf %3, %5 : vector<256x128xf32>
    %cst_7 = arith.constant 0.000000e+00 : f32
    %7 = vector.broadcast %cst_7 : f32 to vector<256x128xf32>
    %8 = arith.maximumf %6, %7 : vector<256x128xf32>
    %9 = vector.shape_cast %8 : vector<256x128xf32> to vector<16x16x128xf32>
    %cst_8 = arith.constant 0.000000e+00 : f32
    %10 = vector.broadcast %cst_8 : f32 to vector<16x1x128xf32>
    %11 = vector.extract_strided_slice %9 {offsets = [0, 0, 0], sizes = [16, 15, 128], strides = [1, 1, 1]} : vector<16x16x128xf32> to vector<16x15x128xf32>
    %12 = tpu.concatenate %10, %11 in 1 : vector<16x1x128xf32>, vector<16x15x128xf32> -> vector<16x16x128xf32>
    %13 = vector.extract_strided_slice %9 {offsets = [0, 1, 0], sizes = [16, 15, 128], strides = [1, 1, 1]} : vector<16x16x128xf32> to vector<16x15x128xf32>
    %14 = tpu.concatenate %13, %10 in 1 : vector<16x15x128xf32>, vector<16x1x128xf32> -> vector<16x16x128xf32>
    %cst_9 = arith.constant 0.000000e+00 : bf16
    %15 = vector.broadcast %cst_9 : bf16 to vector<1x16x384xbf16>
    %c0_10 = arith.constant 0 : index
    %c0_11 = arith.constant 0 : index
    %c0_12 = arith.constant 0 : index
    %16 = vector.load %arg7[%c0_10, %c0_11, %c0_12] : memref<18x16x384xbf16, #tpu.memory_space<vmem>>, vector<1x16x384xbf16>
    tpu.vector_store %arg7[%c0_10, %c0_11, %c0_12], %15 {strides = array<i32>} : memref<18x16x384xbf16, #tpu.memory_space<vmem>>, vector<1x16x384xbf16>,
    %c17 = arith.constant 17 : index
    %c0_13 = arith.constant 0 : index
    %c0_14 = arith.constant 0 : index
    %17 = vector.load %arg7[%c17, %c0_13, %c0_14] : memref<18x16x384xbf16, #tpu.memory_space<vmem>>, vector<1x16x384xbf16>
    tpu.vector_store %arg7[%c17, %c0_13, %c0_14], %15 {strides = array<i32>} : memref<18x16x384xbf16, #tpu.memory_space<vmem>>, vector<1x16x384xbf16>,
    %18 = arith.truncf %12 : vector<16x16x128xf32> to vector<16x16x128xbf16>
    %c1 = arith.constant 1 : index
    %c0_15 = arith.constant 0 : index
    %c0_16 = arith.constant 0 : index
    %19 = vector.load %arg7[%c1, %c0_15, %c0_16] : memref<18x16x384xbf16, #tpu.memory_space<vmem>>, vector<16x16x128xbf16>
    tpu.vector_store %arg7[%c1, %c0_15, %c0_16], %18 {strides = array<i32>} : memref<18x16x384xbf16, #tpu.memory_space<vmem>>, vector<16x16x128xbf16>,
    %20 = arith.truncf %9 : vector<16x16x128xf32> to vector<16x16x128xbf16>
    %c1_17 = arith.constant 1 : index
    %c0_18 = arith.constant 0 : index
    %c128 = arith.constant 128 : index
    %21 = vector.load %arg7[%c1_17, %c0_18, %c128] : memref<18x16x384xbf16, #tpu.memory_space<vmem>>, vector<16x16x128xbf16>
    tpu.vector_store %arg7[%c1_17, %c0_18, %c128], %20 {strides = array<i32>} : memref<18x16x384xbf16, #tpu.memory_space<vmem>>, vector<16x16x128xbf16>,
    %22 = arith.truncf %14 : vector<16x16x128xf32> to vector<16x16x128xbf16>
    %c1_19 = arith.constant 1 : index
    %c0_20 = arith.constant 0 : index
    %c256 = arith.constant 256 : index
    %23 = vector.load %arg7[%c1_19, %c0_20, %c256] : memref<18x16x384xbf16, #tpu.memory_space<vmem>>, vector<16x16x128xbf16>
    tpu.vector_store %arg7[%c1_19, %c0_20, %c256], %22 {strides = array<i32>} : memref<18x16x384xbf16, #tpu.memory_space<vmem>>, vector<16x16x128xbf16>,
    %cst_21 = arith.constant 0.000000e+00 : f32
    %24 = vector.broadcast %cst_21 : f32 to vector<256x128xf32>
    %c0_22 = arith.constant 0 : index
    %c0_23 = arith.constant 0 : index
    %c0_24 = arith.constant 0 : index
    %25 = vector.load %arg7[%c0_22, %c0_23, %c0_24] : memref<18x16x384xbf16, #tpu.memory_space<vmem>>, vector<16x16x384xbf16>
    %26 = vector.shape_cast %25 : vector<16x16x384xbf16> to vector<256x384xbf16>
    %c0_25 = arith.constant 0 : index
    %c0_26 = arith.constant 0 : index
    %c0_27 = arith.constant 0 : index
    %27 = vector.load %arg4[%c0_25, %c0_26, %c0_27] : memref<3x384x128xbf16, #tpu.memory_space<vmem>>, vector<1x384x128xbf16>
    %28 = vector.shape_cast %27 : vector<1x384x128xbf16> to vector<384x128xbf16>
    %cst_28 = arith.constant dense<0.000000e+00> : vector<256x128xf32>
    %29 = tpu.matmul %26, %28, %cst_28 {dimension_numbers = #tpu.dot_dimension_numbers<[1], [0], [0], [1], [0, 0, 1, 1], [], []>} : vector<256x384xbf16>, vector<384x128xbf16>, vector<256x128xf32> -> vector<256x128xf32>
    %30 = arith.addf %24, %29 : vector<256x128xf32>
    %c1_29 = arith.constant 1 : index
    %c0_30 = arith.constant 0 : index
    %c0_31 = arith.constant 0 : index
    %31 = vector.load %arg7[%c1_29, %c0_30, %c0_31] : memref<18x16x384xbf16, #tpu.memory_space<vmem>>, vector<16x16x384xbf16>
    %32 = vector.shape_cast %31 : vector<16x16x384xbf16> to vector<256x384xbf16>
    %c1_32 = arith.constant 1 : index
    %c0_33 = arith.constant 0 : index
    %c0_34 = arith.constant 0 : index
    %33 = vector.load %arg4[%c1_32, %c0_33, %c0_34] : memref<3x384x128xbf16, #tpu.memory_space<vmem>>, vector<1x384x128xbf16>
    %34 = vector.shape_cast %33 : vector<1x384x128xbf16> to vector<384x128xbf16>
    %cst_35 = arith.constant dense<0.000000e+00> : vector<256x128xf32>
    %35 = tpu.matmul %32, %34, %cst_35 {dimension_numbers = #tpu.dot_dimension_numbers<[1], [0], [0], [1], [0, 0, 1, 1], [], []>} : vector<256x384xbf16>, vector<384x128xbf16>, vector<256x128xf32> -> vector<256x128xf32>
    %36 = arith.addf %30, %35 : vector<256x128xf32>
    %c2 = arith.constant 2 : index
    %c0_36 = arith.constant 0 : index
    %c0_37 = arith.constant 0 : index
    %37 = vector.load %arg7[%c2, %c0_36, %c0_37] : memref<18x16x384xbf16, #tpu.memory_space<vmem>>, vector<16x16x384xbf16>
    %38 = vector.shape_cast %37 : vector<16x16x384xbf16> to vector<256x384xbf16>
    %c2_38 = arith.constant 2 : index
    %c0_39 = arith.constant 0 : index
    %c0_40 = arith.constant 0 : index
    %39 = vector.load %arg4[%c2_38, %c0_39, %c0_40] : memref<3x384x128xbf16, #tpu.memory_space<vmem>>, vector<1x384x128xbf16>
    %40 = vector.shape_cast %39 : vector<1x384x128xbf16> to vector<384x128xbf16>
    %cst_41 = arith.constant dense<0.000000e+00> : vector<256x128xf32>
    %41 = tpu.matmul %38, %40, %cst_41 {dimension_numbers = #tpu.dot_dimension_numbers<[1], [0], [0], [1], [0, 0, 1, 1], [], []>} : vector<256x384xbf16>, vector<384x128xbf16>, vector<256x128xf32> -> vector<256x128xf32>
    %42 = arith.addf %36, %41 : vector<256x128xf32>
    %c0_42 = arith.constant 0 : index
    %c0_43 = arith.constant 0 : index
    %43 = vector.load %arg5[%c0_42, %c0_43] : memref<1x128xf32, #tpu.memory_space<vmem>>, vector<1x128xf32>
    %44 = vector.broadcast %43 : vector<1x128xf32> to vector<256x128xf32>
    %45 = arith.addf %42, %44 : vector<256x128xf32>
    %cst_44 = arith.constant 0.000000e+00 : f32
    %46 = vector.broadcast %cst_44 : f32 to vector<256x128xf32>
    %47 = arith.maximumf %45, %46 : vector<256x128xf32>
    %48 = arith.truncf %47 : vector<256x128xf32> to vector<256x128xbf16>
    %c0_45 = arith.constant 0 : index
    %c0_46 = arith.constant 0 : index
    %49 = vector.load %arg6[%c0_45, %c0_46] : memref<256x128xbf16, #tpu.memory_space<vmem>>, vector<256x128xbf16>
    tpu.vector_store %arg6[%c0_45, %c0_46], %48 {strides = array<i32>} : memref<256x128xbf16, #tpu.memory_space<vmem>>, vector<256x128xbf16>,
    return
  }
  func.func @transform_0(%arg0: i32) -> (i32, i32, i32, i32) {
    %c0_i32 = arith.constant 0 : i32
    %c0_i32_0 = arith.constant 0 : i32
    %c0_i32_1 = arith.constant 0 : i32
    %c0_i32_2 = arith.constant 0 : i32
    return %arg0, %c0_i32, %c0_i32_0, %c0_i32_1 : i32, i32, i32, i32
  }
  func.func @transform_1(%arg0: i32) -> (i32, i32) {
    %c0_i32 = arith.constant 0 : i32
    %c0_i32_0 = arith.constant 0 : i32
    %c0_i32_1 = arith.constant 0 : i32
    return %c0_i32, %c0_i32_0 : i32, i32
  }
  func.func @transform_2(%arg0: i32) -> (i32, i32) {
    %c0_i32 = arith.constant 0 : i32
    %c0_i32_0 = arith.constant 0 : i32
    %c0_i32_1 = arith.constant 0 : i32
    return %c0_i32, %c0_i32_0 : i32, i32
  }
  func.func @transform_3(%arg0: i32) -> (i32, i32, i32) {
    %c0_i32 = arith.constant 0 : i32
    %c0_i32_0 = arith.constant 0 : i32
    %c0_i32_1 = arith.constant 0 : i32
    %c0_i32_2 = arith.constant 0 : i32
    return %c0_i32, %c0_i32_0, %c0_i32_1 : i32, i32, i32
  }
  func.func @transform_4(%arg0: i32) -> (i32, i32) {
    %c0_i32 = arith.constant 0 : i32
    %c0_i32_0 = arith.constant 0 : i32
    %c0_i32_1 = arith.constant 0 : i32
    return %c0_i32, %c0_i32_0 : i32, i32
  }
  func.func @transform_5(%arg0: i32) -> (i32, i32) {
    %c0_i32 = arith.constant 0 : i32
    %c0_i32_0 = arith.constant 0 : i32
    return %arg0, %c0_i32 : i32, i32
  }
}

module attributes {stable_mosaic.version = 11 : i64} {
  func.func @_dual_matmul_bias_relu_kernel(%arg0: i32, %arg1: memref<512x128xbf16, #tpu.memory_space<vmem>>, %arg2: memref<128x128xbf16, #tpu.memory_space<vmem>>, %arg3: memref<512x128xbf16, #tpu.memory_space<vmem>>, %arg4: memref<128x128xbf16, #tpu.memory_space<vmem>>, %arg5: memref<1x128xf32, #tpu.memory_space<vmem>>, %arg6: memref<512x128xbf16, #tpu.memory_space<vmem>>) attributes {dimension_semantics = [#tpu.dimension_semantics<parallel>], iteration_bounds = array<i64: 1>, scalar_prefetch = 0 : i64, scratch_operands = 0 : i64, tpu.core_type = #tpu.core_type<tc>, window_params = [{transform_indices = @transform_0, window_bounds = array<i64: 512, 128>}, {pipeline_mode = #tpu.pipeline_mode<synchronous>, transform_indices = @transform_1, window_bounds = array<i64: 128, 128>}, {transform_indices = @transform_2, window_bounds = array<i64: 512, 128>}, {pipeline_mode = #tpu.pipeline_mode<synchronous>, transform_indices = @transform_3, window_bounds = array<i64: 128, 128>}, {pipeline_mode = #tpu.pipeline_mode<synchronous>, transform_indices = @transform_4, window_bounds = array<i64: 1, 128>}, {transform_indices = @transform_5, window_bounds = array<i64: 512, 128>}]} {
    %c0 = arith.constant 0 : index
    %c0_0 = arith.constant 0 : index
    %0 = vector.load %arg1[%c0, %c0_0] : memref<512x128xbf16, #tpu.memory_space<vmem>>, vector<512x128xbf16>
    %c0_1 = arith.constant 0 : index
    %c0_2 = arith.constant 0 : index
    %1 = vector.load %arg2[%c0_1, %c0_2] : memref<128x128xbf16, #tpu.memory_space<vmem>>, vector<128x128xbf16>
    %cst = arith.constant dense<0.000000e+00> : vector<512x128xf32>
    %2 = tpu.matmul %0, %1, %cst {dimension_numbers = #tpu.dot_dimension_numbers<[1], [0], [0], [1], [0, 0, 1, 1], [], []>} : vector<512x128xbf16>, vector<128x128xbf16>, vector<512x128xf32> -> vector<512x128xf32>
    %c0_3 = arith.constant 0 : index
    %c0_4 = arith.constant 0 : index
    %3 = vector.load %arg3[%c0_3, %c0_4] : memref<512x128xbf16, #tpu.memory_space<vmem>>, vector<512x128xbf16>
    %c0_5 = arith.constant 0 : index
    %c0_6 = arith.constant 0 : index
    %4 = vector.load %arg4[%c0_5, %c0_6] : memref<128x128xbf16, #tpu.memory_space<vmem>>, vector<128x128xbf16>
    %cst_7 = arith.constant dense<0.000000e+00> : vector<512x128xf32>
    %5 = tpu.matmul %3, %4, %cst_7 {dimension_numbers = #tpu.dot_dimension_numbers<[1], [0], [0], [1], [0, 0, 1, 1], [], []>} : vector<512x128xbf16>, vector<128x128xbf16>, vector<512x128xf32> -> vector<512x128xf32>
    %6 = arith.addf %2, %5 : vector<512x128xf32>
    %c0_8 = arith.constant 0 : index
    %c0_9 = arith.constant 0 : index
    %7 = vector.load %arg5[%c0_8, %c0_9] : memref<1x128xf32, #tpu.memory_space<vmem>>, vector<1x128xf32>
    %8 = vector.broadcast %7 : vector<1x128xf32> to vector<512x128xf32>
    %9 = arith.addf %6, %8 : vector<512x128xf32>
    %cst_10 = arith.constant 0.000000e+00 : f32
    %10 = vector.broadcast %cst_10 : f32 to vector<512x128xf32>
    %11 = arith.maximumf %9, %10 : vector<512x128xf32>
    %12 = arith.truncf %11 : vector<512x128xf32> to vector<512x128xbf16>
    %c0_11 = arith.constant 0 : index
    %c0_12 = arith.constant 0 : index
    %13 = vector.load %arg6[%c0_11, %c0_12] : memref<512x128xbf16, #tpu.memory_space<vmem>>, vector<512x128xbf16>
    tpu.vector_store %arg6[%c0_11, %c0_12], %12 {strides = array<i32>} : memref<512x128xbf16, #tpu.memory_space<vmem>>, vector<512x128xbf16>,
    return
  }
  func.func @transform_0(%arg0: i32) -> (i32, i32) {
    %c0_i32 = arith.constant 0 : i32
    %c0_i32_0 = arith.constant 0 : i32
    return %arg0, %c0_i32 : i32, i32
  }
  func.func @transform_1(%arg0: i32) -> (i32, i32) {
    %c0_i32 = arith.constant 0 : i32
    %c0_i32_0 = arith.constant 0 : i32
    %c0_i32_1 = arith.constant 0 : i32
    return %c0_i32, %c0_i32_0 : i32, i32
  }
  func.func @transform_2(%arg0: i32) -> (i32, i32) {
    %c0_i32 = arith.constant 0 : i32
    %c0_i32_0 = arith.constant 0 : i32
    return %arg0, %c0_i32 : i32, i32
  }
  func.func @transform_3(%arg0: i32) -> (i32, i32) {
    %c0_i32 = arith.constant 0 : i32
    %c0_i32_0 = arith.constant 0 : i32
    %c0_i32_1 = arith.constant 0 : i32
    return %c0_i32, %c0_i32_0 : i32, i32
  }
  func.func @transform_4(%arg0: i32) -> (i32, i32) {
    %c0_i32 = arith.constant 0 : i32
    %c0_i32_0 = arith.constant 0 : i32
    %c0_i32_1 = arith.constant 0 : i32
    return %c0_i32, %c0_i32_0 : i32, i32
  }
  func.func @transform_5(%arg0: i32) -> (i32, i32) {
    %c0_i32 = arith.constant 0 : i32
    %c0_i32_0 = arith.constant 0 : i32
    return %arg0, %c0_i32 : i32, i32
  }
}

</mosaic_0001>

<llo_original>
// kernel: bottleneck_forward.3
$region0: #{bottleneck_forward.3}
  #allocation0 [shape = 'u32[]', space=smem, size = 0x4, offset = 0x4, fixed_abs, tag = 'smem constant byte address 0x4 - core index']
  #allocation1 [shape = 'u32[144,128]{1,0:T(1,128)}', space=vmem, size = 0x12000, scoped, tag = 'internal scratch']
  %s0 = inlined_call_operand.vmem [shape: bf16[512,128], index: 0, kind: input, shape index: {}]
  %s1 = inlined_call_operand.vmem [shape: bf16[128,128], index: 1, kind: input, shape index: {}]
  %s2 = inlined_call_operand.vmem [shape: bf16[512,128], index: 2, kind: input, shape index: {}]
  %s3 = inlined_call_operand.vmem [shape: bf16[128,128], index: 3, kind: input, shape index: {}]
  %s4 = inlined_call_operand.vmem [shape: f32[1,128], index: 4, kind: input, shape index: {}]
  %s5 = inlined_call_operand.vmem [shape: bf16[512,128], index: 5, kind: output, shape index: {}]
  %s6 = sld [smem:[#allocation0]]
  $region30: #{bottleneck_forward.3} parent=0
    _
  %s8 = ssub.s32 1, %s6
  %s9 = scalar_select 0, %s8, %s6
  // Predicated region
  $region2: #{bottleneck_forward.3} parent=0 // pred_check
    _
  $region3: #{bottleneck_forward.3} parent=0 // pred_check_branch
    %11 = sbr.rel (0) target = $region5
  $region4: #{bottleneck_forward.3} parent=0 // pred_region
    _
  $region5: #{bottleneck_forward.3} parent=0 // pred_fallthru
    _
  // Predicated region
  $region6: #{bottleneck_forward.3} parent=0 // pred_check
    _
  $region7: #{bottleneck_forward.3} parent=0 // pred_check_branch
    %13 = sbr.rel (0) target = $region9
  $region8: #{bottleneck_forward.3} parent=0 // pred_region
    _
  $region9: #{bottleneck_forward.3} parent=0 // pred_fallthru
    _
  // Predicated region
  $region10: #{bottleneck_forward.3} parent=0 // pred_check
    _
  $region11: #{bottleneck_forward.3} parent=0 // pred_check_branch
    %15 = sbr.rel (0) target = $region13
  $region12: #{bottleneck_forward.3} parent=0 // pred_region
    _
  $region13: #{bottleneck_forward.3} parent=0 // pred_fallthru
    _
  // Predicated region
  $region14: #{bottleneck_forward.3} parent=0 // pred_check
    _
  $region15: #{bottleneck_forward.3} parent=0 // pred_check_branch
    %17 = sbr.rel (0) target = $region17
  $region16: #{bottleneck_forward.3} parent=0 // pred_region
    _
  $region17: #{bottleneck_forward.3} parent=0 // pred_fallthru
    _
  // Predicated region
  $region18: #{bottleneck_forward.3} parent=0 // pred_check
    _
  $region19: #{bottleneck_forward.3} parent=0 // pred_check_branch
    %19 = sbr.rel (0) target = $region21
  $region20: #{bottleneck_forward.3} parent=0 // pred_region
    _
  $region21: #{bottleneck_forward.3} parent=0 // pred_fallthru
    _
  %v21 = vld [vmem:[%s0] sm:$0xf]
  %v22 = vld [vmem:[%s0 + $0x4] sm:$0xf]
  %v23 = vld [vmem:[%s0 + $0x8] sm:$0xf]
  %v24 = vld [vmem:[%s0 + $0xc] sm:$0xf]
  %v25 = vld [vmem:[%s0 + $0x10] sm:$0xf]
  %v26 = vld [vmem:[%s0 + $0x14] sm:$0xf]
  %v27 = vld [vmem:[%s0 + $0x18] sm:$0xf]
  %v28 = vld [vmem:[%s0 + $0x1c] sm:$0xf]
  %v29 = vld [vmem:[%s0 + $0x20] sm:$0xf]
  %v30 = vld [vmem:[%s0 + $0x24] sm:$0xf]
  %v31 = vld [vmem:[%s0 + $0x28] sm:$0xf]
  %v32 = vld [vmem:[%s0 + $0x2c] sm:$0xf]
  %v33 = vld [vmem:[%s0 + $0x30] sm:$0xf]
  %v34 = vld [vmem:[%s0 + $0x34] sm:$0xf]
  %v35 = vld [vmem:[%s0 + $0x38] sm:$0xf]
  %v36 = vld [vmem:[%s0 + $0x3c] sm:$0xf]
  %v37 = vld [vmem:[%s0 + $0x40] sm:$0xf]
  %v38 = vld [vmem:[%s0 + $0x44] sm:$0xf]
  %v39 = vld [vmem:[%s0 + $0x48] sm:$0xf]
  %v40 = vld [vmem:[%s0 + $0x4c] sm:$0xf]
  %v41 = vld [vmem:[%s0 + $0x50] sm:$0xf]
  %v42 = vld [vmem:[%s0 + $0x54] sm:$0xf]
  %v43 = vld [vmem:[%s0 + $0x58] sm:$0xf]
  %v44 = vld [vmem:[%s0 + $0x5c] sm:$0xf]
  %v45 = vld [vmem:[%s0 + $0x60] sm:$0xf]
  %v46 = vld [vmem:[%s0 + $0x64] sm:$0xf]
  %v47 = vld [vmem:[%s0 + $0x68] sm:$0xf]
  %v48 = vld [vmem:[%s0 + $0x6c] sm:$0xf]
  %v49 = vld [vmem:[%s0 + $0x70] sm:$0xf]
  %v50 = vld [vmem:[%s0 + $0x74] sm:$0xf]
  %v51 = vld [vmem:[%s0 + $0x78] sm:$0xf]
  %v52 = vld [vmem:[%s0 + $0x7c] sm:$0xf]
  %v53 = vld [vmem:[%s0 + $0x80] sm:$0xf]
  %v54 = vld [vmem:[%s0 + $0x84] sm:$0xf]
  %v55 = vld [vmem:[%s0 + $0x88] sm:$0xf]
  %v56 = vld [vmem:[%s0 + $0x8c] sm:$0xf]
  %v57 = vld [vmem:[%s0 + $0x90] sm:$0xf]
  %v58 = vld [vmem:[%s0 + $0x94] sm:$0xf]
  %v59 = vld [vmem:[%s0 + $0x98] sm:$0xf]
  %v60 = vld [vmem:[%s0 + $0x9c] sm:$0xf]
  %v61 = vld [vmem:[%s0 + $0xa0] sm:$0xf]
  %v62 = vld [vmem:[%s0 + $0xa4] sm:$0xf]
  %v63 = vld [vmem:[%s0 + $0xa8] sm:$0xf]
  %v64 = vld [vmem:[%s0 + $0xac] sm:$0xf]
  %v65 = vld [vmem:[%s0 + $0xb0] sm:$0xf]
  %v66 = vld [vmem:[%s0 + $0xb4] sm:$0xf]
  %v67 = vld [vmem:[%s0 + $0xb8] sm:$0xf]
  %v68 = vld [vmem:[%s0 + $0xbc] sm:$0xf]
  %v69 = vld [vmem:[%s0 + $0xc0] sm:$0xf]
  %v70 = vld [vmem:[%s0 + $0xc4] sm:$0xf]
  %v71 = vld [vmem:[%s0 + $0xc8] sm:$0xf]
  %v72 = vld [vmem:[%s0 + $0xcc] sm:$0xf]
  %v73 = vld [vmem:[%s0 + $0xd0] sm:$0xf]
  %v74 = vld [vmem:[%s0 + $0xd4] sm:$0xf]
  %v75 = vld [vmem:[%s0 + $0xd8] sm:$0xf]
  %v76 = vld [vmem:[%s0 + $0xdc] sm:$0xf]
  %v77 = vld [vmem:[%s0 + $0xe0] sm:$0xf]
  %v78 = vld [vmem:[%s0 + $0xe4] sm:$0xf]
  %v79 = vld [vmem:[%s0 + $0xe8] sm:$0xf]
  %v80 = vld [vmem:[%s0 + $0xec] sm:$0xf]
  %v81 = vld [vmem:[%s0 + $0xf0] sm:$0xf]
  %v82 = vld [vmem:[%s0 + $0xf4] sm:$0xf]
  %v83 = vld [vmem:[%s0 + $0xf8] sm:$0xf]
  %v84 = vld [vmem:[%s0 + $0xfc] sm:$0xf]
  %v85 = vld [vmem:[%s1] sm:$0xf]
  %v86 = vld [vmem:[%s1 + $0x4] sm:$0xf]
  %v87 = vld [vmem:[%s1 + $0x8] sm:$0xf]
  %v88 = vld [vmem:[%s1 + $0xc] sm:$0xf]
  %v89 = vld [vmem:[%s1 + $0x10] sm:$0xf]
  %v90 = vld [vmem:[%s1 + $0x14] sm:$0xf]
  %v91 = vld [vmem:[%s1 + $0x18] sm:$0xf]
  %v92 = vld [vmem:[%s1 + $0x1c] sm:$0xf]
  %v93 = vld [vmem:[%s1 + $0x20] sm:$0xf]
  %v94 = vld [vmem:[%s1 + $0x24] sm:$0xf]
  %v95 = vld [vmem:[%s1 + $0x28] sm:$0xf]
  %v96 = vld [vmem:[%s1 + $0x2c] sm:$0xf]
  %v97 = vld [vmem:[%s1 + $0x30] sm:$0xf]
  %v98 = vld [vmem:[%s1 + $0x34] sm:$0xf]
  %v99 = vld [vmem:[%s1 + $0x38] sm:$0xf]
  %v100 = vld [vmem:[%s1 + $0x3c] sm:$0xf]
  %v101 = vld [vmem:[%s2] sm:$0xf]
  %v102 = vld [vmem:[%s2 + $0x4] sm:$0xf]
  %v103 = vld [vmem:[%s2 + $0x8] sm:$0xf]
  %v104 = vld [vmem:[%s2 + $0xc] sm:$0xf]
  %v105 = vld [vmem:[%s2 + $0x10] sm:$0xf]
  %v106 = vld [vmem:[%s2 + $0x14] sm:$0xf]
  %v107 = vld [vmem:[%s2 + $0x18] sm:$0xf]
  %v108 = vld [vmem:[%s2 + $0x1c] sm:$0xf]
  %v109 = vld [vmem:[%s2 + $0x20] sm:$0xf]
  %v110 = vld [vmem:[%s2 + $0x24] sm:$0xf]
  %v111 = vld [vmem:[%s2 + $0x28] sm:$0xf]
  %v112 = vld [vmem:[%s2 + $0x2c] sm:$0xf]
  %v113 = vld [vmem:[%s2 + $0x30] sm:$0xf]
  %v114 = vld [vmem:[%s2 + $0x34] sm:$0xf]
  %v115 = vld [vmem:[%s2 + $0x38] sm:$0xf]
  %v116 = vld [vmem:[%s2 + $0x3c] sm:$0xf]
  %v117 = vld [vmem:[%s2 + $0x40] sm:$0xf]
  %v118 = vld [vmem:[%s2 + $0x44] sm:$0xf]
  %v119 = vld [vmem:[%s2 + $0x48] sm:$0xf]
  %v120 = vld [vmem:[%s2 + $0x4c] sm:$0xf]
  %v121 = vld [vmem:[%s2 + $0x50] sm:$0xf]
  %v122 = vld [vmem:[%s2 + $0x54] sm:$0xf]
  %v123 = vld [vmem:[%s2 + $0x58] sm:$0xf]
  %v124 = vld [vmem:[%s2 + $0x5c] sm:$0xf]
  %v125 = vld [vmem:[%s2 + $0x60] sm:$0xf]
  %v126 = vld [vmem:[%s2 + $0x64] sm:$0xf]
  %v127 = vld [vmem:[%s2 + $0x68] sm:$0xf]
  %v128 = vld [vmem:[%s2 + $0x6c] sm:$0xf]
  %v129 = vld [vmem:[%s2 + $0x70] sm:$0xf]
  %v130 = vld [vmem:[%s2 + $0x74] sm:$0xf]
  %v131 = vld [vmem:[%s2 + $0x78] sm:$0xf]
  %v132 = vld [vmem:[%s2 + $0x7c] sm:$0xf]
  %v133 = vld [vmem:[%s2 + $0x80] sm:$0xf]
  %v134 = vld [vmem:[%s2 + $0x84] sm:$0xf]
  %v135 = vld [vmem:[%s2 + $0x88] sm:$0xf]
  %v136 = vld [vmem:[%s2 + $0x8c] sm:$0xf]
  %v137 = vld [vmem:[%s2 + $0x90] sm:$0xf]
  %v138 = vld [vmem:[%s2 + $0x94] sm:$0xf]
  %v139 = vld [vmem:[%s2 + $0x98] sm:$0xf]
  %v140 = vld [vmem:[%s2 + $0x9c] sm:$0xf]
  %v141 = vld [vmem:[%s2 + $0xa0] sm:$0xf]
  %v142 = vld [vmem:[%s2 + $0xa4] sm:$0xf]
  %v143 = vld [vmem:[%s2 + $0xa8] sm:$0xf]
  %v144 = vld [vmem:[%s2 + $0xac] sm:$0xf]
  %v145 = vld [vmem:[%s2 + $0xb0] sm:$0xf]
  %v146 = vld [vmem:[%s2 + $0xb4] sm:$0xf]
  %v147 = vld [vmem:[%s2 + $0xb8] sm:$0xf]
  %v148 = vld [vmem:[%s2 + $0xbc] sm:$0xf]
  %v149 = vld [vmem:[%s2 + $0xc0] sm:$0xf]
  %v150 = vld [vmem:[%s2 + $0xc4] sm:$0xf]
  %v151 = vld [vmem:[%s2 + $0xc8] sm:$0xf]
  %v152 = vld [vmem:[%s2 + $0xcc] sm:$0xf]
  %v153 = vld [vmem:[%s2 + $0xd0] sm:$0xf]
  %v154 = vld [vmem:[%s2 + $0xd4] sm:$0xf]
  %v155 = vld [vmem:[%s2 + $0xd8] sm:$0xf]
  %v156 = vld [vmem:[%s2 + $0xdc] sm:$0xf]
  %v157 = vld [vmem:[%s2 + $0xe0] sm:$0xf]
  %v158 = vld [vmem:[%s2 + $0xe4] sm:$0xf]
  %v159 = vld [vmem:[%s2 + $0xe8] sm:$0xf]
  %v160 = vld [vmem:[%s2 + $0xec] sm:$0xf]
  %v161 = vld [vmem:[%s2 + $0xf0] sm:$0xf]
  %v162 = vld [vmem:[%s2 + $0xf4] sm:$0xf]
  %v163 = vld [vmem:[%s2 + $0xf8] sm:$0xf]
  %v164 = vld [vmem:[%s2 + $0xfc] sm:$0xf]
  %v165 = vld [vmem:[%s3] sm:$0xf]
  %v166 = vld [vmem:[%s3 + $0x4] sm:$0xf]
  %v167 = vld [vmem:[%s3 + $0x8] sm:$0xf]
  %v168 = vld [vmem:[%s3 + $0xc] sm:$0xf]
  %v169 = vld [vmem:[%s3 + $0x10] sm:$0xf]
  %v170 = vld [vmem:[%s3 + $0x14] sm:$0xf]
  %v171 = vld [vmem:[%s3 + $0x18] sm:$0xf]
  %v172 = vld [vmem:[%s3 + $0x1c] sm:$0xf]
  %v173 = vld [vmem:[%s3 + $0x20] sm:$0xf]
  %v174 = vld [vmem:[%s3 + $0x24] sm:$0xf]
  %v175 = vld [vmem:[%s3 + $0x28] sm:$0xf]
  %v176 = vld [vmem:[%s3 + $0x2c] sm:$0xf]
  %v177 = vld [vmem:[%s3 + $0x30] sm:$0xf]
  %v178 = vld [vmem:[%s3 + $0x34] sm:$0xf]
  %v179 = vld [vmem:[%s3 + $0x38] sm:$0xf]
  %v180 = vld [vmem:[%s3 + $0x3c] sm:$0xf]
  %v245 = vunpack.c.l.b16 %v101
  %v246 = vunpack.c.l.b16 %v102
  %v247 = vunpack.c.l.b16 %v103
  %v248 = vunpack.c.l.b16 %v104
  %v249 = vunpack.c.l.b16 %v105
  %v250 = vunpack.c.l.b16 %v106
  %v251 = vunpack.c.l.b16 %v107
  %v252 = vunpack.c.l.b16 %v108
  %v253 = vunpack.c.l.b16 %v109
  %v254 = vunpack.c.l.b16 %v110
  %v255 = vunpack.c.l.b16 %v111
  %v256 = vunpack.c.l.b16 %v112
  %v257 = vunpack.c.l.b16 %v113
  %v258 = vunpack.c.l.b16 %v114
  %v259 = vunpack.c.l.b16 %v115
  %v260 = vunpack.c.l.b16 %v116
  %v261 = vunpack.c.l.b16 %v117
  %v262 = vunpack.c.l.b16 %v118
  %v263 = vunpack.c.l.b16 %v119
  %v264 = vunpack.c.l.b16 %v120
  %v265 = vunpack.c.l.b16 %v121
  %v266 = vunpack.c.l.b16 %v122
  %v267 = vunpack.c.l.b16 %v123
  %v268 = vunpack.c.l.b16 %v124
  %v269 = vunpack.c.l.b16 %v125
  %v270 = vunpack.c.l.b16 %v126
  %v271 = vunpack.c.l.b16 %v127
  %v272 = vunpack.c.l.b16 %v128
  %v273 = vunpack.c.l.b16 %v129
  %v274 = vunpack.c.l.b16 %v130
  %v275 = vunpack.c.l.b16 %v131
  %v276 = vunpack.c.l.b16 %v132
  %v277 = vunpack.c.l.b16 %v133
  %v278 = vunpack.c.l.b16 %v134
  %v279 = vunpack.c.l.b16 %v135
  %v280 = vunpack.c.l.b16 %v136
  %v281 = vunpack.c.l.b16 %v137
  %v282 = vunpack.c.l.b16 %v138
  %v283 = vunpack.c.l.b16 %v139
  %v284 = vunpack.c.l.b16 %v140
  %v285 = vunpack.c.l.b16 %v141
  %v286 = vunpack.c.l.b16 %v142
  %v287 = vunpack.c.l.b16 %v143
  %v288 = vunpack.c.l.b16 %v144
  %v289 = vunpack.c.l.b16 %v145
  %v290 = vunpack.c.l.b16 %v146
  %v291 = vunpack.c.l.b16 %v147
  %v292 = vunpack.c.l.b16 %v148
  %v293 = vunpack.c.l.b16 %v149
  %v294 = vunpack.c.l.b16 %v150
  %v295 = vunpack.c.l.b16 %v151
  %v296 = vunpack.c.l.b16 %v152
  %v297 = vunpack.c.l.b16 %v153
  %v298 = vunpack.c.l.b16 %v154
  %v299 = vunpack.c.l.b16 %v155
  %v300 = vunpack.c.l.b16 %v156
  %v301 = vunpack.c.l.b16 %v157
  %v302 = vunpack.c.l.b16 %v158
  %v303 = vunpack.c.l.b16 %v159
  %v304 = vunpack.c.l.b16 %v160
  %v305 = vunpack.c.l.b16 %v161
  %v306 = vunpack.c.l.b16 %v162
  %v307 = vunpack.c.l.b16 %v163
  %v308 = vunpack.c.l.b16 %v164
  %v309 = vpack.c.b16 %v246, %v245
  %v310 = vpack.c.b16 %v248, %v247
  %v311 = vpack.c.b16 %v250, %v249
  %v312 = vpack.c.b16 %v252, %v251
  %v313 = vpack.c.b16 %v254, %v253
  %v314 = vpack.c.b16 %v256, %v255
  %v315 = vpack.c.b16 %v258, %v257
  %v316 = vpack.c.b16 %v260, %v259
  %v317 = vpack.c.b16 %v262, %v261
  %v318 = vpack.c.b16 %v264, %v263
  %v319 = vpack.c.b16 %v266, %v265
  %v320 = vpack.c.b16 %v268, %v267
  %v321 = vpack.c.b16 %v270, %v269
  %v322 = vpack.c.b16 %v272, %v271
  %v323 = vpack.c.b16 %v274, %v273
  %v324 = vpack.c.b16 %v276, %v275
  %v325 = vpack.c.b16 %v278, %v277
  %v326 = vpack.c.b16 %v280, %v279
  %v327 = vpack.c.b16 %v282, %v281
  %v328 = vpack.c.b16 %v284, %v283
  %v329 = vpack.c.b16 %v286, %v285
  %v330 = vpack.c.b16 %v288, %v287
  %v331 = vpack.c.b16 %v290, %v289
  %v332 = vpack.c.b16 %v292, %v291
  %v333 = vpack.c.b16 %v294, %v293
  %v334 = vpack.c.b16 %v296, %v295
  %v335 = vpack.c.b16 %v298, %v297
  %v336 = vpack.c.b16 %v300, %v299
  %v337 = vpack.c.b16 %v302, %v301
  %v338 = vpack.c.b16 %v304, %v303
  %v339 = vpack.c.b16 %v306, %v305
  %v340 = vpack.c.b16 %v308, %v307
  %v389 = vunpack.c.l.b16 %v165
  %v390 = vunpack.c.l.b16 %v166
  %v391 = vunpack.c.l.b16 %v167
  %v392 = vunpack.c.l.b16 %v168
  %v393 = vunpack.c.l.b16 %v169
  %v394 = vunpack.c.l.b16 %v170
  %v395 = vunpack.c.l.b16 %v171
  %v396 = vunpack.c.l.b16 %v172
  %v397 = vunpack.c.l.b16 %v173
  %v398 = vunpack.c.l.b16 %v174
  %v399 = vunpack.c.l.b16 %v175
  %v400 = vunpack.c.l.b16 %v176
  %v401 = vunpack.c.l.b16 %v177
  %v402 = vunpack.c.l.b16 %v178
  %v403 = vunpack.c.l.b16 %v179
  %v404 = vunpack.c.l.b16 %v180
  %v405 = vpack.c.b16 %v390, %v389
  %v406 = vpack.c.b16 %v392, %v391
  %v407 = vpack.c.b16 %v394, %v393
  %v408 = vpack.c.b16 %v396, %v395
  %v409 = vpack.c.b16 %v398, %v397
  %v410 = vpack.c.b16 %v400, %v399
  %v411 = vpack.c.b16 %v402, %v401
  %v412 = vpack.c.b16 %v404, %v403
  %421 = vmatprep.subr.bf16.mxu0 0
  %422 = vmatpush1.bf16.msra.mxu0 %v405
  %423 = vmatprep.subr.bf16.mxu0 0
  %424 = vmatpush1.bf16.msra.mxu0 %v406
  %425 = vmatprep.subr.bf16.mxu0 0
  %426 = vmatpush1.bf16.msra.mxu0 %v407
  %427 = vmatprep.subr.bf16.mxu0 0
  %428 = vmatpush1.bf16.msra.mxu0 %v408
  %429 = vmatprep.subr.bf16.mxu0 0
  %430 = vmatpush1.bf16.msra.mxu0 %v409
  %431 = vmatprep.subr.bf16.mxu0 0
  %432 = vmatpush1.bf16.msra.mxu0 %v410
  %433 = vmatprep.subr.bf16.mxu0 0
  %434 = vmatpush1.bf16.msra.mxu0 %v411
  %435 = vmatprep.subr.bf16.mxu0 0
  %436 = vmatpush1.bf16.msra.mxu0 %v412
  %437 = vmatprep.subr.bf16.mxu0 0
  %438 = vmatpush1.bf16.msra.mxu0 0
  %439 = vmatprep.subr.bf16.mxu0 0
  %440 = vmatpush1.bf16.msra.mxu0 0
  %441 = vmatprep.subr.bf16.mxu0 0
  %442 = vmatpush1.bf16.msra.mxu0 0
  %443 = vmatprep.subr.bf16.mxu0 0
  %444 = vmatpush1.bf16.msra.mxu0 0
  %445 = vmatprep.subr.bf16.mxu0 0
  %446 = vmatpush1.bf16.msra.mxu0 0
  %447 = vmatprep.subr.bf16.mxu0 0
  %448 = vmatpush1.bf16.msra.mxu0 0
  %449 = vmatprep.subr.bf16.mxu0 0
  %450 = vmatpush1.bf16.msra.mxu0 0
  %451 = vmatprep.subr.bf16.mxu0 0
  %452 = vmatpush1.bf16.msra.mxu0 0
  %453 = vmatprep.mubr.bf16.mxu0 0
  %454 = vmatmul.mubr.bf16.gmra.mrb[0].mxu0 %v309
  %v455 = vpop.f32.mrb[0].mxu0
  %v456 = vadd.f32 0.0, %v455
  %v457 = vpop.f32.mrb[0].mxu0
  %v458 = vpop.f32.mrb[0].mxu0
  %v459 = vadd.f32 0.0, %v458
  %v460 = vpop.f32.mrb[0].mxu0
  %461 = vmatprep.mubr.bf16.mxu0 0
  %462 = vmatmul.mubr.bf16.gmra.mrb[0].mxu0 %v310
  %v463 = vpop.f32.mrb[0].mxu0
  %v464 = vadd.f32 0.0, %v463
  %v465 = vpop.f32.mrb[0].mxu0
  %v466 = vpop.f32.mrb[0].mxu0
  %v467 = vadd.f32 0.0, %v466
  %v468 = vpop.f32.mrb[0].mxu0
  %469 = vmatprep.mubr.bf16.mxu0 0
  %470 = vmatmul.mubr.bf16.gmra.mrb[0].mxu0 %v311
  %v471 = vpop.f32.mrb[0].mxu0
  %v472 = vadd.f32 0.0, %v471
  %v473 = vpop.f32.mrb[0].mxu0
  %v474 = vpop.f32.mrb[0].mxu0
  %v475 = vadd.f32 0.0, %v474
  %v476 = vpop.f32.mrb[0].mxu0
  %477 = vmatprep.mubr.bf16.mxu0 0
  %478 = vmatmul.mubr.bf16.gmra.mrb[0].mxu0 %v312
  %v479 = vpop.f32.mrb[0].mxu0
  %v480 = vadd.f32 0.0, %v479
  %v481 = vpop.f32.mrb[0].mxu0
  %v482 = vpop.f32.mrb[0].mxu0
  %v483 = vadd.f32 0.0, %v482
  %v484 = vpop.f32.mrb[0].mxu0
  %485 = vmatprep.mubr.bf16.mxu0 0
  %486 = vmatmul.mubr.bf16.gmra.mrb[0].mxu0 %v313
  %v487 = vpop.f32.mrb[0].mxu0
  %v488 = vadd.f32 0.0, %v487
  %v489 = vpop.f32.mrb[0].mxu0
  %v490 = vpop.f32.mrb[0].mxu0
  %v491 = vadd.f32 0.0, %v490
  %v492 = vpop.f32.mrb[0].mxu0
  %493 = vmatprep.mubr.bf16.mxu0 0
  %494 = vmatmul.mubr.bf16.gmra.mrb[0].mxu0 %v314
  %v495 = vpop.f32.mrb[0].mxu0
  %v496 = vadd.f32 0.0, %v495
  %v497 = vpop.f32.mrb[0].mxu0
  %v498 = vpop.f32.mrb[0].mxu0
  %v499 = vadd.f32 0.0, %v498
  %v500 = vpop.f32.mrb[0].mxu0
  %501 = vmatprep.mubr.bf16.mxu0 0
  %502 = vmatmul.mubr.bf16.gmra.mrb[0].mxu0 %v315
  %v503 = vpop.f32.mrb[0].mxu0
  %v504 = vadd.f32 0.0, %v503
  %v505 = vpop.f32.mrb[0].mxu0
  %v506 = vpop.f32.mrb[0].mxu0
  %v507 = vadd.f32 0.0, %v506
  %v508 = vpop.f32.mrb[0].mxu0
  %509 = vmatprep.mubr.bf16.mxu0 0
  %510 = vmatmul.mubr.bf16.gmra.mrb[0].mxu0 %v316
  %v511 = vpop.f32.mrb[0].mxu0
  %v512 = vadd.f32 0.0, %v511
  %v513 = vpop.f32.mrb[0].mxu0
  %v514 = vpop.f32.mrb[0].mxu0
  %v515 = vadd.f32 0.0, %v514
  %v516 = vpop.f32.mrb[0].mxu0
  %517 = vmatprep.mubr.bf16.mxu0 0
  %518 = vmatmul.mubr.bf16.gmra.mrb[0].mxu0 %v317
  %v519 = vpop.f32.mrb[0].mxu0
  %v520 = vadd.f32 0.0, %v519
  %v521 = vpop.f32.mrb[0].mxu0
  %v522 = vpop.f32.mrb[0].mxu0
  %v523 = vadd.f32 0.0, %v522
  %v524 = vpop.f32.mrb[0].mxu0
  %525 = vmatprep.mubr.bf16.mxu0 0
  %526 = vmatmul.mubr.bf16.gmra.mrb[0].mxu0 %v318
  %v527 = vpop.f32.mrb[0].mxu0
  %v528 = vadd.f32 0.0, %v527
  %v529 = vpop.f32.mrb[0].mxu0
  %v530 = vpop.f32.mrb[0].mxu0
  %v531 = vadd.f32 0.0, %v530
  %v532 = vpop.f32.mrb[0].mxu0
  %533 = vmatprep.mubr.bf16.mxu0 0
  %534 = vmatmul.mubr.bf16.gmra.mrb[0].mxu0 %v319
  %v535 = vpop.f32.mrb[0].mxu0
  %v536 = vadd.f32 0.0, %v535
  %v537 = vpop.f32.mrb[0].mxu0
  %v538 = vpop.f32.mrb[0].mxu0
  %v539 = vadd.f32 0.0, %v538
  %v540 = vpop.f32.mrb[0].mxu0
  %541 = vmatprep.mubr.bf16.mxu0 0
  %542 = vmatmul.mubr.bf16.gmra.mrb[0].mxu0 %v320
  %v543 = vpop.f32.mrb[0].mxu0
  %v544 = vadd.f32 0.0, %v543
  %v545 = vpop.f32.mrb[0].mxu0
  %v546 = vpop.f32.mrb[0].mxu0
  %v547 = vadd.f32 0.0, %v546
  %v548 = vpop.f32.mrb[0].mxu0
  %549 = vmatprep.mubr.bf16.mxu0 0
  %550 = vmatmul.mubr.bf16.gmra.mrb[0].mxu0 %v321
  %v551 = vpop.f32.mrb[0].mxu0
  %v552 = vadd.f32 0.0, %v551
  %v553 = vpop.f32.mrb[0].mxu0
  %v554 = vpop.f32.mrb[0].mxu0
  %v555 = vadd.f32 0.0, %v554
  %v556 = vpop.f32.mrb[0].mxu0
  %557 = vmatprep.mubr.bf16.mxu0 0
  %558 = vmatmul.mubr.bf16.gmra.mrb[0].mxu0 %v322
  %v559 = vpop.f32.mrb[0].mxu0
  %v560 = vadd.f32 0.0, %v559
  %v561 = vpop.f32.mrb[0].mxu0
  %v562 = vpop.f32.mrb[0].mxu0
  %v563 = vadd.f32 0.0, %v562
  %v564 = vpop.f32.mrb[0].mxu0
  %565 = vmatprep.mubr.bf16.mxu0 0
  %566 = vmatmul.mubr.bf16.gmra.mrb[0].mxu0 %v323
  %v567 = vpop.f32.mrb[0].mxu0
  %v568 = vadd.f32 0.0, %v567
  %v569 = vpop.f32.mrb[0].mxu0
  %v570 = vpop.f32.mrb[0].mxu0
  %v571 = vadd.f32 0.0, %v570
  %v572 = vpop.f32.mrb[0].mxu0
  %573 = vmatprep.mubr.bf16.mxu0 0
  %574 = vmatmul.mubr.bf16.gmra.mrb[0].mxu0 %v324
  %v575 = vpop.f32.mrb[0].mxu0
  %v576 = vadd.f32 0.0, %v575
  %v577 = vpop.f32.mrb[0].mxu0
  %v578 = vpop.f32.mrb[0].mxu0
  %v579 = vadd.f32 0.0, %v578
  %v580 = vpop.f32.mrb[0].mxu0
  %581 = vmatprep.mubr.bf16.mxu0 0
  %582 = vmatmul.mubr.bf16.gmra.mrb[0].mxu0 %v325
  %v583 = vpop.f32.mrb[0].mxu0
  %v584 = vadd.f32 0.0, %v583
  %v585 = vpop.f32.mrb[0].mxu0
  %v586 = vpop.f32.mrb[0].mxu0
  %v587 = vadd.f32 0.0, %v586
  %v588 = vpop.f32.mrb[0].mxu0
  %589 = vmatprep.mubr.bf16.mxu0 0
  %590 = vmatmul.mubr.bf16.gmra.mrb[0].mxu0 %v326
  %v591 = vpop.f32.mrb[0].mxu0
  %v592 = vadd.f32 0.0, %v591
  %v593 = vpop.f32.mrb[0].mxu0
  %v594 = vpop.f32.mrb[0].mxu0
  %v595 = vadd.f32 0.0, %v594
  %v596 = vpop.f32.mrb[0].mxu0
  %597 = vmatprep.mubr.bf16.mxu0 0
  %598 = vmatmul.mubr.bf16.gmra.mrb[0].mxu0 %v327
  %v599 = vpop.f32.mrb[0].mxu0
  %v600 = vadd.f32 0.0, %v599
  %v601 = vpop.f32.mrb[0].mxu0
  %v602 = vpop.f32.mrb[0].mxu0
  %v603 = vadd.f32 0.0, %v602
  %v604 = vpop.f32.mrb[0].mxu0
  %605 = vmatprep.mubr.bf16.mxu0 0
  %606 = vmatmul.mubr.bf16.gmra.mrb[0].mxu0 %v328
  %v607 = vpop.f32.mrb[0].mxu0
  %v608 = vadd.f32 0.0, %v607
  %v609 = vpop.f32.mrb[0].mxu0
  %v610 = vpop.f32.mrb[0].mxu0
  %v611 = vadd.f32 0.0, %v610
  %v612 = vpop.f32.mrb[0].mxu0
  %613 = vmatprep.mubr.bf16.mxu0 0
  %614 = vmatmul.mubr.bf16.gmra.mrb[0].mxu0 %v329
  %v615 = vpop.f32.mrb[0].mxu0
  %v616 = vadd.f32 0.0, %v615
  %v617 = vpop.f32.mrb[0].mxu0
  %v618 = vpop.f32.mrb[0].mxu0
  %v619 = vadd.f32 0.0, %v618
  %v620 = vpop.f32.mrb[0].mxu0
  %621 = vmatprep.mubr.bf16.mxu0 0
  %622 = vmatmul.mubr.bf16.gmra.mrb[0].mxu0 %v330
  %v623 = vpop.f32.mrb[0].mxu0
  %v624 = vadd.f32 0.0, %v623
  %v625 = vpop.f32.mrb[0].mxu0
  %v626 = vpop.f32.mrb[0].mxu0
  %v627 = vadd.f32 0.0, %v626
  %v628 = vpop.f32.mrb[0].mxu0
  %629 = vmatprep.mubr.bf16.mxu0 0
  %630 = vmatmul.mubr.bf16.gmra.mrb[0].mxu0 %v331
  %v631 = vpop.f32.mrb[0].mxu0
  %v632 = vadd.f32 0.0, %v631
  %v633 = vpop.f32.mrb[0].mxu0
  %v634 = vpop.f32.mrb[0].mxu0
  %v635 = vadd.f32 0.0, %v634
  %v636 = vpop.f32.mrb[0].mxu0
  %637 = vmatprep.mubr.bf16.mxu0 0
  %638 = vmatmul.mubr.bf16.gmra.mrb[0].mxu0 %v332
  %v639 = vpop.f32.mrb[0].mxu0
  %v640 = vadd.f32 0.0, %v639
  %v641 = vpop.f32.mrb[0].mxu0
  %v642 = vpop.f32.mrb[0].mxu0
  %v643 = vadd.f32 0.0, %v642
  %v644 = vpop.f32.mrb[0].mxu0
  %645 = vmatprep.mubr.bf16.mxu0 0
  %646 = vmatmul.mubr.bf16.gmra.mrb[0].mxu0 %v333
  %v647 = vpop.f32.mrb[0].mxu0
  %v648 = vadd.f32 0.0, %v647
  %v649 = vpop.f32.mrb[0].mxu0
  %v650 = vpop.f32.mrb[0].mxu0
  %v651 = vadd.f32 0.0, %v650
  %v652 = vpop.f32.mrb[0].mxu0
  %653 = vmatprep.mubr.bf16.mxu0 0
  %654 = vmatmul.mubr.bf16.gmra.mrb[0].mxu0 %v334
  %v655 = vpop.f32.mrb[0].mxu0
  %v656 = vadd.f32 0.0, %v655
  %v657 = vpop.f32.mrb[0].mxu0
  %v658 = vpop.f32.mrb[0].mxu0
  %v659 = vadd.f32 0.0, %v658
  %v660 = vpop.f32.mrb[0].mxu0
  %661 = vmatprep.mubr.bf16.mxu0 0
  %662 = vmatmul.mubr.bf16.gmra.mrb[0].mxu0 %v335
  %v663 = vpop.f32.mrb[0].mxu0
  %v664 = vadd.f32 0.0, %v663
  %v665 = vpop.f32.mrb[0].mxu0
  %v666 = vpop.f32.mrb[0].mxu0
  %v667 = vadd.f32 0.0, %v666
  %v668 = vpop.f32.mrb[0].mxu0
  %669 = vmatprep.mubr.bf16.mxu0 0
  %670 = vmatmul.mubr.bf16.gmra.mrb[0].mxu0 %v336
  %v671 = vpop.f32.mrb[0].mxu0
  %v672 = vadd.f32 0.0, %v671
  %v673 = vpop.f32.mrb[0].mxu0
  %v674 = vpop.f32.mrb[0].mxu0
  %v675 = vadd.f32 0.0, %v674
  %v676 = vpop.f32.mrb[0].mxu0
  %677 = vmatprep.mubr.bf16.mxu0 0
  %678 = vmatmul.mubr.bf16.gmra.mrb[0].mxu0 %v337
  %v679 = vpop.f32.mrb[0].mxu0
  %v680 = vadd.f32 0.0, %v679
  %v681 = vpop.f32.mrb[0].mxu0
  %v682 = vpop.f32.mrb[0].mxu0
  %v683 = vadd.f32 0.0, %v682
  %v684 = vpop.f32.mrb[0].mxu0
  %685 = vmatprep.mubr.bf16.mxu0 0
  %686 = vmatmul.mubr.bf16.gmra.mrb[0].mxu0 %v338
  %v687 = vpop.f32.mrb[0].mxu0
  %v688 = vadd.f32 0.0, %v687
  %v689 = vpop.f32.mrb[0].mxu0
  %v690 = vpop.f32.mrb[0].mxu0
  %v691 = vadd.f32 0.0, %v690
  %v692 = vpop.f32.mrb[0].mxu0
  %693 = vmatprep.mubr.bf16.mxu0 0
  %694 = vmatmul.mubr.bf16.gmra.mrb[0].mxu0 %v339
  %v695 = vpop.f32.mrb[0].mxu0
  %v696 = vadd.f32 0.0, %v695
  %v697 = vpop.f32.mrb[0].mxu0
  %v698 = vpop.f32.mrb[0].mxu0
  %v699 = vadd.f32 0.0, %v698
  %v700 = vpop.f32.mrb[0].mxu0
  %701 = vmatprep.mubr.bf16.mxu0 0
  %702 = vmatmul.mubr.bf16.gmra.mrb[0].mxu0 %v340
  %v703 = vpop.f32.mrb[0].mxu0
  %v704 = vadd.f32 0.0, %v703
  %v705 = vpop.f32.mrb[0].mxu0
  %v706 = vpop.f32.mrb[0].mxu0
  %v707 = vadd.f32 0.0, %v706
  %v708 = vpop.f32.mrb[0].mxu0
  %709 = vdwg.mxu0
  %v774 = vunpack.c.l.b16 %v21
  %v775 = vunpack.c.l.b16 %v22
  %v776 = vunpack.c.l.b16 %v23
  %v777 = vunpack.c.l.b16 %v24
  %v778 = vunpack.c.l.b16 %v25
  %v779 = vunpack.c.l.b16 %v26
  %v780 = vunpack.c.l.b16 %v27
  %v781 = vunpack.c.l.b16 %v28
  %v782 = vunpack.c.l.b16 %v29
  %v783 = vunpack.c.l.b16 %v30
  %v784 = vunpack.c.l.b16 %v31
  %v785 = vunpack.c.l.b16 %v32
  %v786 = vunpack.c.l.b16 %v33
  %v787 = vunpack.c.l.b16 %v34
  %v788 = vunpack.c.l.b16 %v35
  %v789 = vunpack.c.l.b16 %v36
  %v790 = vunpack.c.l.b16 %v37
  %v791 = vunpack.c.l.b16 %v38
  %v792 = vunpack.c.l.b16 %v39
  %v793 = vunpack.c.l.b16 %v40
  %v794 = vunpack.c.l.b16 %v41
  %v795 = vunpack.c.l.b16 %v42
  %v796 = vunpack.c.l.b16 %v43
  %v797 = vunpack.c.l.b16 %v44
  %v798 = vunpack.c.l.b16 %v45
  %v799 = vunpack.c.l.b16 %v46
  %v800 = vunpack.c.l.b16 %v47
  %v801 = vunpack.c.l.b16 %v48
  %v802 = vunpack.c.l.b16 %v49
  %v803 = vunpack.c.l.b16 %v50
  %v804 = vunpack.c.l.b16 %v51
  %v805 = vunpack.c.l.b16 %v52
  %v806 = vunpack.c.l.b16 %v53
  %v807 = vunpack.c.l.b16 %v54
  %v808 = vunpack.c.l.b16 %v55
  %v809 = vunpack.c.l.b16 %v56
  %v810 = vunpack.c.l.b16 %v57
  %v811 = vunpack.c.l.b16 %v58
  %v812 = vunpack.c.l.b16 %v59
  %v813 = vunpack.c.l.b16 %v60
  %v814 = vunpack.c.l.b16 %v61
  %v815 = vunpack.c.l.b16 %v62
  %v816 = vunpack.c.l.b16 %v63
  %v817 = vunpack.c.l.b16 %v64
  %v818 = vunpack.c.l.b16 %v65
  %v819 = vunpack.c.l.b16 %v66
  %v820 = vunpack.c.l.b16 %v67
  %v821 = vunpack.c.l.b16 %v68
  %v822 = vunpack.c.l.b16 %v69
  %v823 = vunpack.c.l.b16 %v70
  %v824 = vunpack.c.l.b16 %v71
  %v825 = vunpack.c.l.b16 %v72
  %v826 = vunpack.c.l.b16 %v73
  %v827 = vunpack.c.l.b16 %v74
  %v828 = vunpack.c.l.b16 %v75
  %v829 = vunpack.c.l.b16 %v76
  %v830 = vunpack.c.l.b16 %v77
  %v831 = vunpack.c.l.b16 %v78
  %v832 = vunpack.c.l.b16 %v79
  %v833 = vunpack.c.l.b16 %v80
  %v834 = vunpack.c.l.b16 %v81
  %v835 = vunpack.c.l.b16 %v82
  %v836 = vunpack.c.l.b16 %v83
  %v837 = vunpack.c.l.b16 %v84
  %v838 = vpack.c.b16 %v775, %v774
  %v839 = vpack.c.b16 %v777, %v776
  %v840 = vpack.c.b16 %v779, %v778
  %v841 = vpack.c.b16 %v781, %v780
  %v842 = vpack.c.b16 %v783, %v782
  %v843 = vpack.c.b16 %v785, %v784
  %v844 = vpack.c.b16 %v787, %v786
  %v845 = vpack.c.b16 %v789, %v788
  %v846 = vpack.c.b16 %v791, %v790
  %v847 = vpack.c.b16 %v793, %v792
  %v848 = vpack.c.b16 %v795, %v794
  %v849 = vpack.c.b16 %v797, %v796
  %v850 = vpack.c.b16 %v799, %v798
  %v851 = vpack.c.b16 %v801, %v800
  %v852 = vpack.c.b16 %v803, %v802
  %v853 = vpack.c.b16 %v805, %v804
  %v854 = vpack.c.b16 %v807, %v806
  %v855 = vpack.c.b16 %v809, %v808
  %v856 = vpack.c.b16 %v811, %v810
  %v857 = vpack.c.b16 %v813, %v812
  %v858 = vpack.c.b16 %v815, %v814
  %v859 = vpack.c.b16 %v817, %v816
  %v860 = vpack.c.b16 %v819, %v818
  %v861 = vpack.c.b16 %v821, %v820
  %v862 = vpack.c.b16 %v823, %v822
  %v863 = vpack.c.b16 %v825, %v824
  %v864 = vpack.c.b16 %v827, %v826
  %v865 = vpack.c.b16 %v829, %v828
  %v866 = vpack.c.b16 %v831, %v830
  %v867 = vpack.c.b16 %v833, %v832
  %v868 = vpack.c.b16 %v835, %v834
  %v869 = vpack.c.b16 %v837, %v836
  %v918 = vunpack.c.l.b16 %v85
  %v919 = vunpack.c.l.b16 %v86
  %v920 = vunpack.c.l.b16 %v87
  %v921 = vunpack.c.l.b16 %v88
  %v922 = vunpack.c.l.b16 %v89
  %v923 = vunpack.c.l.b16 %v90
  %v924 = vunpack.c.l.b16 %v91
  %v925 = vunpack.c.l.b16 %v92
  %v926 = vunpack.c.l.b16 %v93
  %v927 = vunpack.c.l.b16 %v94
  %v928 = vunpack.c.l.b16 %v95
  %v929 = vunpack.c.l.b16 %v96
  %v930 = vunpack.c.l.b16 %v97
  %v931 = vunpack.c.l.b16 %v98
  %v932 = vunpack.c.l.b16 %v99
  %v933 = vunpack.c.l.b16 %v100
  %v934 = vpack.c.b16 %v919, %v918
  %v935 = vpack.c.b16 %v921, %v920
  %v936 = vpack.c.b16 %v923, %v922
  %v937 = vpack.c.b16 %v925, %v924
  %v938 = vpack.c.b16 %v927, %v926
  %v939 = vpack.c.b16 %v929, %v928
  %v940 = vpack.c.b16 %v931, %v930
  %v941 = vpack.c.b16 %v933, %v932
  %950 = vmatprep.subr.bf16.mxu0 0
  %951 = vmatpush1.bf16.msra.mxu0 %v934
  %952 = vmatprep.subr.bf16.mxu0 0
  %953 = vmatpush1.bf16.msra.mxu0 %v935
  %954 = vmatprep.subr.bf16.mxu0 0
  %955 = vmatpush1.bf16.msra.mxu0 %v936
  %956 = vmatprep.subr.bf16.mxu0 0
  %957 = vmatpush1.bf16.msra.mxu0 %v937
  %958 = vmatprep.subr.bf16.mxu0 0
  %959 = vmatpush1.bf16.msra.mxu0 %v938
  %960 = vmatprep.subr.bf16.mxu0 0
  %961 = vmatpush1.bf16.msra.mxu0 %v939
  %962 = vmatprep.subr.bf16.mxu0 0
  %963 = vmatpush1.bf16.msra.mxu0 %v940
  %964 = vmatprep.subr.bf16.mxu0 0
  %965 = vmatpush1.bf16.msra.mxu0 %v941
  %966 = vmatprep.subr.bf16.mxu0 0
  %967 = vmatpush1.bf16.msra.mxu0 0
  %968 = vmatprep.subr.bf16.mxu0 0
  %969 = vmatpush1.bf16.msra.mxu0 0
  %970 = vmatprep.subr.bf16.mxu0 0
  %971 = vmatpush1.bf16.msra.mxu0 0
  %972 = vmatprep.subr.bf16.mxu0 0
  %973 = vmatpush1.bf16.msra.mxu0 0
  %974 = vmatprep.subr.bf16.mxu0 0
  %975 = vmatpush1.bf16.msra.mxu0 0
  %976 = vmatprep.subr.bf16.mxu0 0
  %977 = vmatpush1.bf16.msra.mxu0 0
  %978 = vmatprep.subr.bf16.mxu0 0
  %979 = vmatpush1.bf16.msra.mxu0 0
  %980 = vmatprep.subr.bf16.mxu0 0
  %981 = vmatpush1.bf16.msra.mxu0 0
  %982 = vmatprep.mubr.bf16.mxu0 0
  %983 = vmatmul.mubr.bf16.gmra.mrb[0].mxu0 %v838
  %v984 = vpop.f32.mrb[0].mxu0
  %v985 = vadd.f32 %v456, %v984
  %v986 = vpop.f32.mrb[0].mxu0
  %v987 = vpop.f32.mrb[0].mxu0
  %v988 = vadd.f32 %v459, %v987
  %v989 = vpop.f32.mrb[0].mxu0
  %990 = vmatprep.mubr.bf16.mxu0 0
  %991 = vmatmul.mubr.bf16.gmra.mrb[0].mxu0 %v839
  %v992 = vpop.f32.mrb[0].mxu0
  %v993 = vadd.f32 %v464, %v992
  %v994 = vpop.f32.mrb[0].mxu0
  %v995 = vpop.f32.mrb[0].mxu0
  %v996 = vadd.f32 %v467, %v995
  %v997 = vpop.f32.mrb[0].mxu0
  %998 = vmatprep.mubr.bf16.mxu0 0
  %999 = vmatmul.mubr.bf16.gmra.mrb[0].mxu0 %v840
  %v1000 = vpop.f32.mrb[0].mxu0
  %v1001 = vadd.f32 %v472, %v1000
  %v1002 = vpop.f32.mrb[0].mxu0
  %v1003 = vpop.f32.mrb[0].mxu0
  %v1004 = vadd.f32 %v475, %v1003
  %v1005 = vpop.f32.mrb[0].mxu0
  %1006 = vmatprep.mubr.bf16.mxu0 0
  %1007 = vmatmul.mubr.bf16.gmra.mrb[0].mxu0 %v841
  %v1008 = vpop.f32.mrb[0].mxu0
  %v1009 = vadd.f32 %v480, %v1008
  %v1010 = vpop.f32.mrb[0].mxu0
  %v1011 = vpop.f32.mrb[0].mxu0
  %v1012 = vadd.f32 %v483, %v1011
  %v1013 = vpop.f32.mrb[0].mxu0
  %1014 = vmatprep.mubr.bf16.mxu0 0
  %1015 = vmatmul.mubr.bf16.gmra.mrb[0].mxu0 %v842
  %v1016 = vpop.f32.mrb[0].mxu0
  %v1017 = vadd.f32 %v488, %v1016
  %v1018 = vpop.f32.mrb[0].mxu0
  %v1019 = vpop.f32.mrb[0].mxu0
  %v1020 = vadd.f32 %v491, %v1019
  %v1021 = vpop.f32.mrb[0].mxu0
  %1022 = vmatprep.mubr.bf16.mxu0 0
  %1023 = vmatmul.mubr.bf16.gmra.mrb[0].mxu0 %v843
  %v1024 = vpop.f32.mrb[0].mxu0
  %v1025 = vadd.f32 %v496, %v1024
  %v1026 = vpop.f32.mrb[0].mxu0
  %v1027 = vpop.f32.mrb[0].mxu0
  %v1028 = vadd.f32 %v499, %v1027
  %v1029 = vpop.f32.mrb[0].mxu0
  %1030 = vmatprep.mubr.bf16.mxu0 0
  %1031 = vmatmul.mubr.bf16.gmra.mrb[0].mxu0 %v844
  %v1032 = vpop.f32.mrb[0].mxu0
  %v1033 = vadd.f32 %v504, %v1032
  %v1034 = vpop.f32.mrb[0].mxu0
  %v1035 = vpop.f32.mrb[0].mxu0
  %v1036 = vadd.f32 %v507, %v1035
  %v1037 = vpop.f32.mrb[0].mxu0
  %1038 = vmatprep.mubr.bf16.mxu0 0
  %1039 = vmatmul.mubr.bf16.gmra.mrb[0].mxu0 %v845
  %v1040 = vpop.f32.mrb[0].mxu0
  %v1041 = vadd.f32 %v512, %v1040
  %v1042 = vpop.f32.mrb[0].mxu0
  %v1043 = vpop.f32.mrb[0].mxu0
  %v1044 = vadd.f32 %v515, %v1043
  %v1045 = vpop.f32.mrb[0].mxu0
  %1046 = vmatprep.mubr.bf16.mxu0 0
  %1047 = vmatmul.mubr.bf16.gmra.mrb[0].mxu0 %v846
  %v1048 = vpop.f32.mrb[0].mxu0
  %v1049 = vadd.f32 %v520, %v1048
  %v1050 = vpop.f32.mrb[0].mxu0
  %v1051 = vpop.f32.mrb[0].mxu0
  %v1052 = vadd.f32 %v523, %v1051
  %v1053 = vpop.f32.mrb[0].mxu0
  %1054 = vmatprep.mubr.bf16.mxu0 0
  %1055 = vmatmul.mubr.bf16.gmra.mrb[0].mxu0 %v847
  %v1056 = vpop.f32.mrb[0].mxu0
  %v1057 = vadd.f32 %v528, %v1056
  %v1058 = vpop.f32.mrb[0].mxu0
  %v1059 = vpop.f32.mrb[0].mxu0
  %v1060 = vadd.f32 %v531, %v1059
  %v1061 = vpop.f32.mrb[0].mxu0
  %1062 = vmatprep.mubr.bf16.mxu0 0
  %1063 = vmatmul.mubr.bf16.gmra.mrb[0].mxu0 %v848
  %v1064 = vpop.f32.mrb[0].mxu0
  %v1065 = vadd.f32 %v536, %v1064
  %v1066 = vpop.f32.mrb[0].mxu0
  %v1067 = vpop.f32.mrb[0].mxu0
  %v1068 = vadd.f32 %v539, %v1067
  %v1069 = vpop.f32.mrb[0].mxu0
  %1070 = vmatprep.mubr.bf16.mxu0 0
  %1071 = vmatmul.mubr.bf16.gmra.mrb[0].mxu0 %v849
  %v1072 = vpop.f32.mrb[0].mxu0
  %v1073 = vadd.f32 %v544, %v1072
  %v1074 = vpop.f32.mrb[0].mxu0
  %v1075 = vpop.f32.mrb[0].mxu0
  %v1076 = vadd.f32 %v547, %v1075
  %v1077 = vpop.f32.mrb[0].mxu0
  %1078 = vmatprep.mubr.bf16.mxu0 0
  %1079 = vmatmul.mubr.bf16.gmra.mrb[0].mxu0 %v850
  %v1080 = vpop.f32.mrb[0].mxu0
  %v1081 = vadd.f32 %v552, %v1080
  %v1082 = vpop.f32.mrb[0].mxu0
  %v1083 = vpop.f32.mrb[0].mxu0
  %v1084 = vadd.f32 %v555, %v1083
  %v1085 = vpop.f32.mrb[0].mxu0
  %1086 = vmatprep.mubr.bf16.mxu0 0
  %1087 = vmatmul.mubr.bf16.gmra.mrb[0].mxu0 %v851
  %v1088 = vpop.f32.mrb[0].mxu0
  %v1089 = vadd.f32 %v560, %v1088
  %v1090 = vpop.f32.mrb[0].mxu0
  %v1091 = vpop.f32.mrb[0].mxu0
  %v1092 = vadd.f32 %v563, %v1091
  %v1093 = vpop.f32.mrb[0].mxu0
  %1094 = vmatprep.mubr.bf16.mxu0 0
  %1095 = vmatmul.mubr.bf16.gmra.mrb[0].mxu0 %v852
  %v1096 = vpop.f32.mrb[0].mxu0
  %v1097 = vadd.f32 %v568, %v1096
  %v1098 = vpop.f32.mrb[0].mxu0
  %v1099 = vpop.f32.mrb[0].mxu0
  %v1100 = vadd.f32 %v571, %v1099
  %v1101 = vpop.f32.mrb[0].mxu0
  %1102 = vmatprep.mubr.bf16.mxu0 0
  %1103 = vmatmul.mubr.bf16.gmra.mrb[0].mxu0 %v853
  %v1104 = vpop.f32.mrb[0].mxu0
  %v1105 = vadd.f32 %v576, %v1104
  %v1106 = vpop.f32.mrb[0].mxu0
  %v1107 = vpop.f32.mrb[0].mxu0
  %v1108 = vadd.f32 %v579, %v1107
  %v1109 = vpop.f32.mrb[0].mxu0
  %1110 = vmatprep.mubr.bf16.mxu0 0
  %1111 = vmatmul.mubr.bf16.gmra.mrb[0].mxu0 %v854
  %v1112 = vpop.f32.mrb[0].mxu0
  %v1113 = vadd.f32 %v584, %v1112
  %v1114 = vpop.f32.mrb[0].mxu0
  %v1115 = vpop.f32.mrb[0].mxu0
  %v1116 = vadd.f32 %v587, %v1115
  %v1117 = vpop.f32.mrb[0].mxu0
  %1118 = vmatprep.mubr.bf16.mxu0 0
  %1119 = vmatmul.mubr.bf16.gmra.mrb[0].mxu0 %v855
  %v1120 = vpop.f32.mrb[0].mxu0
  %v1121 = vadd.f32 %v592, %v1120
  %v1122 = vpop.f32.mrb[0].mxu0
  %v1123 = vpop.f32.mrb[0].mxu0
  %v1124 = vadd.f32 %v595, %v1123
  %v1125 = vpop.f32.mrb[0].mxu0
  %1126 = vmatprep.mubr.bf16.mxu0 0
  %1127 = vmatmul.mubr.bf16.gmra.mrb[0].mxu0 %v856
  %v1128 = vpop.f32.mrb[0].mxu0
  %v1129 = vadd.f32 %v600, %v1128
  %v1130 = vpop.f32.mrb[0].mxu0
  %v1131 = vpop.f32.mrb[0].mxu0
  %v1132 = vadd.f32 %v603, %v1131
  %v1133 = vpop.f32.mrb[0].mxu0
  %1134 = vmatprep.mubr.bf16.mxu0 0
  %1135 = vmatmul.mubr.bf16.gmra.mrb[0].mxu0 %v857
  %v1136 = vpop.f32.mrb[0].mxu0
  %v1137 = vadd.f32 %v608, %v1136
  %v1138 = vpop.f32.mrb[0].mxu0
  %v1139 = vpop.f32.mrb[0].mxu0
  %v1140 = vadd.f32 %v611, %v1139
  %v1141 = vpop.f32.mrb[0].mxu0
  %1142 = vmatprep.mubr.bf16.mxu0 0
  %1143 = vmatmul.mubr.bf16.gmra.mrb[0].mxu0 %v858
  %v1144 = vpop.f32.mrb[0].mxu0
  %v1145 = vadd.f32 %v616, %v1144
  %v1146 = vpop.f32.mrb[0].mxu0
  %v1147 = vpop.f32.mrb[0].mxu0
  %v1148 = vadd.f32 %v619, %v1147
  %v1149 = vpop.f32.mrb[0].mxu0
  %1150 = vmatprep.mubr.bf16.mxu0 0
  %1151 = vmatmul.mubr.bf16.gmra.mrb[0].mxu0 %v859
  %v1152 = vpop.f32.mrb[0].mxu0
  %v1153 = vadd.f32 %v624, %v1152
  %v1154 = vpop.f32.mrb[0].mxu0
  %v1155 = vpop.f32.mrb[0].mxu0
  %v1156 = vadd.f32 %v627, %v1155
  %v1157 = vpop.f32.mrb[0].mxu0
  %1158 = vmatprep.mubr.bf16.mxu0 0
  %1159 = vmatmul.mubr.bf16.gmra.mrb[0].mxu0 %v860
  %v1160 = vpop.f32.mrb[0].mxu0
  %v1161 = vadd.f32 %v632, %v1160
  %v1162 = vpop.f32.mrb[0].mxu0
  %v1163 = vpop.f32.mrb[0].mxu0
  %v1164 = vadd.f32 %v635, %v1163
  %v1165 = vpop.f32.mrb[0].mxu0
  %1166 = vmatprep.mubr.bf16.mxu0 0
  %1167 = vmatmul.mubr.bf16.gmra.mrb[0].mxu0 %v861
  %v1168 = vpop.f32.mrb[0].mxu0
  %v1169 = vadd.f32 %v640, %v1168
  %v1170 = vpop.f32.mrb[0].mxu0
  %v1171 = vpop.f32.mrb[0].mxu0
  %v1172 = vadd.f32 %v643, %v1171
  %v1173 = vpop.f32.mrb[0].mxu0
  %1174 = vmatprep.mubr.bf16.mxu0 0
  %1175 = vmatmul.mubr.bf16.gmra.mrb[0].mxu0 %v862
  %v1176 = vpop.f32.mrb[0].mxu0
  %v1177 = vadd.f32 %v648, %v1176
  %v1178 = vpop.f32.mrb[0].mxu0
  %v1179 = vpop.f32.mrb[0].mxu0
  %v1180 = vadd.f32 %v651, %v1179
  %v1181 = vpop.f32.mrb[0].mxu0
  %1182 = vmatprep.mubr.bf16.mxu0 0
  %1183 = vmatmul.mubr.bf16.gmra.mrb[0].mxu0 %v863
  %v1184 = vpop.f32.mrb[0].mxu0
  %v1185 = vadd.f32 %v656, %v1184
  %v1186 = vpop.f32.mrb[0].mxu0
  %v1187 = vpop.f32.mrb[0].mxu0
  %v1188 = vadd.f32 %v659, %v1187
  %v1189 = vpop.f32.mrb[0].mxu0
  %1190 = vmatprep.mubr.bf16.mxu0 0
  %1191 = vmatmul.mubr.bf16.gmra.mrb[0].mxu0 %v864
  %v1192 = vpop.f32.mrb[0].mxu0
  %v1193 = vadd.f32 %v664, %v1192
  %v1194 = vpop.f32.mrb[0].mxu0
  %v1195 = vpop.f32.mrb[0].mxu0
  %v1196 = vadd.f32 %v667, %v1195
  %v1197 = vpop.f32.mrb[0].mxu0
  %1198 = vmatprep.mubr.bf16.mxu0 0
  %1199 = vmatmul.mubr.bf16.gmra.mrb[0].mxu0 %v865
  %v1200 = vpop.f32.mrb[0].mxu0
  %v1201 = vadd.f32 %v672, %v1200
  %v1202 = vpop.f32.mrb[0].mxu0
  %v1203 = vpop.f32.mrb[0].mxu0
  %v1204 = vadd.f32 %v675, %v1203
  %v1205 = vpop.f32.mrb[0].mxu0
  %1206 = vmatprep.mubr.bf16.mxu0 0
  %1207 = vmatmul.mubr.bf16.gmra.mrb[0].mxu0 %v866
  %v1208 = vpop.f32.mrb[0].mxu0
  %v1209 = vadd.f32 %v680, %v1208
  %v1210 = vpop.f32.mrb[0].mxu0
  %v1211 = vpop.f32.mrb[0].mxu0
  %v1212 = vadd.f32 %v683, %v1211
  %v1213 = vpop.f32.mrb[0].mxu0
  %1214 = vmatprep.mubr.bf16.mxu0 0
  %1215 = vmatmul.mubr.bf16.gmra.mrb[0].mxu0 %v867
  %v1216 = vpop.f32.mrb[0].mxu0
  %v1217 = vadd.f32 %v688, %v1216
  %v1218 = vpop.f32.mrb[0].mxu0
  %v1219 = vpop.f32.mrb[0].mxu0
  %v1220 = vadd.f32 %v691, %v1219
  %v1221 = vpop.f32.mrb[0].mxu0
  %1222 = vmatprep.mubr.bf16.mxu0 0
  %1223 = vmatmul.mubr.bf16.gmra.mrb[0].mxu0 %v868
  %v1224 = vpop.f32.mrb[0].mxu0
  %v1225 = vadd.f32 %v696, %v1224
  %v1226 = vpop.f32.mrb[0].mxu0
  %v1227 = vpop.f32.mrb[0].mxu0
  %v1228 = vadd.f32 %v699, %v1227
  %v1229 = vpop.f32.mrb[0].mxu0
  %1230 = vmatprep.mubr.bf16.mxu0 0
  %1231 = vmatmul.mubr.bf16.gmra.mrb[0].mxu0 %v869
  %v1232 = vpop.f32.mrb[0].mxu0
  %v1233 = vadd.f32 %v704, %v1232
  %v1234 = vpop.f32.mrb[0].mxu0
  %v1235 = vpop.f32.mrb[0].mxu0
  %v1236 = vadd.f32 %v707, %v1235
  %v1237 = vpop.f32.mrb[0].mxu0
  %1238 = vdwg.mxu0
  %v1239 = vld [vmem:[%s4] sm:$0x1]
  %v1241 = vlaneseq
  %v1242 = vshrl.u32 %v1241, 7
  %v1243 = vsub.s32 0, %v1242
  %v1244 = vrot.slane %v1239, %v1243
  %v1246 = vadd.f32 %v985, %v1244
  %v1247 = vadd.f32 %v988, %v1244
  %v1248 = vadd.f32 %v993, %v1244
  %v1249 = vadd.f32 %v996, %v1244
  %v1250 = vadd.f32 %v1001, %v1244
  %v1251 = vadd.f32 %v1004, %v1244
  %v1252 = vadd.f32 %v1009, %v1244
  %v1253 = vadd.f32 %v1012, %v1244
  %v1254 = vadd.f32 %v1017, %v1244
  %v1255 = vadd.f32 %v1020, %v1244
  %v1256 = vadd.f32 %v1025, %v1244
  %v1257 = vadd.f32 %v1028, %v1244
  %v1258 = vadd.f32 %v1033, %v1244
  %v1259 = vadd.f32 %v1036, %v1244
  %v1260 = vadd.f32 %v1041, %v1244
  %v1261 = vadd.f32 %v1044, %v1244
  %v1262 = vadd.f32 %v1049, %v1244
  %v1263 = vadd.f32 %v1052, %v1244
  %v1264 = vadd.f32 %v1057, %v1244
  %v1265 = vadd.f32 %v1060, %v1244
  %v1266 = vadd.f32 %v1065, %v1244
  %v1267 = vadd.f32 %v1068, %v1244
  %v1268 = vadd.f32 %v1073, %v1244
  %v1269 = vadd.f32 %v1076, %v1244
  %v1270 = vadd.f32 %v1081, %v1244
  %v1271 = vadd.f32 %v1084, %v1244
  %v1272 = vadd.f32 %v1089, %v1244
  %v1273 = vadd.f32 %v1092, %v1244
  %v1274 = vadd.f32 %v1097, %v1244
  %v1275 = vadd.f32 %v1100, %v1244
  %v1276 = vadd.f32 %v1105, %v1244
  %v1277 = vadd.f32 %v1108, %v1244
  %v1278 = vadd.f32 %v1113, %v1244
  %v1279 = vadd.f32 %v1116, %v1244
  %v1280 = vadd.f32 %v1121, %v1244
  %v1281 = vadd.f32 %v1124, %v1244
  %v1282 = vadd.f32 %v1129, %v1244
  %v1283 = vadd.f32 %v1132, %v1244
  %v1284 = vadd.f32 %v1137, %v1244
  %v1285 = vadd.f32 %v1140, %v1244
  %v1286 = vadd.f32 %v1145, %v1244
  %v1287 = vadd.f32 %v1148, %v1244
  %v1288 = vadd.f32 %v1153, %v1244
  %v1289 = vadd.f32 %v1156, %v1244
  %v1290 = vadd.f32 %v1161, %v1244
  %v1291 = vadd.f32 %v1164, %v1244
  %v1292 = vadd.f32 %v1169, %v1244
  %v1293 = vadd.f32 %v1172, %v1244
  %v1294 = vadd.f32 %v1177, %v1244
  %v1295 = vadd.f32 %v1180, %v1244
  %v1296 = vadd.f32 %v1185, %v1244
  %v1297 = vadd.f32 %v1188, %v1244
  %v1298 = vadd.f32 %v1193, %v1244
  %v1299 = vadd.f32 %v1196, %v1244
  %v1300 = vadd.f32 %v1201, %v1244
  %v1301 = vadd.f32 %v1204, %v1244
  %v1302 = vadd.f32 %v1209, %v1244
  %v1303 = vadd.f32 %v1212, %v1244
  %v1304 = vadd.f32 %v1217, %v1244
  %v1305 = vadd.f32 %v1220, %v1244
  %v1306 = vadd.f32 %v1225, %v1244
  %v1307 = vadd.f32 %v1228, %v1244
  %v1308 = vadd.f32 %v1233, %v1244
  %v1309 = vadd.f32 %v1236, %v1244
  %v1310 = vmax.f32 %v1246, 0.0
  %v1311 = vmax.f32 %v1247, 0.0
  %v1312 = vmax.f32 %v1248, 0.0
  %v1313 = vmax.f32 %v1249, 0.0
  %v1314 = vmax.f32 %v1250, 0.0
  %v1315 = vmax.f32 %v1251, 0.0
  %v1316 = vmax.f32 %v1252, 0.0
  %v1317 = vmax.f32 %v1253, 0.0
  %v1318 = vmax.f32 %v1254, 0.0
  %v1319 = vmax.f32 %v1255, 0.0
  %v1320 = vmax.f32 %v1256, 0.0
  %v1321 = vmax.f32 %v1257, 0.0
  %v1322 = vmax.f32 %v1258, 0.0
  %v1323 = vmax.f32 %v1259, 0.0
  %v1324 = vmax.f32 %v1260, 0.0
  %v1325 = vmax.f32 %v1261, 0.0
  %v1326 = vmax.f32 %v1262, 0.0
  %v1327 = vmax.f32 %v1263, 0.0
  %v1328 = vmax.f32 %v1264, 0.0
  %v1329 = vmax.f32 %v1265, 0.0
  %v1330 = vmax.f32 %v1266, 0.0
  %v1331 = vmax.f32 %v1267, 0.0
  %v1332 = vmax.f32 %v1268, 0.0
  %v1333 = vmax.f32 %v1269, 0.0
  %v1334 = vmax.f32 %v1270, 0.0
  %v1335 = vmax.f32 %v1271, 0.0
  %v1336 = vmax.f32 %v1272, 0.0
  %v1337 = vmax.f32 %v1273, 0.0
  %v1338 = vmax.f32 %v1274, 0.0
  %v1339 = vmax.f32 %v1275, 0.0
  %v1340 = vmax.f32 %v1276, 0.0
  %v1341 = vmax.f32 %v1277, 0.0
  %v1342 = vmax.f32 %v1278, 0.0
  %v1343 = vmax.f32 %v1279, 0.0
  %v1344 = vmax.f32 %v1280, 0.0
  %v1345 = vmax.f32 %v1281, 0.0
  %v1346 = vmax.f32 %v1282, 0.0
  %v1347 = vmax.f32 %v1283, 0.0
  %v1348 = vmax.f32 %v1284, 0.0
  %v1349 = vmax.f32 %v1285, 0.0
  %v1350 = vmax.f32 %v1286, 0.0
  %v1351 = vmax.f32 %v1287, 0.0
  %v1352 = vmax.f32 %v1288, 0.0
  %v1353 = vmax.f32 %v1289, 0.0
  %v1354 = vmax.f32 %v1290, 0.0
  %v1355 = vmax.f32 %v1291, 0.0
  %v1356 = vmax.f32 %v1292, 0.0
  %v1357 = vmax.f32 %v1293, 0.0
  %v1358 = vmax.f32 %v1294, 0.0
  %v1359 = vmax.f32 %v1295, 0.0
  %v1360 = vmax.f32 %v1296, 0.0
  %v1361 = vmax.f32 %v1297, 0.0
  %v1362 = vmax.f32 %v1298, 0.0
  %v1363 = vmax.f32 %v1299, 0.0
  %v1364 = vmax.f32 %v1300, 0.0
  %v1365 = vmax.f32 %v1301, 0.0
  %v1366 = vmax.f32 %v1302, 0.0
  %v1367 = vmax.f32 %v1303, 0.0
  %v1368 = vmax.f32 %v1304, 0.0
  %v1369 = vmax.f32 %v1305, 0.0
  %v1370 = vmax.f32 %v1306, 0.0
  %v1371 = vmax.f32 %v1307, 0.0
  %v1372 = vmax.f32 %v1308, 0.0
  %v1373 = vmax.f32 %v1309, 0.0
  %v1374 = vpack.c.bf16 %v1311, %v1310
  %v1375 = vpack.c.bf16 %v1313, %v1312
  %v1376 = vpack.c.bf16 %v1315, %v1314
  %v1377 = vpack.c.bf16 %v1317, %v1316
  %v1378 = vpack.c.bf16 %v1319, %v1318
  %v1379 = vpack.c.bf16 %v1321, %v1320
  %v1380 = vpack.c.bf16 %v1323, %v1322
  %v1381 = vpack.c.bf16 %v1325, %v1324
  %v1382 = vpack.c.bf16 %v1327, %v1326
  %v1383 = vpack.c.bf16 %v1329, %v1328
  %v1384 = vpack.c.bf16 %v1331, %v1330
  %v1385 = vpack.c.bf16 %v1333, %v1332
  %v1386 = vpack.c.bf16 %v1335, %v1334
  %v1387 = vpack.c.bf16 %v1337, %v1336
  %v1388 = vpack.c.bf16 %v1339, %v1338
  %v1389 = vpack.c.bf16 %v1341, %v1340
  %v1390 = vpack.c.bf16 %v1343, %v1342
  %v1391 = vpack.c.bf16 %v1345, %v1344
  %v1392 = vpack.c.bf16 %v1347, %v1346
  %v1393 = vpack.c.bf16 %v1349, %v1348
  %v1394 = vpack.c.bf16 %v1351, %v1350
  %v1395 = vpack.c.bf16 %v1353, %v1352
  %v1396 = vpack.c.bf16 %v1355, %v1354
  %v1397 = vpack.c.bf16 %v1357, %v1356
  %v1398 = vpack.c.bf16 %v1359, %v1358
  %v1399 = vpack.c.bf16 %v1361, %v1360
  %v1400 = vpack.c.bf16 %v1363, %v1362
  %v1401 = vpack.c.bf16 %v1365, %v1364
  %v1402 = vpack.c.bf16 %v1367, %v1366
  %v1403 = vpack.c.bf16 %v1369, %v1368
  %v1404 = vpack.c.bf16 %v1371, %v1370
  %v1405 = vpack.c.bf16 %v1373, %v1372
  %v1438 = vunpack.c.l.b16 %v1374
  %v1439 = vunpack.c.h.b16 %v1374
  %v1440 = vunpack.c.l.b16 %v1375
  %v1441 = vunpack.c.h.b16 %v1375
  %v1442 = vunpack.c.l.b16 %v1376
  %v1443 = vunpack.c.h.b16 %v1376
  %v1444 = vunpack.c.l.b16 %v1377
  %v1445 = vunpack.c.h.b16 %v1377
  %v1446 = vunpack.c.l.b16 %v1378
  %v1447 = vunpack.c.h.b16 %v1378
  %v1448 = vunpack.c.l.b16 %v1379
  %v1449 = vunpack.c.h.b16 %v1379
  %v1450 = vunpack.c.l.b16 %v1380
  %v1451 = vunpack.c.h.b16 %v1380
  %v1452 = vunpack.c.l.b16 %v1381
  %v1453 = vunpack.c.h.b16 %v1381
  %v1454 = vunpack.c.l.b16 %v1382
  %v1455 = vunpack.c.h.b16 %v1382
  %v1456 = vunpack.c.l.b16 %v1383
  %v1457 = vunpack.c.h.b16 %v1383
  %v1458 = vunpack.c.l.b16 %v1384
  %v1459 = vunpack.c.h.b16 %v1384
  %v1460 = vunpack.c.l.b16 %v1385
  %v1461 = vunpack.c.h.b16 %v1385
  %v1462 = vunpack.c.l.b16 %v1386
  %v1463 = vunpack.c.h.b16 %v1386
  %v1464 = vunpack.c.l.b16 %v1387
  %v1465 = vunpack.c.h.b16 %v1387
  %v1466 = vunpack.c.l.b16 %v1388
  %v1467 = vunpack.c.h.b16 %v1388
  %v1468 = vunpack.c.l.b16 %v1389
  %v1469 = vunpack.c.h.b16 %v1389
  %v1470 = vunpack.c.l.b16 %v1390
  %v1471 = vunpack.c.h.b16 %v1390
  %v1472 = vunpack.c.l.b16 %v1391
  %v1473 = vunpack.c.h.b16 %v1391
  %v1474 = vunpack.c.l.b16 %v1392
  %v1475 = vunpack.c.h.b16 %v1392
  %v1476 = vunpack.c.l.b16 %v1393
  %v1477 = vunpack.c.h.b16 %v1393
  %v1478 = vunpack.c.l.b16 %v1394
  %v1479 = vunpack.c.h.b16 %v1394
  %v1480 = vunpack.c.l.b16 %v1395
  %v1481 = vunpack.c.h.b16 %v1395
  %v1482 = vunpack.c.l.b16 %v1396
  %v1483 = vunpack.c.h.b16 %v1396
  %v1484 = vunpack.c.l.b16 %v1397
  %v1485 = vunpack.c.h.b16 %v1397
  %v1486 = vunpack.c.l.b16 %v1398
  %v1487 = vunpack.c.h.b16 %v1398
  %v1488 = vunpack.c.l.b16 %v1399
  %v1489 = vunpack.c.h.b16 %v1399
  %v1490 = vunpack.c.l.b16 %v1400
  %v1491 = vunpack.c.h.b16 %v1400
  %v1492 = vunpack.c.l.b16 %v1401
  %v1493 = vunpack.c.h.b16 %v1401
  %v1494 = vunpack.c.l.b16 %v1402
  %v1495 = vunpack.c.h.b16 %v1402
  %v1496 = vunpack.c.l.b16 %v1403
  %v1497 = vunpack.c.h.b16 %v1403
  %v1498 = vunpack.c.l.b16 %v1404
  %v1499 = vunpack.c.h.b16 %v1404
  %v1500 = vunpack.c.l.b16 %v1405
  %v1501 = vunpack.c.h.b16 %v1405
  %v1502 = vpack.c.b16 %v1438, %v1438
  %v1503 = vpack.c.b16 %v1439, %v1439
  %v1504 = vpack.c.b16 %v1440, %v1440
  %v1505 = vpack.c.b16 %v1441, %v1441
  %v1506 = vpack.c.b16 %v1442, %v1442
  %v1507 = vpack.c.b16 %v1443, %v1443
  %v1508 = vpack.c.b16 %v1444, %v1444
  %v1509 = vpack.c.b16 %v1445, %v1445
  %v1510 = vpack.c.b16 %v1446, %v1446
  %v1511 = vpack.c.b16 %v1447, %v1447
  %v1512 = vpack.c.b16 %v1448, %v1448
  %v1513 = vpack.c.b16 %v1449, %v1449
  %v1514 = vpack.c.b16 %v1450, %v1450
  %v1515 = vpack.c.b16 %v1451, %v1451
  %v1516 = vpack.c.b16 %v1452, %v1452
  %v1517 = vpack.c.b16 %v1453, %v1453
  %v1518 = vpack.c.b16 %v1454, %v1454
  %v1519 = vpack.c.b16 %v1455, %v1455
  %v1520 = vpack.c.b16 %v1456, %v1456
  %v1521 = vpack.c.b16 %v1457, %v1457
  %v1522 = vpack.c.b16 %v1458, %v1458
  %v1523 = vpack.c.b16 %v1459, %v1459
  %v1524 = vpack.c.b16 %v1460, %v1460
  %v1525 = vpack.c.b16 %v1461, %v1461
  %v1526 = vpack.c.b16 %v1462, %v1462
  %v1527 = vpack.c.b16 %v1463, %v1463
  %v1528 = vpack.c.b16 %v1464, %v1464
  %v1529 = vpack.c.b16 %v1465, %v1465
  %v1530 = vpack.c.b16 %v1466, %v1466
  %v1531 = vpack.c.b16 %v1467, %v1467
  %v1532 = vpack.c.b16 %v1468, %v1468
  %v1533 = vpack.c.b16 %v1469, %v1469
  %v1534 = vpack.c.b16 %v1470, %v1470
  %v1535 = vpack.c.b16 %v1471, %v1471
  %v1536 = vpack.c.b16 %v1472, %v1472
  %v1537 = vpack.c.b16 %v1473, %v1473
  %v1538 = vpack.c.b16 %v1474, %v1474
  %v1539 = vpack.c.b16 %v1475, %v1475
  %v1540 = vpack.c.b16 %v1476, %v1476
  %v1541 = vpack.c.b16 %v1477, %v1477
  %v1542 = vpack.c.b16 %v1478, %v1478
  %v1543 = vpack.c.b16 %v1479, %v1479
  %v1544 = vpack.c.b16 %v1480, %v1480
  %v1545 = vpack.c.b16 %v1481, %v1481
  %v1546 = vpack.c.b16 %v1482, %v1482
  %v1547 = vpack.c.b16 %v1483, %v1483
  %v1548 = vpack.c.b16 %v1484, %v1484
  %v1549 = vpack.c.b16 %v1485, %v1485
  %v1550 = vpack.c.b16 %v1486, %v1486
  %v1551 = vpack.c.b16 %v1487, %v1487
  %v1552 = vpack.c.b16 %v1488, %v1488
  %v1553 = vpack.c.b16 %v1489, %v1489
  %v1554 = vpack.c.b16 %v1490, %v1490
  %v1555 = vpack.c.b16 %v1491, %v1491
  %v1556 = vpack.c.b16 %v1492, %v1492
  %v1557 = vpack.c.b16 %v1493, %v1493
  %v1558 = vpack.c.b16 %v1494, %v1494
  %v1559 = vpack.c.b16 %v1495, %v1495
  %v1560 = vpack.c.b16 %v1496, %v1496
  %v1561 = vpack.c.b16 %v1497, %v1497
  %v1562 = vpack.c.b16 %v1498, %v1498
  %v1563 = vpack.c.b16 %v1499, %v1499
  %v1564 = vpack.c.b16 %v1500, %v1500
  %v1565 = vpack.c.b16 %v1501, %v1501
  %1630 = vst [vmem:[%s5] sm:$0xf] %v1502
  %1631 = vst [vmem:[%s5 + $0x4] sm:$0xf] %v1503
  %1632 = vst [vmem:[%s5 + $0x8] sm:$0xf] %v1504
  %1633 = vst [vmem:[%s5 + $0xc] sm:$0xf] %v1505
  %1634 = vst [vmem:[%s5 + $0x10] sm:$0xf] %v1506
  %1635 = vst [vmem:[%s5 + $0x14] sm:$0xf] %v1507
  %1636 = vst [vmem:[%s5 + $0x18] sm:$0xf] %v1508
  %1637 = vst [vmem:[%s5 + $0x1c] sm:$0xf] %v1509
  %1638 = vst [vmem:[%s5 + $0x20] sm:$0xf] %v1510
  %1639 = vst [vmem:[%s5 + $0x24] sm:$0xf] %v1511
  %1640 = vst [vmem:[%s5 + $0x28] sm:$0xf] %v1512
  %1641 = vst [vmem:[%s5 + $0x2c] sm:$0xf] %v1513
  %1642 = vst [vmem:[%s5 + $0x30] sm:$0xf] %v1514
  %1643 = vst [vmem:[%s5 + $0x34] sm:$0xf] %v1515
  %1644 = vst [vmem:[%s5 + $0x38] sm:$0xf] %v1516
  %1645 = vst [vmem:[%s5 + $0x3c] sm:$0xf] %v1517
  %1646 = vst [vmem:[%s5 + $0x40] sm:$0xf] %v1518
  %1647 = vst [vmem:[%s5 + $0x44] sm:$0xf] %v1519
  %1648 = vst [vmem:[%s5 + $0x48] sm:$0xf] %v1520
  %1649 = vst [vmem:[%s5 + $0x4c] sm:$0xf] %v1521
  %1650 = vst [vmem:[%s5 + $0x50] sm:$0xf] %v1522
  %1651 = vst [vmem:[%s5 + $0x54] sm:$0xf] %v1523
  %1652 = vst [vmem:[%s5 + $0x58] sm:$0xf] %v1524
  %1653 = vst [vmem:[%s5 + $0x5c] sm:$0xf] %v1525
  %1654 = vst [vmem:[%s5 + $0x60] sm:$0xf] %v1526
  %1655 = vst [vmem:[%s5 + $0x64] sm:$0xf] %v1527
  %1656 = vst [vmem:[%s5 + $0x68] sm:$0xf] %v1528
  %1657 = vst [vmem:[%s5 + $0x6c] sm:$0xf] %v1529
  %1658 = vst [vmem:[%s5 + $0x70] sm:$0xf] %v1530
  %1659 = vst [vmem:[%s5 + $0x74] sm:$0xf] %v1531
  %1660 = vst [vmem:[%s5 + $0x78] sm:$0xf] %v1532
  %1661 = vst [vmem:[%s5 + $0x7c] sm:$0xf] %v1533
  %1662 = vst [vmem:[%s5 + $0x80] sm:$0xf] %v1534
  %1663 = vst [vmem:[%s5 + $0x84] sm:$0xf] %v1535
  %1664 = vst [vmem:[%s5 + $0x88] sm:$0xf] %v1536
  %1665 = vst [vmem:[%s5 + $0x8c] sm:$0xf] %v1537
  %1666 = vst [vmem:[%s5 + $0x90] sm:$0xf] %v1538
  %1667 = vst [vmem:[%s5 + $0x94] sm:$0xf] %v1539
  %1668 = vst [vmem:[%s5 + $0x98] sm:$0xf] %v1540
  %1669 = vst [vmem:[%s5 + $0x9c] sm:$0xf] %v1541
  %1670 = vst [vmem:[%s5 + $0xa0] sm:$0xf] %v1542
  %1671 = vst [vmem:[%s5 + $0xa4] sm:$0xf] %v1543
  %1672 = vst [vmem:[%s5 + $0xa8] sm:$0xf] %v1544
  %1673 = vst [vmem:[%s5 + $0xac] sm:$0xf] %v1545
  %1674 = vst [vmem:[%s5 + $0xb0] sm:$0xf] %v1546
  %1675 = vst [vmem:[%s5 + $0xb4] sm:$0xf] %v1547
  %1676 = vst [vmem:[%s5 + $0xb8] sm:$0xf] %v1548
  %1677 = vst [vmem:[%s5 + $0xbc] sm:$0xf] %v1549
  %1678 = vst [vmem:[%s5 + $0xc0] sm:$0xf] %v1550
  %1679 = vst [vmem:[%s5 + $0xc4] sm:$0xf] %v1551
  %1680 = vst [vmem:[%s5 + $0xc8] sm:$0xf] %v1552
  %1681 = vst [vmem:[%s5 + $0xcc] sm:$0xf] %v1553
  %1682 = vst [vmem:[%s5 + $0xd0] sm:$0xf] %v1554
  %1683 = vst [vmem:[%s5 + $0xd4] sm:$0xf] %v1555
  %1684 = vst [vmem:[%s5 + $0xd8] sm:$0xf] %v1556
  %1685 = vst [vmem:[%s5 + $0xdc] sm:$0xf] %v1557
  %1686 = vst [vmem:[%s5 + $0xe0] sm:$0xf] %v1558
  %1687 = vst [vmem:[%s5 + $0xe4] sm:$0xf] %v1559
  %1688 = vst [vmem:[%s5 + $0xe8] sm:$0xf] %v1560
  %1689 = vst [vmem:[%s5 + $0xec] sm:$0xf] %v1561
  %1690 = vst [vmem:[%s5 + $0xf0] sm:$0xf] %v1562
  %1691 = vst [vmem:[%s5 + $0xf4] sm:$0xf] %v1563
  %1692 = vst [vmem:[%s5 + $0xf8] sm:$0xf] %v1564
  %1693 = vst [vmem:[%s5 + $0xfc] sm:$0xf] %v1565
  // Predicated region
  $region22: #{bottleneck_forward.3} parent=0 // pred_check
    _
  $region23: #{bottleneck_forward.3} parent=0 // pred_check_branch
    %1695 = sbr.rel (0) target = $region25
  $region24: #{bottleneck_forward.3} parent=0 // pred_region
    _
  $region25: #{bottleneck_forward.3} parent=0 // pred_fallthru
    _
  // Predicated region
  $region26: #{bottleneck_forward.3} parent=0 // pred_check
    _
  $region27: #{bottleneck_forward.3} parent=0 // pred_check_branch
    %1697 = sbr.rel (0) target = $region29
  $region28: #{bottleneck_forward.3} parent=0 // pred_region
    _
  $region29: #{bottleneck_forward.3} parent=0 // pred_fallthru
    _

// kernel: bottleneck_forward.2
$region0: #{bottleneck_forward.2}
  #allocation0 [shape = 'u32[]', space=smem, size = 0x4, offset = 0x4, fixed_abs, tag = 'smem constant byte address 0x4 - core index']
  #allocation1 [shape = 'u32[144,128]{1,0:T(1,128)}', space=vmem, size = 0x12000, scoped, tag = 'internal scratch']
  #allocation2 [shape = 'bf16[18,16,384]{2,1,0:T(16,128)(2,1)}', space=vmem, size = 0x36000, scoped, tag = 'scratch operand']
  %s0 = inlined_call_operand.vmem [shape: bf16[2,16,16,128], index: 0, kind: input, shape index: {}]
  %s1 = inlined_call_operand.vmem [shape: bf16[128,128], index: 1, kind: input, shape index: {}]
  %s2 = inlined_call_operand.vmem [shape: f32[1,128], index: 2, kind: input, shape index: {}]
  %s3 = inlined_call_operand.vmem [shape: bf16[3,384,128], index: 3, kind: input, shape index: {}]
  %s4 = inlined_call_operand.vmem [shape: f32[1,128], index: 4, kind: input, shape index: {}]
  %s5 = inlined_call_operand.vmem [shape: bf16[512,128], index: 5, kind: output, shape index: {}]
  %s6 = sld [smem:[#allocation0]]
  $region53: #{bottleneck_forward.2} parent=0
    _
  %s8 = ssub.s32 1, %s6
  %s9 = scalar_select 0, %s8, %s6
  loop: start=0, step=1, limit=4
  $region2: #{bottleneck_forward.2} parent=0 // loop_pre_header
    _
  $region3: #{bottleneck_forward.2} parent=0 // loop_header
    %s11 = sphi 0, %s15
    %p12 = scmp.ge.s32.totalorder %s11, 4
    %s21 = sphi 0, %s23
    %s24 = sphi 0, %s21
    %s25 = sphi 0, %s24
    %s41 = sphi 0, %s25
    %s45 = sphi 0, %s45
    %s47 = sphi 0, %s45
    %s48 = sphi 0, %s47
    %s62 = sphi 0, %s48
    %s66 = sphi 0, %s66
    %s68 = sphi 0, %s66
    %s69 = sphi 0, %s68
    %s83 = sphi 0, %s69
    %s87 = sphi 0, %s87
    %s89 = sphi 0, %s87
    %s90 = sphi 0, %s89
    %s104 = sphi 0, %s90
    %s108 = sphi 0, %s108
    %s110 = sphi 0, %s108
    %s111 = sphi 0, %s110
    %s125 = sphi 0, %s111
    %s131 = sphi 0, %s133
    %s134 = sphi 0, %s131
    %s135 = sphi 0, %s134
    %s151 = sphi 0, %s135
  $region4: #{bottleneck_forward.2} parent=0 // loop_header_branch
    %14 = sbr.rel (%p12) target = $region8
  $region5: #{bottleneck_forward.2} parent=0 // loop_body
    %s16 = ssub.s32 %s11, 1
    %s17 = ssub.s32 %s11, 2
    %s18 = sadd.s32 %s11, 1
    %s19 = ssub.s32 %s11, %s18
    %p20 = scmp.eq.s32.totalorder %s19, 0
    %s22 = sadd.s32 %s21, 1
    %s23 = scalar_select %p20, %s21, %s22
    %p26 = pneg %p20
    %p27 = scmp.eq.s32.totalorder %s11, 1
    %p28 = por %p26, %p27
    %p29 = scmp.ne.s32.totalorder %s21, %s24
    %p30 = scmp.eq.s32.totalorder %s11, 0
    %p31 = por %p29, %p30
    %p32 = scmp.ne.s32.totalorder %s21, %s24
    %p33 = scmp.eq.s32.totalorder %s16, 1
    %p34 = por %p32, %p33
    %p35 = scmp.ne.s32.totalorder %s24, %s25
    %p36 = scmp.eq.s32.totalorder %s16, 0
    %p37 = por %p35, %p36
    %p38 = scmp.ne.s32.totalorder %s24, %s25
    %p39 = scmp.eq.s32.totalorder %s17, 1
    %p40 = por %p38, %p39
    %p42 = scmp.ne.s32.totalorder %s25, %s41
    %p43 = scmp.eq.s32.totalorder %s17, 0
    %p44 = por %p42, %p43
    %s46 = sadd.s32 %s45, 1
    %p49 = scmp.eq.s32.totalorder %s11, 1
    %p50 = scmp.ne.s32.totalorder %s45, %s47
    %p51 = scmp.eq.s32.totalorder %s11, 0
    %p52 = por %p50, %p51
    %p53 = scmp.ne.s32.totalorder %s45, %s47
    %p54 = scmp.eq.s32.totalorder %s16, 1
    %p55 = por %p53, %p54
    %p56 = scmp.ne.s32.totalorder %s47, %s48
    %p57 = scmp.eq.s32.totalorder %s16, 0
    %p58 = por %p56, %p57
    %p59 = scmp.ne.s32.totalorder %s47, %s48
    %p60 = scmp.eq.s32.totalorder %s17, 1
    %p61 = por %p59, %p60
    %p63 = scmp.ne.s32.totalorder %s48, %s62
    %p64 = scmp.eq.s32.totalorder %s17, 0
    %p65 = por %p63, %p64
    %s67 = sadd.s32 %s66, 1
    %p70 = scmp.eq.s32.totalorder %s11, 1
    %p71 = scmp.ne.s32.totalorder %s66, %s68
    %p72 = scmp.eq.s32.totalorder %s11, 0
    %p73 = por %p71, %p72
    %p74 = scmp.ne.s32.totalorder %s66, %s68
    %p75 = scmp.eq.s32.totalorder %s16, 1
    %p76 = por %p74, %p75
    %p77 = scmp.ne.s32.totalorder %s68, %s69
    %p78 = scmp.eq.s32.totalorder %s16, 0
    %p79 = por %p77, %p78
    %p80 = scmp.ne.s32.totalorder %s68, %s69
    %p81 = scmp.eq.s32.totalorder %s17, 1
    %p82 = por %p80, %p81
    %p84 = scmp.ne.s32.totalorder %s69, %s83
    %p85 = scmp.eq.s32.totalorder %s17, 0
    %p86 = por %p84, %p85
    %s88 = sadd.s32 %s87, 1
    %p91 = scmp.eq.s32.totalorder %s11, 1
    %p92 = scmp.ne.s32.totalorder %s87, %s89
    %p93 = scmp.eq.s32.totalorder %s11, 0
    %p94 = por %p92, %p93
    %p95 = scmp.ne.s32.totalorder %s87, %s89
    %p96 = scmp.eq.s32.totalorder %s16, 1
    %p97 = por %p95, %p96
    %p98 = scmp.ne.s32.totalorder %s89, %s90
    %p99 = scmp.eq.s32.totalorder %s16, 0
    %p100 = por %p98, %p99
    %p101 = scmp.ne.s32.totalorder %s89, %s90
    %p102 = scmp.eq.s32.totalorder %s17, 1
    %p103 = por %p101, %p102
    %p105 = scmp.ne.s32.totalorder %s90, %s104
    %p106 = scmp.eq.s32.totalorder %s17, 0
    %p107 = por %p105, %p106
    %s109 = sadd.s32 %s108, 1
    %p112 = scmp.eq.s32.totalorder %s11, 1
    %p113 = scmp.ne.s32.totalorder %s108, %s110
    %p114 = scmp.eq.s32.totalorder %s11, 0
    %p115 = por %p113, %p114
    %p116 = scmp.ne.s32.totalorder %s108, %s110
    %p117 = scmp.eq.s32.totalorder %s16, 1
    %p118 = por %p116, %p117
    %p119 = scmp.ne.s32.totalorder %s110, %s111
    %p120 = scmp.eq.s32.totalorder %s16, 0
    %p121 = por %p119, %p120
    %p122 = scmp.ne.s32.totalorder %s110, %s111
    %p123 = scmp.eq.s32.totalorder %s17, 1
    %p124 = por %p122, %p123
    %p126 = scmp.ne.s32.totalorder %s111, %s125
    %p127 = scmp.eq.s32.totalorder %s17, 0
    %p128 = por %p126, %p127
    %s129 = ssub.s32 %s11, %s18
    %p130 = scmp.eq.s32.totalorder %s129, 0
    %s132 = sadd.s32 %s131, 1
    %s133 = scalar_select %p130, %s131, %s132
    %p136 = pneg %p130
    %p137 = scmp.eq.s32.totalorder %s11, 1
    %p138 = por %p136, %p137
    %p139 = scmp.ne.s32.totalorder %s131, %s134
    %p140 = scmp.eq.s32.totalorder %s11, 0
    %p141 = por %p139, %p140
    %p142 = scmp.ne.s32.totalorder %s131, %s134
    %p143 = scmp.eq.s32.totalorder %s16, 1
    %p144 = por %p142, %p143
    %p145 = scmp.ne.s32.totalorder %s134, %s135
    %p146 = scmp.eq.s32.totalorder %s16, 0
    %p147 = por %p145, %p146
    %p148 = scmp.ne.s32.totalorder %s134, %s135
    %p149 = scmp.eq.s32.totalorder %s17, 1
    %p150 = por %p148, %p149
    %p152 = scmp.ne.s32.totalorder %s135, %s151
    %p153 = scmp.eq.s32.totalorder %s17, 0
    %p154 = por %p152, %p153
    %p155 = scmp.le.s32.totalorder 1, %s11
    %p156 = scmp.lt.s32.totalorder %s11, 3
    %p157 = pnand %p155, %p156
    %p158 = pneg %p157
    // Predicated region
    $region9: #{bottleneck_forward.2} parent=5 // pred_check
      _
    $region10: #{bottleneck_forward.2} parent=5 // pred_check_branch
      %160 = sbr.rel (%p157) target = $region12
    $region11: #{bottleneck_forward.2} parent=5 // pred_region
      %s161 = ssub.s32 %s11, 1
      // Predicated region
      $region13: #{bottleneck_forward.2} parent=11 // pred_check
        %p162 = pneg %p58
      $region14: #{bottleneck_forward.2} parent=11 // pred_check_branch
        %164 = sbr.rel (%p162) target = $region16
      $region15: #{bottleneck_forward.2} parent=11 // pred_region
        _
      $region16: #{bottleneck_forward.2} parent=11 // pred_fallthru
        _
      // Predicated region
      $region17: #{bottleneck_forward.2} parent=11 // pred_check
        %p165 = pneg %p79
      $region18: #{bottleneck_forward.2} parent=11 // pred_check_branch
        %167 = sbr.rel (%p165) target = $region20
      $region19: #{bottleneck_forward.2} parent=11 // pred_region
        _
      $region20: #{bottleneck_forward.2} parent=11 // pred_fallthru
        _
      // Predicated region
      $region21: #{bottleneck_forward.2} parent=11 // pred_check
        %p168 = pneg %p100
      $region22: #{bottleneck_forward.2} parent=11 // pred_check_branch
        %170 = sbr.rel (%p168) target = $region24
      $region23: #{bottleneck_forward.2} parent=11 // pred_region
        _
      $region24: #{bottleneck_forward.2} parent=11 // pred_fallthru
        _
      // Predicated region
      $region25: #{bottleneck_forward.2} parent=11 // pred_check
        %p171 = pneg %p121
      $region26: #{bottleneck_forward.2} parent=11 // pred_check_branch
        %173 = sbr.rel (%p171) target = $region28
      $region27: #{bottleneck_forward.2} parent=11 // pred_region
        _
      $region28: #{bottleneck_forward.2} parent=11 // pred_fallthru
        _
    $region12: #{bottleneck_forward.2} parent=5 // pred_fallthru
      _
    %p174 = scmp.lt.s32.totalorder %s11, 2
    // Predicated region
    $region29: #{bottleneck_forward.2} parent=5 // pred_check
      %p175 = pneg %p174
    $region30: #{bottleneck_forward.2} parent=5 // pred_check_branch
      %177 = sbr.rel (%p175) target = $region32
    $region31: #{bottleneck_forward.2} parent=5 // pred_region
      // Predicated region
      $region33: #{bottleneck_forward.2} parent=31 // pred_check
        %p178 = pneg %p31
      $region34: #{bottleneck_forward.2} parent=31 // pred_check_branch
        %180 = sbr.rel (%p178) target = $region36
      $region35: #{bottleneck_forward.2} parent=31 // pred_region
        %p181 = scmp.lt.s32.totalorder %s11, 1
        %s182 = scalar_select %p181, %s11, 1
        %s183 = smul.addr %s182, 32
        %s184 = smul.addr %s183, 4
        %s185 = scalar_lea.vmem %s0, %s184
      $region36: #{bottleneck_forward.2} parent=31 // pred_fallthru
        _
    $region32: #{bottleneck_forward.2} parent=5 // pred_fallthru
      _
    %p186 = scmp.le.s32.totalorder 1, %s11
    %p187 = scmp.lt.s32.totalorder %s11, 3
    %p188 = pnand %p186, %p187
    %p189 = pneg %p188
    // Predicated region
    $region37: #{bottleneck_forward.2} parent=5 // pred_check
      _
    $region38: #{bottleneck_forward.2} parent=5 // pred_check_branch
      %191 = sbr.rel (%p188) target = $region40
    $region39: #{bottleneck_forward.2} parent=5 // pred_region
      %s192 = ssub.s32 %s11, 1
      %p193 = scmp.lt.s32.totalorder %s16, 1
      %s194 = scalar_select %p193, %s16, 1
      %s195 = smul.addr %s194, 32
      %s196 = smul.addr %s195, 4
      %s197 = scalar_lea.vmem %s0, %s196
      %p198 = pneg %p37
      %p199 = pneg %p34
      %p200 = pneg %p58
      %p201 = pneg %p55
      %p202 = pneg %p79
      %p203 = pneg %p76
      %p204 = pneg %p100
      %p205 = pneg %p97
      %p206 = pneg %p121
      %p207 = pneg %p118
      %p208 = pneg %p147
      %p209 = pneg %p144
      %s210 = smul.u32 32, %s16
      %p211 = scmp.lt.s32.totalorder %s210, 63
      %s212 = scalar_select %p211, %s210, 63
      %s213 = smul.addr %s212, 4
      %s214 = scalar_lea.vmem %s5, %s213
      %p215 = scmp.lt.s32.totalorder %s16, 1
      %s216 = scalar_select %p215, %s16, 1
      %s217 = smul.addr %s216, 32
      %s218 = smul.addr %s217, 4
      %s219 = scalar_lea.vmem %s0, %s218
      %s220 = smul.u32 32, %s16
      %p221 = scmp.lt.s32.totalorder %s220, 63
      %s222 = scalar_select %p221, %s220, 63
      %s223 = smul.addr %s222, 4
      %s224 = scalar_lea.vmem %s5, %s223
      %s225 = smul.u32 32, %s16
      %v227 = vld [vmem:[%s219] sm:$0xf]
      %v228 = vld [vmem:[%s219 + $0x4] sm:$0xf]
      %v229 = vld [vmem:[%s219 + $0x8] sm:$0xf]
      %v230 = vld [vmem:[%s219 + $0xc] sm:$0xf]
      %v231 = vld [vmem:[%s219 + $0x10] sm:$0xf]
      %v232 = vld [vmem:[%s219 + $0x14] sm:$0xf]
      %v233 = vld [vmem:[%s219 + $0x18] sm:$0xf]
      %v234 = vld [vmem:[%s219 + $0x1c] sm:$0xf]
      %v235 = vld [vmem:[%s219 + $0x20] sm:$0xf]
      %v236 = vld [vmem:[%s219 + $0x24] sm:$0xf]
      %v237 = vld [vmem:[%s219 + $0x28] sm:$0xf]
      %v238 = vld [vmem:[%s219 + $0x2c] sm:$0xf]
      %v239 = vld [vmem:[%s219 + $0x30] sm:$0xf]
      %v240 = vld [vmem:[%s219 + $0x34] sm:$0xf]
      %v241 = vld [vmem:[%s219 + $0x38] sm:$0xf]
      %v242 = vld [vmem:[%s219 + $0x3c] sm:$0xf]
      %v243 = vld [vmem:[%s219 + $0x40] sm:$0xf]
      %v244 = vld [vmem:[%s219 + $0x44] sm:$0xf]
      %v245 = vld [vmem:[%s219 + $0x48] sm:$0xf]
      %v246 = vld [vmem:[%s219 + $0x4c] sm:$0xf]
      %v247 = vld [vmem:[%s219 + $0x50] sm:$0xf]
      %v248 = vld [vmem:[%s219 + $0x54] sm:$0xf]
      %v249 = vld [vmem:[%s219 + $0x58] sm:$0xf]
      %v250 = vld [vmem:[%s219 + $0x5c] sm:$0xf]
      %v251 = vld [vmem:[%s219 + $0x60] sm:$0xf]
      %v252 = vld [vmem:[%s219 + $0x64] sm:$0xf]
      %v253 = vld [vmem:[%s219 + $0x68] sm:$0xf]
      %v254 = vld [vmem:[%s219 + $0x6c] sm:$0xf]
      %v255 = vld [vmem:[%s219 + $0x70] sm:$0xf]
      %v256 = vld [vmem:[%s219 + $0x74] sm:$0xf]
      %v257 = vld [vmem:[%s219 + $0x78] sm:$0xf]
      %v258 = vld [vmem:[%s219 + $0x7c] sm:$0xf]
      %v259 = vld [vmem:[%s1] sm:$0xf]
      %v260 = vld [vmem:[%s1 + $0x4] sm:$0xf]
      %v261 = vld [vmem:[%s1 + $0x8] sm:$0xf]
      %v262 = vld [vmem:[%s1 + $0xc] sm:$0xf]
      %v263 = vld [vmem:[%s1 + $0x10] sm:$0xf]
      %v264 = vld [vmem:[%s1 + $0x14] sm:$0xf]
      %v265 = vld [vmem:[%s1 + $0x18] sm:$0xf]
      %v266 = vld [vmem:[%s1 + $0x1c] sm:$0xf]
      %v267 = vld [vmem:[%s1 + $0x20] sm:$0xf]
      %v268 = vld [vmem:[%s1 + $0x24] sm:$0xf]
      %v269 = vld [vmem:[%s1 + $0x28] sm:$0xf]
      %v270 = vld [vmem:[%s1 + $0x2c] sm:$0xf]
      %v271 = vld [vmem:[%s1 + $0x30] sm:$0xf]
      %v272 = vld [vmem:[%s1 + $0x34] sm:$0xf]
      %v273 = vld [vmem:[%s1 + $0x38] sm:$0xf]
      %v274 = vld [vmem:[%s1 + $0x3c] sm:$0xf]
      %v275 = vld [vmem:[%s2] sm:$0x1]
      %v277 = vlaneseq
      %v278 = vshrl.u32 %v277, 7
      %v279 = vsub.s32 0, %v278
      %v280 = vrot.slane %v275, %v279
      %v314 = vunpack.c.l.b16 %v227
      %v315 = vunpack.c.l.b16 %v228
      %v316 = vunpack.c.l.b16 %v229
      %v317 = vunpack.c.l.b16 %v230
      %v318 = vunpack.c.l.b16 %v231
      %v319 = vunpack.c.l.b16 %v232
      %v320 = vunpack.c.l.b16 %v233
      %v321 = vunpack.c.l.b16 %v234
      %v322 = vunpack.c.l.b16 %v235
      %v323 = vunpack.c.l.b16 %v236
      %v324 = vunpack.c.l.b16 %v237
      %v325 = vunpack.c.l.b16 %v238
      %v326 = vunpack.c.l.b16 %v239
      %v327 = vunpack.c.l.b16 %v240
      %v328 = vunpack.c.l.b16 %v241
      %v329 = vunpack.c.l.b16 %v242
      %v330 = vunpack.c.l.b16 %v243
      %v331 = vunpack.c.l.b16 %v244
      %v332 = vunpack.c.l.b16 %v245
      %v333 = vunpack.c.l.b16 %v246
      %v334 = vunpack.c.l.b16 %v247
      %v335 = vunpack.c.l.b16 %v248
      %v336 = vunpack.c.l.b16 %v249
      %v337 = vunpack.c.l.b16 %v250
      %v338 = vunpack.c.l.b16 %v251
      %v339 = vunpack.c.l.b16 %v252
      %v340 = vunpack.c.l.b16 %v253
      %v341 = vunpack.c.l.b16 %v254
      %v342 = vunpack.c.l.b16 %v255
      %v343 = vunpack.c.l.b16 %v256
      %v344 = vunpack.c.l.b16 %v257
      %v345 = vunpack.c.l.b16 %v258
      %v346 = vpack.c.b16 %v315, %v314
      %v347 = vpack.c.b16 %v317, %v316
      %v348 = vpack.c.b16 %v319, %v318
      %v349 = vpack.c.b16 %v321, %v320
      %v350 = vpack.c.b16 %v323, %v322
      %v351 = vpack.c.b16 %v325, %v324
      %v352 = vpack.c.b16 %v327, %v326
      %v353 = vpack.c.b16 %v329, %v328
      %v354 = vpack.c.b16 %v331, %v330
      %v355 = vpack.c.b16 %v333, %v332
      %v356 = vpack.c.b16 %v335, %v334
      %v357 = vpack.c.b16 %v337, %v336
      %v358 = vpack.c.b16 %v339, %v338
      %v359 = vpack.c.b16 %v341, %v340
      %v360 = vpack.c.b16 %v343, %v342
      %v361 = vpack.c.b16 %v345, %v344
      %v394 = vunpack.c.l.b16 %v259
      %v395 = vunpack.c.l.b16 %v260
      %v396 = vunpack.c.l.b16 %v261
      %v397 = vunpack.c.l.b16 %v262
      %v398 = vunpack.c.l.b16 %v263
      %v399 = vunpack.c.l.b16 %v264
      %v400 = vunpack.c.l.b16 %v265
      %v401 = vunpack.c.l.b16 %v266
      %v402 = vunpack.c.l.b16 %v267
      %v403 = vunpack.c.l.b16 %v268
      %v404 = vunpack.c.l.b16 %v269
      %v405 = vunpack.c.l.b16 %v270
      %v406 = vunpack.c.l.b16 %v271
      %v407 = vunpack.c.l.b16 %v272
      %v408 = vunpack.c.l.b16 %v273
      %v409 = vunpack.c.l.b16 %v274
      %v410 = vpack.c.b16 %v395, %v394
      %v411 = vpack.c.b16 %v397, %v396
      %v412 = vpack.c.b16 %v399, %v398
      %v413 = vpack.c.b16 %v401, %v400
      %v414 = vpack.c.b16 %v403, %v402
      %v415 = vpack.c.b16 %v405, %v404
      %v416 = vpack.c.b16 %v407, %v406
      %v417 = vpack.c.b16 %v409, %v408
      %426 = vmatprep.subr.bf16.mxu0 0
      %427 = vmatpush1.bf16.msra.mxu0 %v410
      %428 = vmatprep.subr.bf16.mxu0 0
      %429 = vmatpush1.bf16.msra.mxu0 %v411
      %430 = vmatprep.subr.bf16.mxu0 0
      %431 = vmatpush1.bf16.msra.mxu0 %v412
      %432 = vmatprep.subr.bf16.mxu0 0
      %433 = vmatpush1.bf16.msra.mxu0 %v413
      %434 = vmatprep.subr.bf16.mxu0 0
      %435 = vmatpush1.bf16.msra.mxu0 %v414
      %436 = vmatprep.subr.bf16.mxu0 0
      %437 = vmatpush1.bf16.msra.mxu0 %v415
      %438 = vmatprep.subr.bf16.mxu0 0
      %439 = vmatpush1.bf16.msra.mxu0 %v416
      %440 = vmatprep.subr.bf16.mxu0 0
      %441 = vmatpush1.bf16.msra.mxu0 %v417
      %442 = vmatprep.subr.bf16.mxu0 0
      %443 = vmatpush1.bf16.msra.mxu0 0
      %444 = vmatprep.subr.bf16.mxu0 0
      %445 = vmatpush1.bf16.msra.mxu0 0
      %446 = vmatprep.subr.bf16.mxu0 0
      %447 = vmatpush1.bf16.msra.mxu0 0
      %448 = vmatprep.subr.bf16.mxu0 0
      %449 = vmatpush1.bf16.msra.mxu0 0
      %450 = vmatprep.subr.bf16.mxu0 0
      %451 = vmatpush1.bf16.msra.mxu0 0
      %452 = vmatprep.subr.bf16.mxu0 0
      %453 = vmatpush1.bf16.msra.mxu0 0
      %454 = vmatprep.subr.bf16.mxu0 0
      %455 = vmatpush1.bf16.msra.mxu0 0
      %456 = vmatprep.subr.bf16.mxu0 0
      %457 = vmatpush1.bf16.msra.mxu0 0
      %458 = vmatprep.mubr.bf16.mxu0 0
      %459 = vmatmul.mubr.bf16.gmra.mrb[0].mxu0 %v346
      %v460 = vpop.f32.mrb[0].mxu0
      %v461 = vadd.f32 %v280, %v460
      %v462 = vpop.f32.mrb[0].mxu0
      %v463 = vpop.f32.mrb[0].mxu0
      %v464 = vadd.f32 %v280, %v463
      %v465 = vpop.f32.mrb[0].mxu0
      %466 = vmatprep.mubr.bf16.mxu0 0
      %467 = vmatmul.mubr.bf16.gmra.mrb[0].mxu0 %v347
      %v468 = vpop.f32.mrb[0].mxu0
      %v469 = vadd.f32 %v280, %v468
      %v470 = vpop.f32.mrb[0].mxu0
      %v471 = vpop.f32.mrb[0].mxu0
      %v472 = vadd.f32 %v280, %v471
      %v473 = vpop.f32.mrb[0].mxu0
      %474 = vmatprep.mubr.bf16.mxu0 0
      %475 = vmatmul.mubr.bf16.gmra.mrb[0].mxu0 %v348
      %v476 = vpop.f32.mrb[0].mxu0
      %v477 = vadd.f32 %v280, %v476
      %v478 = vpop.f32.mrb[0].mxu0
      %v479 = vpop.f32.mrb[0].mxu0
      %v480 = vadd.f32 %v280, %v479
      %v481 = vpop.f32.mrb[0].mxu0
      %482 = vmatprep.mubr.bf16.mxu0 0
      %483 = vmatmul.mubr.bf16.gmra.mrb[0].mxu0 %v349
      %v484 = vpop.f32.mrb[0].mxu0
      %v485 = vadd.f32 %v280, %v484
      %v486 = vpop.f32.mrb[0].mxu0
      %v487 = vpop.f32.mrb[0].mxu0
      %v488 = vadd.f32 %v280, %v487
      %v489 = vpop.f32.mrb[0].mxu0
      %490 = vmatprep.mubr.bf16.mxu0 0
      %491 = vmatmul.mubr.bf16.gmra.mrb[0].mxu0 %v350
      %v492 = vpop.f32.mrb[0].mxu0
      %v493 = vadd.f32 %v280, %v492
      %v494 = vpop.f32.mrb[0].mxu0
      %v495 = vpop.f32.mrb[0].mxu0
      %v496 = vadd.f32 %v280, %v495
      %v497 = vpop.f32.mrb[0].mxu0
      %498 = vmatprep.mubr.bf16.mxu0 0
      %499 = vmatmul.mubr.bf16.gmra.mrb[0].mxu0 %v351
      %v500 = vpop.f32.mrb[0].mxu0
      %v501 = vadd.f32 %v280, %v500
      %v502 = vpop.f32.mrb[0].mxu0
      %v503 = vpop.f32.mrb[0].mxu0
      %v504 = vadd.f32 %v280, %v503
      %v505 = vpop.f32.mrb[0].mxu0
      %506 = vmatprep.mubr.bf16.mxu0 0
      %507 = vmatmul.mubr.bf16.gmra.mrb[0].mxu0 %v352
      %v508 = vpop.f32.mrb[0].mxu0
      %v509 = vadd.f32 %v280, %v508
      %v510 = vpop.f32.mrb[0].mxu0
      %v511 = vpop.f32.mrb[0].mxu0
      %v512 = vadd.f32 %v280, %v511
      %v513 = vpop.f32.mrb[0].mxu0
      %514 = vmatprep.mubr.bf16.mxu0 0
      %515 = vmatmul.mubr.bf16.gmra.mrb[0].mxu0 %v353
      %v516 = vpop.f32.mrb[0].mxu0
      %v517 = vadd.f32 %v280, %v516
      %v518 = vpop.f32.mrb[0].mxu0
      %v519 = vpop.f32.mrb[0].mxu0
      %v520 = vadd.f32 %v280, %v519
      %v521 = vpop.f32.mrb[0].mxu0
      %522 = vmatprep.mubr.bf16.mxu0 0
      %523 = vmatmul.mubr.bf16.gmra.mrb[0].mxu0 %v354
      %v524 = vpop.f32.mrb[0].mxu0
      %v525 = vadd.f32 %v280, %v524
      %v526 = vpop.f32.mrb[0].mxu0
      %v527 = vpop.f32.mrb[0].mxu0
      %v528 = vadd.f32 %v280, %v527
      %v529 = vpop.f32.mrb[0].mxu0
      %530 = vmatprep.mubr.bf16.mxu0 0
      %531 = vmatmul.mubr.bf16.gmra.mrb[0].mxu0 %v355
      %v532 = vpop.f32.mrb[0].mxu0
      %v533 = vadd.f32 %v280, %v532
      %v534 = vpop.f32.mrb[0].mxu0
      %v535 = vpop.f32.mrb[0].mxu0
      %v536 = vadd.f32 %v280, %v535
      %v537 = vpop.f32.mrb[0].mxu0
      %538 = vmatprep.mubr.bf16.mxu0 0
      %539 = vmatmul.mubr.bf16.gmra.mrb[0].mxu0 %v356
      %v540 = vpop.f32.mrb[0].mxu0
      %v541 = vadd.f32 %v280, %v540
      %v542 = vpop.f32.mrb[0].mxu0
      %v543 = vpop.f32.mrb[0].mxu0
      %v544 = vadd.f32 %v280, %v543
      %v545 = vpop.f32.mrb[0].mxu0
      %546 = vmatprep.mubr.bf16.mxu0 0
      %547 = vmatmul.mubr.bf16.gmra.mrb[0].mxu0 %v357
      %v548 = vpop.f32.mrb[0].mxu0
      %v549 = vadd.f32 %v280, %v548
      %v550 = vpop.f32.mrb[0].mxu0
      %v551 = vpop.f32.mrb[0].mxu0
      %v552 = vadd.f32 %v280, %v551
      %v553 = vpop.f32.mrb[0].mxu0
      %554 = vmatprep.mubr.bf16.mxu0 0
      %555 = vmatmul.mubr.bf16.gmra.mrb[0].mxu0 %v358
      %v556 = vpop.f32.mrb[0].mxu0
      %v557 = vadd.f32 %v280, %v556
      %v558 = vpop.f32.mrb[0].mxu0
      %v559 = vpop.f32.mrb[0].mxu0
      %v560 = vadd.f32 %v280, %v559
      %v561 = vpop.f32.mrb[0].mxu0
      %562 = vmatprep.mubr.bf16.mxu0 0
      %563 = vmatmul.mubr.bf16.gmra.mrb[0].mxu0 %v359
      %v564 = vpop.f32.mrb[0].mxu0
      %v565 = vadd.f32 %v280, %v564
      %v566 = vpop.f32.mrb[0].mxu0
      %v567 = vpop.f32.mrb[0].mxu0
      %v568 = vadd.f32 %v280, %v567
      %v569 = vpop.f32.mrb[0].mxu0
      %570 = vmatprep.mubr.bf16.mxu0 0
      %571 = vmatmul.mubr.bf16.gmra.mrb[0].mxu0 %v360
      %v572 = vpop.f32.mrb[0].mxu0
      %v573 = vadd.f32 %v280, %v572
      %v574 = vpop.f32.mrb[0].mxu0
      %v575 = vpop.f32.mrb[0].mxu0
      %v576 = vadd.f32 %v280, %v575
      %v577 = vpop.f32.mrb[0].mxu0
      %578 = vmatprep.mubr.bf16.mxu0 0
      %579 = vmatmul.mubr.bf16.gmra.mrb[0].mxu0 %v361
      %v580 = vpop.f32.mrb[0].mxu0
      %v581 = vadd.f32 %v280, %v580
      %v582 = vpop.f32.mrb[0].mxu0
      %v583 = vpop.f32.mrb[0].mxu0
      %v584 = vadd.f32 %v280, %v583
      %v585 = vpop.f32.mrb[0].mxu0
      %586 = vdwg.mxu0
      %v587 = vmax.f32 %v461, 0.0
      %v588 = vmax.f32 %v464, 0.0
      %v589 = vmax.f32 %v469, 0.0
      %v590 = vmax.f32 %v472, 0.0
      %v591 = vmax.f32 %v477, 0.0
      %v592 = vmax.f32 %v480, 0.0
      %v593 = vmax.f32 %v485, 0.0
      %v594 = vmax.f32 %v488, 0.0
      %v595 = vmax.f32 %v493, 0.0
      %v596 = vmax.f32 %v496, 0.0
      %v597 = vmax.f32 %v501, 0.0
      %v598 = vmax.f32 %v504, 0.0
      %v599 = vmax.f32 %v509, 0.0
      %v600 = vmax.f32 %v512, 0.0
      %v601 = vmax.f32 %v517, 0.0
      %v602 = vmax.f32 %v520, 0.0
      %v603 = vmax.f32 %v525, 0.0
      %v604 = vmax.f32 %v528, 0.0
      %v605 = vmax.f32 %v533, 0.0
      %v606 = vmax.f32 %v536, 0.0
      %v607 = vmax.f32 %v541, 0.0
      %v608 = vmax.f32 %v544, 0.0
      %v609 = vmax.f32 %v549, 0.0
      %v610 = vmax.f32 %v552, 0.0
      %v611 = vmax.f32 %v557, 0.0
      %v612 = vmax.f32 %v560, 0.0
      %v613 = vmax.f32 %v565, 0.0
      %v614 = vmax.f32 %v568, 0.0
      %v615 = vmax.f32 %v573, 0.0
      %v616 = vmax.f32 %v576, 0.0
      %v617 = vmax.f32 %v581, 0.0
      %v618 = vmax.f32 %v584, 0.0
      %vm651 = vcmask 1040384
      %v652 = vrot.slane %v587, 7
      %v653 = vrot.slane %v588, 7
      %v654 = vsel %vm651, %v652, %v653
      %v655 = vrot.slane %v589, 7
      %v656 = vrot.slane %v590, 7
      %v657 = vsel %vm651, %v655, %v656
      %v658 = vrot.slane %v591, 7
      %v659 = vrot.slane %v592, 7
      %v660 = vsel %vm651, %v658, %v659
      %v661 = vrot.slane %v593, 7
      %v662 = vrot.slane %v594, 7
      %v663 = vsel %vm651, %v661, %v662
      %v664 = vrot.slane %v595, 7
      %v665 = vrot.slane %v596, 7
      %v666 = vsel %vm651, %v664, %v665
      %v667 = vrot.slane %v597, 7
      %v668 = vrot.slane %v598, 7
      %v669 = vsel %vm651, %v667, %v668
      %v670 = vrot.slane %v599, 7
      %v671 = vrot.slane %v600, 7
      %v672 = vsel %vm651, %v670, %v671
      %v673 = vrot.slane %v601, 7
      %v674 = vrot.slane %v602, 7
      %v675 = vsel %vm651, %v673, %v674
      %v676 = vrot.slane %v603, 7
      %v677 = vrot.slane %v604, 7
      %v678 = vsel %vm651, %v676, %v677
      %v679 = vrot.slane %v605, 7
      %v680 = vrot.slane %v606, 7
      %v681 = vsel %vm651, %v679, %v680
      %v682 = vrot.slane %v607, 7
      %v683 = vrot.slane %v608, 7
      %v684 = vsel %vm651, %v682, %v683
      %v685 = vrot.slane %v609, 7
      %v686 = vrot.slane %v610, 7
      %v687 = vsel %vm651, %v685, %v686
      %v688 = vrot.slane %v611, 7
      %v689 = vrot.slane %v612, 7
      %v690 = vsel %vm651, %v688, %v689
      %v691 = vrot.slane %v613, 7
      %v692 = vrot.slane %v614, 7
      %v693 = vsel %vm651, %v691, %v692
      %v694 = vrot.slane %v615, 7
      %v695 = vrot.slane %v616, 7
      %v696 = vsel %vm651, %v694, %v695
      %v697 = vrot.slane %v617, 7
      %v698 = vrot.slane %v618, 7
      %v699 = vsel %vm651, %v697, %v698
      %v732 = vsel %vm651, 0.0, %v652
      %v733 = vsel %vm651, 0.0, %v655
      %v734 = vsel %vm651, 0.0, %v658
      %v735 = vsel %vm651, 0.0, %v661
      %v736 = vsel %vm651, 0.0, %v664
      %v737 = vsel %vm651, 0.0, %v667
      %v738 = vsel %vm651, 0.0, %v670
      %v739 = vsel %vm651, 0.0, %v673
      %v740 = vsel %vm651, 0.0, %v676
      %v741 = vsel %vm651, 0.0, %v679
      %v742 = vsel %vm651, 0.0, %v682
      %v743 = vsel %vm651, 0.0, %v685
      %v744 = vsel %vm651, 0.0, %v688
      %v745 = vsel %vm651, 0.0, %v691
      %v746 = vsel %vm651, 0.0, %v694
      %v747 = vsel %vm651, 0.0, %v697
      %vm748 = vcmask 1046528
      %v749 = vrot.slane %v587, 1
      %v750 = vrot.slane %v588, 1
      %v751 = vsel %vm748, %v749, %v750
      %v752 = vrot.slane %v589, 1
      %v753 = vrot.slane %v590, 1
      %v754 = vsel %vm748, %v752, %v753
      %v755 = vrot.slane %v591, 1
      %v756 = vrot.slane %v592, 1
      %v757 = vsel %vm748, %v755, %v756
      %v758 = vrot.slane %v593, 1
      %v759 = vrot.slane %v594, 1
      %v760 = vsel %vm748, %v758, %v759
      %v761 = vrot.slane %v595, 1
      %v762 = vrot.slane %v596, 1
      %v763 = vsel %vm748, %v761, %v762
      %v764 = vrot.slane %v597, 1
      %v765 = vrot.slane %v598, 1
      %v766 = vsel %vm748, %v764, %v765
      %v767 = vrot.slane %v599, 1
      %v768 = vrot.slane %v600, 1
      %v769 = vsel %vm748, %v767, %v768
      %v770 = vrot.slane %v601, 1
      %v771 = vrot.slane %v602, 1
      %v772 = vsel %vm748, %v770, %v771
      %v773 = vrot.slane %v603, 1
      %v774 = vrot.slane %v604, 1
      %v775 = vsel %vm748, %v773, %v774
      %v776 = vrot.slane %v605, 1
      %v777 = vrot.slane %v606, 1
      %v778 = vsel %vm748, %v776, %v777
      %v779 = vrot.slane %v607, 1
      %v780 = vrot.slane %v608, 1
      %v781 = vsel %vm748, %v779, %v780
      %v782 = vrot.slane %v609, 1
      %v783 = vrot.slane %v610, 1
      %v784 = vsel %vm748, %v782, %v783
      %v785 = vrot.slane %v611, 1
      %v786 = vrot.slane %v612, 1
      %v787 = vsel %vm748, %v785, %v786
      %v788 = vrot.slane %v613, 1
      %v789 = vrot.slane %v614, 1
      %v790 = vsel %vm748, %v788, %v789
      %v791 = vrot.slane %v615, 1
      %v792 = vrot.slane %v616, 1
      %v793 = vsel %vm748, %v791, %v792
      %v794 = vrot.slane %v617, 1
      %v795 = vrot.slane %v618, 1
      %v796 = vsel %vm748, %v794, %v795
      %v829 = vsel %vm748, %v750, 0.0
      %v830 = vsel %vm748, %v753, 0.0
      %v831 = vsel %vm748, %v756, 0.0
      %v832 = vsel %vm748, %v759, 0.0
      %v833 = vsel %vm748, %v762, 0.0
      %v834 = vsel %vm748, %v765, 0.0
      %v835 = vsel %vm748, %v768, 0.0
      %v836 = vsel %vm748, %v771, 0.0
      %v837 = vsel %vm748, %v774, 0.0
      %v838 = vsel %vm748, %v777, 0.0
      %v839 = vsel %vm748, %v780, 0.0
      %v840 = vsel %vm748, %v783, 0.0
      %v841 = vsel %vm748, %v786, 0.0
      %v842 = vsel %vm748, %v789, 0.0
      %v843 = vsel %vm748, %v792, 0.0
      %v844 = vsel %vm748, %v795, 0.0
      %845 = vst [vmem:[#allocation2] sm:$0xff] 0
      %846 = vst [vmem:[#allocation2 + $0x8] sm:$0xff] 0
      %847 = vst [vmem:[#allocation2 + $0x10] sm:$0xff] 0
      %s848 = scalar_lea.vmem [#allocation2], 408
      %849 = vst [vmem:[%s848] sm:$0xff] 0
      %850 = vst [vmem:[%s848 + $0x8] sm:$0xff] 0
      %851 = vst [vmem:[%s848 + $0x10] sm:$0xff] 0
      %v852 = vpack.c.bf16 %v654, %v732
      %v853 = vpack.c.bf16 %v657, %v733
      %v854 = vpack.c.bf16 %v660, %v734
      %v855 = vpack.c.bf16 %v663, %v735
      %v856 = vpack.c.bf16 %v666, %v736
      %v857 = vpack.c.bf16 %v669, %v737
      %v858 = vpack.c.bf16 %v672, %v738
      %v859 = vpack.c.bf16 %v675, %v739
      %v860 = vpack.c.bf16 %v678, %v740
      %v861 = vpack.c.bf16 %v681, %v741
      %v862 = vpack.c.bf16 %v684, %v742
      %v863 = vpack.c.bf16 %v687, %v743
      %v864 = vpack.c.bf16 %v690, %v744
      %v865 = vpack.c.bf16 %v693, %v745
      %v866 = vpack.c.bf16 %v696, %v746
      %v867 = vpack.c.bf16 %v699, %v747
      %s868 = scalar_lea.vmem [#allocation2], 24
      %869 = vst [vmem:[%s868] sm:$0xff] %v852
      %870 = vst [vmem:[%s868 + $0x18] sm:$0xff] %v853
      %871 = vst [vmem:[%s868 + $0x30] sm:$0xff] %v854
      %872 = vst [vmem:[%s868 + $0x48] sm:$0xff] %v855
      %873 = vst [vmem:[%s868 + $0x60] sm:$0xff] %v856
      %874 = vst [vmem:[%s868 + $0x78] sm:$0xff] %v857
      %875 = vst [vmem:[%s868 + $0x90] sm:$0xff] %v858
      %876 = vst [vmem:[%s868 + $0xa8] sm:$0xff] %v859
      %877 = vst [vmem:[%s868 + $0xc0] sm:$0xff] %v860
      %878 = vst [vmem:[%s868 + $0xd8] sm:$0xff] %v861
      %879 = vst [vmem:[%s868 + $0xf0] sm:$0xff] %v862
      %880 = vst [vmem:[%s868 + $0x108] sm:$0xff] %v863
      %881 = vst [vmem:[%s868 + $0x120] sm:$0xff] %v864
      %882 = vst [vmem:[%s868 + $0x138] sm:$0xff] %v865
      %883 = vst [vmem:[%s868 + $0x150] sm:$0xff] %v866
      %884 = vst [vmem:[%s868 + $0x168] sm:$0xff] %v867
      %v885 = vpack.c.bf16 %v588, %v587
      %v886 = vpack.c.bf16 %v590, %v589
      %v887 = vpack.c.bf16 %v592, %v591
      %v888 = vpack.c.bf16 %v594, %v593
      %v889 = vpack.c.bf16 %v596, %v595
      %v890 = vpack.c.bf16 %v598, %v597
      %v891 = vpack.c.bf16 %v600, %v599
      %v892 = vpack.c.bf16 %v602, %v601
      %v893 = vpack.c.bf16 %v604, %v603
      %v894 = vpack.c.bf16 %v606, %v605
      %v895 = vpack.c.bf16 %v608, %v607
      %v896 = vpack.c.bf16 %v610, %v609
      %v897 = vpack.c.bf16 %v612, %v611
      %v898 = vpack.c.bf16 %v614, %v613
      %v899 = vpack.c.bf16 %v616, %v615
      %v900 = vpack.c.bf16 %v618, %v617
      %901 = vst [vmem:[%s868 + $0x8] sm:$0xff] %v885
      %902 = vst [vmem:[%s868 + $0x20] sm:$0xff] %v886
      %903 = vst [vmem:[%s868 + $0x38] sm:$0xff] %v887
      %904 = vst [vmem:[%s868 + $0x50] sm:$0xff] %v888
      %905 = vst [vmem:[%s868 + $0x68] sm:$0xff] %v889
      %906 = vst [vmem:[%s868 + $0x80] sm:$0xff] %v890
      %907 = vst [vmem:[%s868 + $0x98] sm:$0xff] %v891
      %908 = vst [vmem:[%s868 + $0xb0] sm:$0xff] %v892
      %909 = vst [vmem:[%s868 + $0xc8] sm:$0xff] %v893
      %910 = vst [vmem:[%s868 + $0xe0] sm:$0xff] %v894
      %911 = vst [vmem:[%s868 + $0xf8] sm:$0xff] %v895
      %912 = vst [vmem:[%s868 + $0x110] sm:$0xff] %v896
      %913 = vst [vmem:[%s868 + $0x128] sm:$0xff] %v897
      %914 = vst [vmem:[%s868 + $0x140] sm:$0xff] %v898
      %915 = vst [vmem:[%s868 + $0x158] sm:$0xff] %v899
      %916 = vst [vmem:[%s868 + $0x170] sm:$0xff] %v900
      %v917 = vpack.c.bf16 %v829, %v751
      %v918 = vpack.c.bf16 %v830, %v754
      %v919 = vpack.c.bf16 %v831, %v757
      %v920 = vpack.c.bf16 %v832, %v760
      %v921 = vpack.c.bf16 %v833, %v763
      %v922 = vpack.c.bf16 %v834, %v766
      %v923 = vpack.c.bf16 %v835, %v769
      %v924 = vpack.c.bf16 %v836, %v772
      %v925 = vpack.c.bf16 %v837, %v775
      %v926 = vpack.c.bf16 %v838, %v778
      %v927 = vpack.c.bf16 %v839, %v781
      %v928 = vpack.c.bf16 %v840, %v784
      %v929 = vpack.c.bf16 %v841, %v787
      %v930 = vpack.c.bf16 %v842, %v790
      %v931 = vpack.c.bf16 %v843, %v793
      %v932 = vpack.c.bf16 %v844, %v796
      %933 = vst [vmem:[%s868 + $0x10] sm:$0xff] %v917
      %934 = vst [vmem:[%s868 + $0x28] sm:$0xff] %v918
      %935 = vst [vmem:[%s868 + $0x40] sm:$0xff] %v919
      %936 = vst [vmem:[%s868 + $0x58] sm:$0xff] %v920
      %937 = vst [vmem:[%s868 + $0x70] sm:$0xff] %v921
      %938 = vst [vmem:[%s868 + $0x88] sm:$0xff] %v922
      %939 = vst [vmem:[%s868 + $0xa0] sm:$0xff] %v923
      %940 = vst [vmem:[%s868 + $0xb8] sm:$0xff] %v924
      %941 = vst [vmem:[%s868 + $0xd0] sm:$0xff] %v925
      %942 = vst [vmem:[%s868 + $0xe8] sm:$0xff] %v926
      %943 = vst [vmem:[%s868 + $0x100] sm:$0xff] %v927
      %944 = vst [vmem:[%s868 + $0x118] sm:$0xff] %v928
      %945 = vst [vmem:[%s868 + $0x130] sm:$0xff] %v929
      %946 = vst [vmem:[%s868 + $0x148] sm:$0xff] %v930
      %947 = vst [vmem:[%s868 + $0x160] sm:$0xff] %v931
      %948 = vst [vmem:[%s868 + $0x178] sm:$0xff] %v932
      %v949 = vld [vmem:[#allocation2] sm:$0xff]
      %v950 = vld [vmem:[#allocation2 + $0x8] sm:$0xff]
      %v951 = vld [vmem:[#allocation2 + $0x10] sm:$0xff]
      %v952 = vld [vmem:[#allocation2 + $0x18] sm:$0xff]
      %v953 = vld [vmem:[#allocation2 + $0x20] sm:$0xff]
      %v954 = vld [vmem:[#allocation2 + $0x28] sm:$0xff]
      %v955 = vld [vmem:[#allocation2 + $0x30] sm:$0xff]
      %v956 = vld [vmem:[#allocation2 + $0x38] sm:$0xff]
      %v957 = vld [vmem:[#allocation2 + $0x40] sm:$0xff]
      %v958 = vld [vmem:[#allocation2 + $0x48] sm:$0xff]
      %v959 = vld [vmem:[#allocation2 + $0x50] sm:$0xff]
      %v960 = vld [vmem:[#allocation2 + $0x58] sm:$0xff]
      %v961 = vld [vmem:[#allocation2 + $0x60] sm:$0xff]
      %v962 = vld [vmem:[#allocation2 + $0x68] sm:$0xff]
      %v963 = vld [vmem:[#allocation2 + $0x70] sm:$0xff]
      %v964 = vld [vmem:[#allocation2 + $0x78] sm:$0xff]
      %v965 = vld [vmem:[#allocation2 + $0x80] sm:$0xff]
      %v966 = vld [vmem:[#allocation2 + $0x88] sm:$0xff]
      %v967 = vld [vmem:[#allocation2 + $0x90] sm:$0xff]
      %v968 = vld [vmem:[#allocation2 + $0x98] sm:$0xff]
      %v969 = vld [vmem:[#allocation2 + $0xa0] sm:$0xff]
      %v970 = vld [vmem:[#allocation2 + $0xa8] sm:$0xff]
      %v971 = vld [vmem:[#allocation2 + $0xb0] sm:$0xff]
      %v972 = vld [vmem:[#allocation2 + $0xb8] sm:$0xff]
      %v973 = vld [vmem:[#allocation2 + $0xc0] sm:$0xff]
      %v974 = vld [vmem:[#allocation2 + $0xc8] sm:$0xff]
      %v975 = vld [vmem:[#allocation2 + $0xd0] sm:$0xff]
      %v976 = vld [vmem:[#allocation2 + $0xd8] sm:$0xff]
      %v977 = vld [vmem:[#allocation2 + $0xe0] sm:$0xff]
      %v978 = vld [vmem:[#allocation2 + $0xe8] sm:$0xff]
      %v979 = vld [vmem:[#allocation2 + $0xf0] sm:$0xff]
      %v980 = vld [vmem:[#allocation2 + $0xf8] sm:$0xff]
      %v981 = vld [vmem:[#allocation2 + $0x100] sm:$0xff]
      %v982 = vld [vmem:[#allocation2 + $0x108] sm:$0xff]
      %v983 = vld [vmem:[#allocation2 + $0x110] sm:$0xff]
      %v984 = vld [vmem:[#allocation2 + $0x118] sm:$0xff]
      %v985 = vld [vmem:[#allocation2 + $0x120] sm:$0xff]
      %v986 = vld [vmem:[#allocation2 + $0x128] sm:$0xff]
      %v987 = vld [vmem:[#allocation2 + $0x130] sm:$0xff]
      %v988 = vld [vmem:[#allocation2 + $0x138] sm:$0xff]
      %v989 = vld [vmem:[#allocation2 + $0x140] sm:$0xff]
      %v990 = vld [vmem:[#allocation2 + $0x148] sm:$0xff]
      %v991 = vld [vmem:[#allocation2 + $0x150] sm:$0xff]
      %v992 = vld [vmem:[#allocation2 + $0x158] sm:$0xff]
      %v993 = vld [vmem:[#allocation2 + $0x160] sm:$0xff]
      %v994 = vld [vmem:[#allocation2 + $0x168] sm:$0xff]
      %v995 = vld [vmem:[#allocation2 + $0x170] sm:$0xff]
      %v996 = vld [vmem:[#allocation2 + $0x178] sm:$0xff]
      %v997 = vld [vmem:[%s3] sm:$0xf]
      %v998 = vld [vmem:[%s3 + $0x4] sm:$0xf]
      %v999 = vld [vmem:[%s3 + $0x8] sm:$0xf]
      %v1000 = vld [vmem:[%s3 + $0xc] sm:$0xf]
      %v1001 = vld [vmem:[%s3 + $0x10] sm:$0xf]
      %v1002 = vld [vmem:[%s3 + $0x14] sm:$0xf]
      %v1003 = vld [vmem:[%s3 + $0x18] sm:$0xf]
      %v1004 = vld [vmem:[%s3 + $0x1c] sm:$0xf]
      %v1005 = vld [vmem:[%s3 + $0x20] sm:$0xf]
      %v1006 = vld [vmem:[%s3 + $0x24] sm:$0xf]
      %v1007 = vld [vmem:[%s3 + $0x28] sm:$0xf]
      %v1008 = vld [vmem:[%s3 + $0x2c] sm:$0xf]
      %v1009 = vld [vmem:[%s3 + $0x30] sm:$0xf]
      %v1010 = vld [vmem:[%s3 + $0x34] sm:$0xf]
      %v1011 = vld [vmem:[%s3 + $0x38] sm:$0xf]
      %v1012 = vld [vmem:[%s3 + $0x3c] sm:$0xf]
      %v1013 = vld [vmem:[%s3 + $0x40] sm:$0xf]
      %v1014 = vld [vmem:[%s3 + $0x44] sm:$0xf]
      %v1015 = vld [vmem:[%s3 + $0x48] sm:$0xf]
      %v1016 = vld [vmem:[%s3 + $0x4c] sm:$0xf]
      %v1017 = vld [vmem:[%s3 + $0x50] sm:$0xf]
      %v1018 = vld [vmem:[%s3 + $0x54] sm:$0xf]
      %v1019 = vld [vmem:[%s3 + $0x58] sm:$0xf]
      %v1020 = vld [vmem:[%s3 + $0x5c] sm:$0xf]
      %v1021 = vld [vmem:[%s3 + $0x60] sm:$0xf]
      %v1022 = vld [vmem:[%s3 + $0x64] sm:$0xf]
      %v1023 = vld [vmem:[%s3 + $0x68] sm:$0xf]
      %v1024 = vld [vmem:[%s3 + $0x6c] sm:$0xf]
      %v1025 = vld [vmem:[%s3 + $0x70] sm:$0xf]
      %v1026 = vld [vmem:[%s3 + $0x74] sm:$0xf]
      %v1027 = vld [vmem:[%s3 + $0x78] sm:$0xf]
      %v1028 = vld [vmem:[%s3 + $0x7c] sm:$0xf]
      %v1029 = vld [vmem:[%s3 + $0x80] sm:$0xf]
      %v1030 = vld [vmem:[%s3 + $0x84] sm:$0xf]
      %v1031 = vld [vmem:[%s3 + $0x88] sm:$0xf]
      %v1032 = vld [vmem:[%s3 + $0x8c] sm:$0xf]
      %v1033 = vld [vmem:[%s3 + $0x90] sm:$0xf]
      %v1034 = vld [vmem:[%s3 + $0x94] sm:$0xf]
      %v1035 = vld [vmem:[%s3 + $0x98] sm:$0xf]
      %v1036 = vld [vmem:[%s3 + $0x9c] sm:$0xf]
      %v1037 = vld [vmem:[%s3 + $0xa0] sm:$0xf]
      %v1038 = vld [vmem:[%s3 + $0xa4] sm:$0xf]
      %v1039 = vld [vmem:[%s3 + $0xa8] sm:$0xf]
      %v1040 = vld [vmem:[%s3 + $0xac] sm:$0xf]
      %v1041 = vld [vmem:[%s3 + $0xb0] sm:$0xf]
      %v1042 = vld [vmem:[%s3 + $0xb4] sm:$0xf]
      %v1043 = vld [vmem:[%s3 + $0xb8] sm:$0xf]
      %v1044 = vld [vmem:[%s3 + $0xbc] sm:$0xf]
      %v1045 = vld [vmem:[%s868] sm:$0xff]
      %v1046 = vld [vmem:[%s868 + $0x8] sm:$0xff]
      %v1047 = vld [vmem:[%s868 + $0x10] sm:$0xff]
      %v1048 = vld [vmem:[%s868 + $0x18] sm:$0xff]
      %v1049 = vld [vmem:[%s868 + $0x20] sm:$0xff]
      %v1050 = vld [vmem:[%s868 + $0x28] sm:$0xff]
      %v1051 = vld [vmem:[%s868 + $0x30] sm:$0xff]
      %v1052 = vld [vmem:[%s868 + $0x38] sm:$0xff]
      %v1053 = vld [vmem:[%s868 + $0x40] sm:$0xff]
      %v1054 = vld [vmem:[%s868 + $0x48] sm:$0xff]
      %v1055 = vld [vmem:[%s868 + $0x50] sm:$0xff]
      %v1056 = vld [vmem:[%s868 + $0x58] sm:$0xff]
      %v1057 = vld [vmem:[%s868 + $0x60] sm:$0xff]
      %v1058 = vld [vmem:[%s868 + $0x68] sm:$0xff]
      %v1059 = vld [vmem:[%s868 + $0x70] sm:$0xff]
      %v1060 = vld [vmem:[%s868 + $0x78] sm:$0xff]
      %v1061 = vld [vmem:[%s868 + $0x80] sm:$0xff]
      %v1062 = vld [vmem:[%s868 + $0x88] sm:$0xff]
      %v1063 = vld [vmem:[%s868 + $0x90] sm:$0xff]
      %v1064 = vld [vmem:[%s868 + $0x98] sm:$0xff]
      %v1065 = vld [vmem:[%s868 + $0xa0] sm:$0xff]
      %v1066 = vld [vmem:[%s868 + $0xa8] sm:$0xff]
      %v1067 = vld [vmem:[%s868 + $0xb0] sm:$0xff]
      %v1068 = vld [vmem:[%s868 + $0xb8] sm:$0xff]
      %v1069 = vld [vmem:[%s868 + $0xc0] sm:$0xff]
      %v1070 = vld [vmem:[%s868 + $0xc8] sm:$0xff]
      %v1071 = vld [vmem:[%s868 + $0xd0] sm:$0xff]
      %v1072 = vld [vmem:[%s868 + $0xd8] sm:$0xff]
      %v1073 = vld [vmem:[%s868 + $0xe0] sm:$0xff]
      %v1074 = vld [vmem:[%s868 + $0xe8] sm:$0xff]
      %v1075 = vld [vmem:[%s868 + $0xf0] sm:$0xff]
      %v1076 = vld [vmem:[%s868 + $0xf8] sm:$0xff]
      %v1077 = vld [vmem:[%s868 + $0x100] sm:$0xff]
      %v1078 = vld [vmem:[%s868 + $0x108] sm:$0xff]
      %v1079 = vld [vmem:[%s868 + $0x110] sm:$0xff]
      %v1080 = vld [vmem:[%s868 + $0x118] sm:$0xff]
      %v1081 = vld [vmem:[%s868 + $0x120] sm:$0xff]
      %v1082 = vld [vmem:[%s868 + $0x128] sm:$0xff]
      %v1083 = vld [vmem:[%s868 + $0x130] sm:$0xff]
      %v1084 = vld [vmem:[%s868 + $0x138] sm:$0xff]
      %v1085 = vld [vmem:[%s868 + $0x140] sm:$0xff]
      %v1086 = vld [vmem:[%s868 + $0x148] sm:$0xff]
      %v1087 = vld [vmem:[%s868 + $0x150] sm:$0xff]
      %v1088 = vld [vmem:[%s868 + $0x158] sm:$0xff]
      %v1089 = vld [vmem:[%s868 + $0x160] sm:$0xff]
      %v1090 = vld [vmem:[%s868 + $0x168] sm:$0xff]
      %v1091 = vld [vmem:[%s868 + $0x170] sm:$0xff]
      %v1092 = vld [vmem:[%s868 + $0x178] sm:$0xff]
      %s1093 = scalar_lea.vmem %s3, 192
      %v1094 = vld [vmem:[%s1093] sm:$0xf]
      %v1095 = vld [vmem:[%s1093 + $0x4] sm:$0xf]
      %v1096 = vld [vmem:[%s1093 + $0x8] sm:$0xf]
      %v1097 = vld [vmem:[%s1093 + $0xc] sm:$0xf]
      %v1098 = vld [vmem:[%s1093 + $0x10] sm:$0xf]
      %v1099 = vld [vmem:[%s1093 + $0x14] sm:$0xf]
      %v1100 = vld [vmem:[%s1093 + $0x18] sm:$0xf]
      %v1101 = vld [vmem:[%s1093 + $0x1c] sm:$0xf]
      %v1102 = vld [vmem:[%s1093 + $0x20] sm:$0xf]
      %v1103 = vld [vmem:[%s1093 + $0x24] sm:$0xf]
      %v1104 = vld [vmem:[%s1093 + $0x28] sm:$0xf]
      %v1105 = vld [vmem:[%s1093 + $0x2c] sm:$0xf]
      %v1106 = vld [vmem:[%s1093 + $0x30] sm:$0xf]
      %v1107 = vld [vmem:[%s1093 + $0x34] sm:$0xf]
      %v1108 = vld [vmem:[%s1093 + $0x38] sm:$0xf]
      %v1109 = vld [vmem:[%s1093 + $0x3c] sm:$0xf]
      %v1110 = vld [vmem:[%s1093 + $0x40] sm:$0xf]
      %v1111 = vld [vmem:[%s1093 + $0x44] sm:$0xf]
      %v1112 = vld [vmem:[%s1093 + $0x48] sm:$0xf]
      %v1113 = vld [vmem:[%s1093 + $0x4c] sm:$0xf]
      %v1114 = vld [vmem:[%s1093 + $0x50] sm:$0xf]
      %v1115 = vld [vmem:[%s1093 + $0x54] sm:$0xf]
      %v1116 = vld [vmem:[%s1093 + $0x58] sm:$0xf]
      %v1117 = vld [vmem:[%s1093 + $0x5c] sm:$0xf]
      %v1118 = vld [vmem:[%s1093 + $0x60] sm:$0xf]
      %v1119 = vld [vmem:[%s1093 + $0x64] sm:$0xf]
      %v1120 = vld [vmem:[%s1093 + $0x68] sm:$0xf]
      %v1121 = vld [vmem:[%s1093 + $0x6c] sm:$0xf]
      %v1122 = vld [vmem:[%s1093 + $0x70] sm:$0xf]
      %v1123 = vld [vmem:[%s1093 + $0x74] sm:$0xf]
      %v1124 = vld [vmem:[%s1093 + $0x78] sm:$0xf]
      %v1125 = vld [vmem:[%s1093 + $0x7c] sm:$0xf]
      %v1126 = vld [vmem:[%s1093 + $0x80] sm:$0xf]
      %v1127 = vld [vmem:[%s1093 + $0x84] sm:$0xf]
      %v1128 = vld [vmem:[%s1093 + $0x88] sm:$0xf]
      %v1129 = vld [vmem:[%s1093 + $0x8c] sm:$0xf]
      %v1130 = vld [vmem:[%s1093 + $0x90] sm:$0xf]
      %v1131 = vld [vmem:[%s1093 + $0x94] sm:$0xf]
      %v1132 = vld [vmem:[%s1093 + $0x98] sm:$0xf]
      %v1133 = vld [vmem:[%s1093 + $0x9c] sm:$0xf]
      %v1134 = vld [vmem:[%s1093 + $0xa0] sm:$0xf]
      %v1135 = vld [vmem:[%s1093 + $0xa4] sm:$0xf]
      %v1136 = vld [vmem:[%s1093 + $0xa8] sm:$0xf]
      %v1137 = vld [vmem:[%s1093 + $0xac] sm:$0xf]
      %v1138 = vld [vmem:[%s1093 + $0xb0] sm:$0xf]
      %v1139 = vld [vmem:[%s1093 + $0xb4] sm:$0xf]
      %v1140 = vld [vmem:[%s1093 + $0xb8] sm:$0xf]
      %v1141 = vld [vmem:[%s1093 + $0xbc] sm:$0xf]
      %v1190 = vunpack.c.l.b16 %v1094
      %v1191 = vunpack.c.l.b16 %v1095
      %v1192 = vunpack.c.l.b16 %v1096
      %v1193 = vunpack.c.l.b16 %v1097
      %v1194 = vunpack.c.l.b16 %v1098
      %v1195 = vunpack.c.l.b16 %v1099
      %v1196 = vunpack.c.l.b16 %v1100
      %v1197 = vunpack.c.l.b16 %v1101
      %v1198 = vunpack.c.l.b16 %v1102
      %v1199 = vunpack.c.l.b16 %v1103
      %v1200 = vunpack.c.l.b16 %v1104
      %v1201 = vunpack.c.l.b16 %v1105
      %v1202 = vunpack.c.l.b16 %v1106
      %v1203 = vunpack.c.l.b16 %v1107
      %v1204 = vunpack.c.l.b16 %v1108
      %v1205 = vunpack.c.l.b16 %v1109
      %v1206 = vunpack.c.l.b16 %v1110
      %v1207 = vunpack.c.l.b16 %v1111
      %v1208 = vunpack.c.l.b16 %v1112
      %v1209 = vunpack.c.l.b16 %v1113
      %v1210 = vunpack.c.l.b16 %v1114
      %v1211 = vunpack.c.l.b16 %v1115
      %v1212 = vunpack.c.l.b16 %v1116
      %v1213 = vunpack.c.l.b16 %v1117
      %v1214 = vunpack.c.l.b16 %v1118
      %v1215 = vunpack.c.l.b16 %v1119
      %v1216 = vunpack.c.l.b16 %v1120
      %v1217 = vunpack.c.l.b16 %v1121
      %v1218 = vunpack.c.l.b16 %v1122
      %v1219 = vunpack.c.l.b16 %v1123
      %v1220 = vunpack.c.l.b16 %v1124
      %v1221 = vunpack.c.l.b16 %v1125
      %v1222 = vunpack.c.l.b16 %v1126
      %v1223 = vunpack.c.l.b16 %v1127
      %v1224 = vunpack.c.l.b16 %v1128
      %v1225 = vunpack.c.l.b16 %v1129
      %v1226 = vunpack.c.l.b16 %v1130
      %v1227 = vunpack.c.l.b16 %v1131
      %v1228 = vunpack.c.l.b16 %v1132
      %v1229 = vunpack.c.l.b16 %v1133
      %v1230 = vunpack.c.l.b16 %v1134
      %v1231 = vunpack.c.l.b16 %v1135
      %v1232 = vunpack.c.l.b16 %v1136
      %v1233 = vunpack.c.l.b16 %v1137
      %v1234 = vunpack.c.l.b16 %v1138
      %v1235 = vunpack.c.l.b16 %v1139
      %v1236 = vunpack.c.l.b16 %v1140
      %v1237 = vunpack.c.l.b16 %v1141
      %v1238 = vpack.c.b16 %v1191, %v1190
      %v1239 = vpack.c.b16 %v1193, %v1192
      %v1240 = vpack.c.b16 %v1195, %v1194
      %v1241 = vpack.c.b16 %v1197, %v1196
      %v1242 = vpack.c.b16 %v1199, %v1198
      %v1243 = vpack.c.b16 %v1201, %v1200
      %v1244 = vpack.c.b16 %v1203, %v1202
      %v1245 = vpack.c.b16 %v1205, %v1204
      %v1246 = vpack.c.b16 %v1207, %v1206
      %v1247 = vpack.c.b16 %v1209, %v1208
      %v1248 = vpack.c.b16 %v1211, %v1210
      %v1249 = vpack.c.b16 %v1213, %v1212
      %v1250 = vpack.c.b16 %v1215, %v1214
      %v1251 = vpack.c.b16 %v1217, %v1216
      %v1252 = vpack.c.b16 %v1219, %v1218
      %v1253 = vpack.c.b16 %v1221, %v1220
      %v1254 = vpack.c.b16 %v1223, %v1222
      %v1255 = vpack.c.b16 %v1225, %v1224
      %v1256 = vpack.c.b16 %v1227, %v1226
      %v1257 = vpack.c.b16 %v1229, %v1228
      %v1258 = vpack.c.b16 %v1231, %v1230
      %v1259 = vpack.c.b16 %v1233, %v1232
      %v1260 = vpack.c.b16 %v1235, %v1234
      %v1261 = vpack.c.b16 %v1237, %v1236
      %1286 = vmatprep.subr.bf16.mxu0 0
      %1287 = vmatpush1.bf16.msra.mxu0 %v1238
      %1288 = vmatprep.subr.bf16.mxu0 0
      %1289 = vmatpush1.bf16.msra.mxu0 %v1239
      %1290 = vmatprep.subr.bf16.mxu0 0
      %1291 = vmatpush1.bf16.msra.mxu0 %v1240
      %1292 = vmatprep.subr.bf16.mxu0 0
      %1293 = vmatpush1.bf16.msra.mxu0 %v1241
      %1294 = vmatprep.subr.bf16.mxu0 0
      %1295 = vmatpush1.bf16.msra.mxu0 %v1242
      %1296 = vmatprep.subr.bf16.mxu0 0
      %1297 = vmatpush1.bf16.msra.mxu0 %v1243
      %1298 = vmatprep.subr.bf16.mxu0 0
      %1299 = vmatpush1.bf16.msra.mxu0 %v1244
      %1300 = vmatprep.subr.bf16.mxu0 0
      %1301 = vmatpush1.bf16.msra.mxu0 %v1245
      %1302 = vmatprep.subr.bf16.mxu0 0
      %1303 = vmatpush1.bf16.msra.mxu0 %v1246
      %1304 = vmatprep.subr.bf16.mxu0 0
      %1305 = vmatpush1.bf16.msra.mxu0 %v1247
      %1306 = vmatprep.subr.bf16.mxu0 0
      %1307 = vmatpush1.bf16.msra.mxu0 %v1248
      %1308 = vmatprep.subr.bf16.mxu0 0
      %1309 = vmatpush1.bf16.msra.mxu0 %v1249
      %1310 = vmatprep.subr.bf16.mxu0 0
      %1311 = vmatpush1.bf16.msra.mxu0 %v1250
      %1312 = vmatprep.subr.bf16.mxu0 0
      %1313 = vmatpush1.bf16.msra.mxu0 %v1251
      %1314 = vmatprep.subr.bf16.mxu0 0
      %1315 = vmatpush1.bf16.msra.mxu0 %v1252
      %1316 = vmatprep.subr.bf16.mxu0 0
      %1317 = vmatpush1.bf16.msra.mxu0 %v1253
      %1318 = vmatprep.mubr.bf16.mxu0 %v1046
      %1319 = vmatmul.mubr.bf16.gmra.mrb[0].mxu0 %v1045
      %v1320 = vpop.f32.mrb[0].mxu0
      %v1321 = vadd.f32 0.0, %v1320
      %v1322 = vpop.f32.mrb[0].mxu0
      %v1323 = vpop.f32.mrb[0].mxu0
      %v1324 = vadd.f32 0.0, %v1323
      %v1325 = vpop.f32.mrb[0].mxu0
      %1326 = vmatprep.mubr.bf16.mxu0 %v1049
      %1327 = vmatmul.mubr.bf16.gmra.mrb[0].mxu0 %v1048
      %v1328 = vpop.f32.mrb[0].mxu0
      %v1329 = vadd.f32 0.0, %v1328
      %v1330 = vpop.f32.mrb[0].mxu0
      %v1331 = vpop.f32.mrb[0].mxu0
      %v1332 = vadd.f32 0.0, %v1331
      %v1333 = vpop.f32.mrb[0].mxu0
      %1334 = vmatprep.mubr.bf16.mxu0 %v1052
      %1335 = vmatmul.mubr.bf16.gmra.mrb[0].mxu0 %v1051
      %v1336 = vpop.f32.mrb[0].mxu0
      %v1337 = vadd.f32 0.0, %v1336
      %v1338 = vpop.f32.mrb[0].mxu0
      %v1339 = vpop.f32.mrb[0].mxu0
      %v1340 = vadd.f32 0.0, %v1339
      %v1341 = vpop.f32.mrb[0].mxu0
      %1342 = vmatprep.mubr.bf16.mxu0 %v1055
      %1343 = vmatmul.mubr.bf16.gmra.mrb[0].mxu0 %v1054
      %v1344 = vpop.f32.mrb[0].mxu0
      %v1345 = vadd.f32 0.0, %v1344
      %v1346 = vpop.f32.mrb[0].mxu0
      %v1347 = vpop.f32.mrb[0].mxu0
      %v1348 = vadd.f32 0.0, %v1347
      %v1349 = vpop.f32.mrb[0].mxu0
      %1350 = vmatprep.mubr.bf16.mxu0 %v1058
      %1351 = vmatmul.mubr.bf16.gmra.mrb[0].mxu0 %v1057
      %v1352 = vpop.f32.mrb[0].mxu0
      %v1353 = vadd.f32 0.0, %v1352
      %v1354 = vpop.f32.mrb[0].mxu0
      %v1355 = vpop.f32.mrb[0].mxu0
      %v1356 = vadd.f32 0.0, %v1355
      %v1357 = vpop.f32.mrb[0].mxu0
      %1358 = vmatprep.mubr.bf16.mxu0 %v1061
      %1359 = vmatmul.mubr.bf16.gmra.mrb[0].mxu0 %v1060
      %v1360 = vpop.f32.mrb[0].mxu0
      %v1361 = vadd.f32 0.0, %v1360
      %v1362 = vpop.f32.mrb[0].mxu0
      %v1363 = vpop.f32.mrb[0].mxu0
      %v1364 = vadd.f32 0.0, %v1363
      %v1365 = vpop.f32.mrb[0].mxu0
      %1366 = vmatprep.mubr.bf16.mxu0 %v1064
      %1367 = vmatmul.mubr.bf16.gmra.mrb[0].mxu0 %v1063
      %v1368 = vpop.f32.mrb[0].mxu0
      %v1369 = vadd.f32 0.0, %v1368
      %v1370 = vpop.f32.mrb[0].mxu0
      %v1371 = vpop.f32.mrb[0].mxu0
      %v1372 = vadd.f32 0.0, %v1371
      %v1373 = vpop.f32.mrb[0].mxu0
      %1374 = vmatprep.mubr.bf16.mxu0 %v1067
      %1375 = vmatmul.mubr.bf16.gmra.mrb[0].mxu0 %v1066
      %v1376 = vpop.f32.mrb[0].mxu0
      %v1377 = vadd.f32 0.0, %v1376
      %v1378 = vpop.f32.mrb[0].mxu0
      %v1379 = vpop.f32.mrb[0].mxu0
      %v1380 = vadd.f32 0.0, %v1379
      %v1381 = vpop.f32.mrb[0].mxu0
      %1382 = vmatprep.mubr.bf16.mxu0 %v1070
      %1383 = vmatmul.mubr.bf16.gmra.mrb[0].mxu0 %v1069
      %v1384 = vpop.f32.mrb[0].mxu0
      %v1385 = vadd.f32 0.0, %v1384
      %v1386 = vpop.f32.mrb[0].mxu0
      %v1387 = vpop.f32.mrb[0].mxu0
      %v1388 = vadd.f32 0.0, %v1387
      %v1389 = vpop.f32.mrb[0].mxu0
      %1390 = vmatprep.mubr.bf16.mxu0 %v1073
      %1391 = vmatmul.mubr.bf16.gmra.mrb[0].mxu0 %v1072
      %v1392 = vpop.f32.mrb[0].mxu0
      %v1393 = vadd.f32 0.0, %v1392
      %v1394 = vpop.f32.mrb[0].mxu0
      %v1395 = vpop.f32.mrb[0].mxu0
      %v1396 = vadd.f32 0.0, %v1395
      %v1397 = vpop.f32.mrb[0].mxu0
      %1398 = vmatprep.mubr.bf16.mxu0 %v1076
      %1399 = vmatmul.mubr.bf16.gmra.mrb[0].mxu0 %v1075
      %v1400 = vpop.f32.mrb[0].mxu0
      %v1401 = vadd.f32 0.0, %v1400
      %v1402 = vpop.f32.mrb[0].mxu0
      %v1403 = vpop.f32.mrb[0].mxu0
      %v1404 = vadd.f32 0.0, %v1403
      %v1405 = vpop.f32.mrb[0].mxu0
      %1406 = vmatprep.mubr.bf16.mxu0 %v1079
      %1407 = vmatmul.mubr.bf16.gmra.mrb[0].mxu0 %v1078
      %v1408 = vpop.f32.mrb[0].mxu0
      %v1409 = vadd.f32 0.0, %v1408
      %v1410 = vpop.f32.mrb[0].mxu0
      %v1411 = vpop.f32.mrb[0].mxu0
      %v1412 = vadd.f32 0.0, %v1411
      %v1413 = vpop.f32.mrb[0].mxu0
      %1414 = vmatprep.mubr.bf16.mxu0 %v1082
      %1415 = vmatmul.mubr.bf16.gmra.mrb[0].mxu0 %v1081
      %v1416 = vpop.f32.mrb[0].mxu0
      %v1417 = vadd.f32 0.0, %v1416
      %v1418 = vpop.f32.mrb[0].mxu0
      %v1419 = vpop.f32.mrb[0].mxu0
      %v1420 = vadd.f32 0.0, %v1419
      %v1421 = vpop.f32.mrb[0].mxu0
      %1422 = vmatprep.mubr.bf16.mxu0 %v1085
      %1423 = vmatmul.mubr.bf16.gmra.mrb[0].mxu0 %v1084
      %v1424 = vpop.f32.mrb[0].mxu0
      %v1425 = vadd.f32 0.0, %v1424
      %v1426 = vpop.f32.mrb[0].mxu0
      %v1427 = vpop.f32.mrb[0].mxu0
      %v1428 = vadd.f32 0.0, %v1427
      %v1429 = vpop.f32.mrb[0].mxu0
      %1430 = vmatprep.mubr.bf16.mxu0 %v1088
      %1431 = vmatmul.mubr.bf16.gmra.mrb[0].mxu0 %v1087
      %v1432 = vpop.f32.mrb[0].mxu0
      %v1433 = vadd.f32 0.0, %v1432
      %v1434 = vpop.f32.mrb[0].mxu0
      %v1435 = vpop.f32.mrb[0].mxu0
      %v1436 = vadd.f32 0.0, %v1435
      %v1437 = vpop.f32.mrb[0].mxu0
      %1438 = vmatprep.mubr.bf16.mxu0 %v1091
      %1439 = vmatmul.mubr.bf16.gmra.mrb[0].mxu0 %v1090
      %v1440 = vpop.f32.mrb[0].mxu0
      %v1441 = vadd.f32 0.0, %v1440
      %v1442 = vpop.f32.mrb[0].mxu0
      %v1443 = vpop.f32.mrb[0].mxu0
      %v1444 = vadd.f32 0.0, %v1443
      %v1445 = vpop.f32.mrb[0].mxu0
      %1446 = vdwg.mxu0
      %1447 = vmatprep.subr.bf16.mxu0 0
      %1448 = vmatpush1.bf16.msra.mxu0 %v1254
      %1449 = vmatprep.subr.bf16.mxu0 0
      %1450 = vmatpush1.bf16.msra.mxu0 %v1255
      %1451 = vmatprep.subr.bf16.mxu0 0
      %1452 = vmatpush1.bf16.msra.mxu0 %v1256
      %1453 = vmatprep.subr.bf16.mxu0 0
      %1454 = vmatpush1.bf16.msra.mxu0 %v1257
      %1455 = vmatprep.subr.bf16.mxu0 0
      %1456 = vmatpush1.bf16.msra.mxu0 %v1258
      %1457 = vmatprep.subr.bf16.mxu0 0
      %1458 = vmatpush1.bf16.msra.mxu0 %v1259
      %1459 = vmatprep.subr.bf16.mxu0 0
      %1460 = vmatpush1.bf16.msra.mxu0 %v1260
      %1461 = vmatprep.subr.bf16.mxu0 0
      %1462 = vmatpush1.bf16.msra.mxu0 %v1261
      %1463 = vmatprep.subr.bf16.mxu0 0
      %1464 = vmatpush1.bf16.msra.mxu0 0
      %1465 = vmatprep.subr.bf16.mxu0 0
      %1466 = vmatpush1.bf16.msra.mxu0 0
      %1467 = vmatprep.subr.bf16.mxu0 0
      %1468 = vmatpush1.bf16.msra.mxu0 0
      %1469 = vmatprep.subr.bf16.mxu0 0
      %1470 = vmatpush1.bf16.msra.mxu0 0
      %1471 = vmatprep.subr.bf16.mxu0 0
      %1472 = vmatpush1.bf16.msra.mxu0 0
      %1473 = vmatprep.subr.bf16.mxu0 0
      %1474 = vmatpush1.bf16.msra.mxu0 0
      %1475 = vmatprep.subr.bf16.mxu0 0
      %1476 = vmatpush1.bf16.msra.mxu0 0
      %1477 = vmatprep.subr.bf16.mxu0 0
      %1478 = vmatpush1.bf16.msra.mxu0 0
      %1479 = vmatprep.mubr.bf16.mxu0 0
      %1480 = vmatmul.mubr.bf16.gmra.mrb[0].mxu0 %v1047
      %v1481 = vpop.f32.mrb[0].mxu0
      %v1482 = vadd.f32 %v1321, %v1481
      %v1483 = vpop.f32.mrb[0].mxu0
      %v1484 = vpop.f32.mrb[0].mxu0
      %v1485 = vadd.f32 %v1324, %v1484
      %v1486 = vpop.f32.mrb[0].mxu0
      %1487 = vmatprep.mubr.bf16.mxu0 0
      %1488 = vmatmul.mubr.bf16.gmra.mrb[0].mxu0 %v1050
      %v1489 = vpop.f32.mrb[0].mxu0
      %v1490 = vadd.f32 %v1329, %v1489
      %v1491 = vpop.f32.mrb[0].mxu0
      %v1492 = vpop.f32.mrb[0].mxu0
      %v1493 = vadd.f32 %v1332, %v1492
      %v1494 = vpop.f32.mrb[0].mxu0
      %1495 = vmatprep.mubr.bf16.mxu0 0
      %1496 = vmatmul.mubr.bf16.gmra.mrb[0].mxu0 %v1053
      %v1497 = vpop.f32.mrb[0].mxu0
      %v1498 = vadd.f32 %v1337, %v1497
      %v1499 = vpop.f32.mrb[0].mxu0
      %v1500 = vpop.f32.mrb[0].mxu0
      %v1501 = vadd.f32 %v1340, %v1500
      %v1502 = vpop.f32.mrb[0].mxu0
      %1503 = vmatprep.mubr.bf16.mxu0 0
      %1504 = vmatmul.mubr.bf16.gmra.mrb[0].mxu0 %v1056
      %v1505 = vpop.f32.mrb[0].mxu0
      %v1506 = vadd.f32 %v1345, %v1505
      %v1507 = vpop.f32.mrb[0].mxu0
      %v1508 = vpop.f32.mrb[0].mxu0
      %v1509 = vadd.f32 %v1348, %v1508
      %v1510 = vpop.f32.mrb[0].mxu0
      %1511 = vmatprep.mubr.bf16.mxu0 0
      %1512 = vmatmul.mubr.bf16.gmra.mrb[0].mxu0 %v1059
      %v1513 = vpop.f32.mrb[0].mxu0
      %v1514 = vadd.f32 %v1353, %v1513
      %v1515 = vpop.f32.mrb[0].mxu0
      %v1516 = vpop.f32.mrb[0].mxu0
      %v1517 = vadd.f32 %v1356, %v1516
      %v1518 = vpop.f32.mrb[0].mxu0
      %1519 = vmatprep.mubr.bf16.mxu0 0
      %1520 = vmatmul.mubr.bf16.gmra.mrb[0].mxu0 %v1062
      %v1521 = vpop.f32.mrb[0].mxu0
      %v1522 = vadd.f32 %v1361, %v1521
      %v1523 = vpop.f32.mrb[0].mxu0
      %v1524 = vpop.f32.mrb[0].mxu0
      %v1525 = vadd.f32 %v1364, %v1524
      %v1526 = vpop.f32.mrb[0].mxu0
      %1527 = vmatprep.mubr.bf16.mxu0 0
      %1528 = vmatmul.mubr.bf16.gmra.mrb[0].mxu0 %v1065
      %v1529 = vpop.f32.mrb[0].mxu0
      %v1530 = vadd.f32 %v1369, %v1529
      %v1531 = vpop.f32.mrb[0].mxu0
      %v1532 = vpop.f32.mrb[0].mxu0
      %v1533 = vadd.f32 %v1372, %v1532
      %v1534 = vpop.f32.mrb[0].mxu0
      %1535 = vmatprep.mubr.bf16.mxu0 0
      %1536 = vmatmul.mubr.bf16.gmra.mrb[0].mxu0 %v1068
      %v1537 = vpop.f32.mrb[0].mxu0
      %v1538 = vadd.f32 %v1377, %v1537
      %v1539 = vpop.f32.mrb[0].mxu0
      %v1540 = vpop.f32.mrb[0].mxu0
      %v1541 = vadd.f32 %v1380, %v1540
      %v1542 = vpop.f32.mrb[0].mxu0
      %1543 = vmatprep.mubr.bf16.mxu0 0
      %1544 = vmatmul.mubr.bf16.gmra.mrb[0].mxu0 %v1071
      %v1545 = vpop.f32.mrb[0].mxu0
      %v1546 = vadd.f32 %v1385, %v1545
      %v1547 = vpop.f32.mrb[0].mxu0
      %v1548 = vpop.f32.mrb[0].mxu0
      %v1549 = vadd.f32 %v1388, %v1548
      %v1550 = vpop.f32.mrb[0].mxu0
      %1551 = vmatprep.mubr.bf16.mxu0 0
      %1552 = vmatmul.mubr.bf16.gmra.mrb[0].mxu0 %v1074
      %v1553 = vpop.f32.mrb[0].mxu0
      %v1554 = vadd.f32 %v1393, %v1553
      %v1555 = vpop.f32.mrb[0].mxu0
      %v1556 = vpop.f32.mrb[0].mxu0
      %v1557 = vadd.f32 %v1396, %v1556
      %v1558 = vpop.f32.mrb[0].mxu0
      %1559 = vmatprep.mubr.bf16.mxu0 0
      %1560 = vmatmul.mubr.bf16.gmra.mrb[0].mxu0 %v1077
      %v1561 = vpop.f32.mrb[0].mxu0
      %v1562 = vadd.f32 %v1401, %v1561
      %v1563 = vpop.f32.mrb[0].mxu0
      %v1564 = vpop.f32.mrb[0].mxu0
      %v1565 = vadd.f32 %v1404, %v1564
      %v1566 = vpop.f32.mrb[0].mxu0
      %1567 = vmatprep.mubr.bf16.mxu0 0
      %1568 = vmatmul.mubr.bf16.gmra.mrb[0].mxu0 %v1080
      %v1569 = vpop.f32.mrb[0].mxu0
      %v1570 = vadd.f32 %v1409, %v1569
      %v1571 = vpop.f32.mrb[0].mxu0
      %v1572 = vpop.f32.mrb[0].mxu0
      %v1573 = vadd.f32 %v1412, %v1572
      %v1574 = vpop.f32.mrb[0].mxu0
      %1575 = vmatprep.mubr.bf16.mxu0 0
      %1576 = vmatmul.mubr.bf16.gmra.mrb[0].mxu0 %v1083
      %v1577 = vpop.f32.mrb[0].mxu0
      %v1578 = vadd.f32 %v1417, %v1577
      %v1579 = vpop.f32.mrb[0].mxu0
      %v1580 = vpop.f32.mrb[0].mxu0
      %v1581 = vadd.f32 %v1420, %v1580
      %v1582 = vpop.f32.mrb[0].mxu0
      %1583 = vmatprep.mubr.bf16.mxu0 0
      %1584 = vmatmul.mubr.bf16.gmra.mrb[0].mxu0 %v1086
      %v1585 = vpop.f32.mrb[0].mxu0
      %v1586 = vadd.f32 %v1425, %v1585
      %v1587 = vpop.f32.mrb[0].mxu0
      %v1588 = vpop.f32.mrb[0].mxu0
      %v1589 = vadd.f32 %v1428, %v1588
      %v1590 = vpop.f32.mrb[0].mxu0
      %1591 = vmatprep.mubr.bf16.mxu0 0
      %1592 = vmatmul.mubr.bf16.gmra.mrb[0].mxu0 %v1089
      %v1593 = vpop.f32.mrb[0].mxu0
      %v1594 = vadd.f32 %v1433, %v1593
      %v1595 = vpop.f32.mrb[0].mxu0
      %v1596 = vpop.f32.mrb[0].mxu0
      %v1597 = vadd.f32 %v1436, %v1596
      %v1598 = vpop.f32.mrb[0].mxu0
      %1599 = vmatprep.mubr.bf16.mxu0 0
      %1600 = vmatmul.mubr.bf16.gmra.mrb[0].mxu0 %v1092
      %v1601 = vpop.f32.mrb[0].mxu0
      %v1602 = vadd.f32 %v1441, %v1601
      %v1603 = vpop.f32.mrb[0].mxu0
      %v1604 = vpop.f32.mrb[0].mxu0
      %v1605 = vadd.f32 %v1444, %v1604
      %v1606 = vpop.f32.mrb[0].mxu0
      %1607 = vdwg.mxu0
      %v1656 = vunpack.c.l.b16 %v997
      %v1657 = vunpack.c.l.b16 %v998
      %v1658 = vunpack.c.l.b16 %v999
      %v1659 = vunpack.c.l.b16 %v1000
      %v1660 = vunpack.c.l.b16 %v1001
      %v1661 = vunpack.c.l.b16 %v1002
      %v1662 = vunpack.c.l.b16 %v1003
      %v1663 = vunpack.c.l.b16 %v1004
      %v1664 = vunpack.c.l.b16 %v1005
      %v1665 = vunpack.c.l.b16 %v1006
      %v1666 = vunpack.c.l.b16 %v1007
      %v1667 = vunpack.c.l.b16 %v1008
      %v1668 = vunpack.c.l.b16 %v1009
      %v1669 = vunpack.c.l.b16 %v1010
      %v1670 = vunpack.c.l.b16 %v1011
      %v1671 = vunpack.c.l.b16 %v1012
      %v1672 = vunpack.c.l.b16 %v1013
      %v1673 = vunpack.c.l.b16 %v1014
      %v1674 = vunpack.c.l.b16 %v1015
      %v1675 = vunpack.c.l.b16 %v1016
      %v1676 = vunpack.c.l.b16 %v1017
      %v1677 = vunpack.c.l.b16 %v1018
      %v1678 = vunpack.c.l.b16 %v1019
      %v1679 = vunpack.c.l.b16 %v1020
      %v1680 = vunpack.c.l.b16 %v1021
      %v1681 = vunpack.c.l.b16 %v1022
      %v1682 = vunpack.c.l.b16 %v1023
      %v1683 = vunpack.c.l.b16 %v1024
      %v1684 = vunpack.c.l.b16 %v1025
      %v1685 = vunpack.c.l.b16 %v1026
      %v1686 = vunpack.c.l.b16 %v1027
      %v1687 = vunpack.c.l.b16 %v1028
      %v1688 = vunpack.c.l.b16 %v1029
      %v1689 = vunpack.c.l.b16 %v1030
      %v1690 = vunpack.c.l.b16 %v1031
      %v1691 = vunpack.c.l.b16 %v1032
      %v1692 = vunpack.c.l.b16 %v1033
      %v1693 = vunpack.c.l.b16 %v1034
      %v1694 = vunpack.c.l.b16 %v1035
      %v1695 = vunpack.c.l.b16 %v1036
      %v1696 = vunpack.c.l.b16 %v1037
      %v1697 = vunpack.c.l.b16 %v1038
      %v1698 = vunpack.c.l.b16 %v1039
      %v1699 = vunpack.c.l.b16 %v1040
      %v1700 = vunpack.c.l.b16 %v1041
      %v1701 = vunpack.c.l.b16 %v1042
      %v1702 = vunpack.c.l.b16 %v1043
      %v1703 = vunpack.c.l.b16 %v1044
      %v1704 = vpack.c.b16 %v1657, %v1656
      %v1705 = vpack.c.b16 %v1659, %v1658
      %v1706 = vpack.c.b16 %v1661, %v1660
      %v1707 = vpack.c.b16 %v1663, %v1662
      %v1708 = vpack.c.b16 %v1665, %v1664
      %v1709 = vpack.c.b16 %v1667, %v1666
      %v1710 = vpack.c.b16 %v1669, %v1668
      %v1711 = vpack.c.b16 %v1671, %v1670
      %v1712 = vpack.c.b16 %v1673, %v1672
      %v1713 = vpack.c.b16 %v1675, %v1674
      %v1714 = vpack.c.b16 %v1677, %v1676
      %v1715 = vpack.c.b16 %v1679, %v1678
      %v1716 = vpack.c.b16 %v1681, %v1680
      %v1717 = vpack.c.b16 %v1683, %v1682
      %v1718 = vpack.c.b16 %v1685, %v1684
      %v1719 = vpack.c.b16 %v1687, %v1686
      %v1720 = vpack.c.b16 %v1689, %v1688
      %v1721 = vpack.c.b16 %v1691, %v1690
      %v1722 = vpack.c.b16 %v1693, %v1692
      %v1723 = vpack.c.b16 %v1695, %v1694
      %v1724 = vpack.c.b16 %v1697, %v1696
      %v1725 = vpack.c.b16 %v1699, %v1698
      %v1726 = vpack.c.b16 %v1701, %v1700
      %v1727 = vpack.c.b16 %v1703, %v1702
      %1752 = vmatprep.subr.bf16.mxu0 0
      %1753 = vmatpush1.bf16.msra.mxu0 %v1704
      %1754 = vmatprep.subr.bf16.mxu0 0
      %1755 = vmatpush1.bf16.msra.mxu0 %v1705
      %1756 = vmatprep.subr.bf16.mxu0 0
      %1757 = vmatpush1.bf16.msra.mxu0 %v1706
      %1758 = vmatprep.subr.bf16.mxu0 0
      %1759 = vmatpush1.bf16.msra.mxu0 %v1707
      %1760 = vmatprep.subr.bf16.mxu0 0
      %1761 = vmatpush1.bf16.msra.mxu0 %v1708
      %1762 = vmatprep.subr.bf16.mxu0 0
      %1763 = vmatpush1.bf16.msra.mxu0 %v1709
      %1764 = vmatprep.subr.bf16.mxu0 0
      %1765 = vmatpush1.bf16.msra.mxu0 %v1710
      %1766 = vmatprep.subr.bf16.mxu0 0
      %1767 = vmatpush1.bf16.msra.mxu0 %v1711
      %1768 = vmatprep.subr.bf16.mxu0 0
      %1769 = vmatpush1.bf16.msra.mxu0 %v1712
      %1770 = vmatprep.subr.bf16.mxu0 0
      %1771 = vmatpush1.bf16.msra.mxu0 %v1713
      %1772 = vmatprep.subr.bf16.mxu0 0
      %1773 = vmatpush1.bf16.msra.mxu0 %v1714
      %1774 = vmatprep.subr.bf16.mxu0 0
      %1775 = vmatpush1.bf16.msra.mxu0 %v1715
      %1776 = vmatprep.subr.bf16.mxu0 0
      %1777 = vmatpush1.bf16.msra.mxu0 %v1716
      %1778 = vmatprep.subr.bf16.mxu0 0
      %1779 = vmatpush1.bf16.msra.mxu0 %v1717
      %1780 = vmatprep.subr.bf16.mxu0 0
      %1781 = vmatpush1.bf16.msra.mxu0 %v1718
      %1782 = vmatprep.subr.bf16.mxu0 0
      %1783 = vmatpush1.bf16.msra.mxu0 %v1719
      %1784 = vmatprep.mubr.bf16.mxu0 %v950
      %1785 = vmatmul.mubr.bf16.gmra.mrb[0].mxu0 %v949
      %v1786 = vpop.f32.mrb[0].mxu0
      %v1787 = vadd.f32 %v1482, %v1786
      %v1788 = vpop.f32.mrb[0].mxu0
      %v1789 = vpop.f32.mrb[0].mxu0
      %v1790 = vadd.f32 %v1485, %v1789
      %v1791 = vpop.f32.mrb[0].mxu0
      %1792 = vmatprep.mubr.bf16.mxu0 %v953
      %1793 = vmatmul.mubr.bf16.gmra.mrb[0].mxu0 %v952
      %v1794 = vpop.f32.mrb[0].mxu0
      %v1795 = vadd.f32 %v1490, %v1794
      %v1796 = vpop.f32.mrb[0].mxu0
      %v1797 = vpop.f32.mrb[0].mxu0
      %v1798 = vadd.f32 %v1493, %v1797
      %v1799 = vpop.f32.mrb[0].mxu0
      %1800 = vmatprep.mubr.bf16.mxu0 %v956
      %1801 = vmatmul.mubr.bf16.gmra.mrb[0].mxu0 %v955
      %v1802 = vpop.f32.mrb[0].mxu0
      %v1803 = vadd.f32 %v1498, %v1802
      %v1804 = vpop.f32.mrb[0].mxu0
      %v1805 = vpop.f32.mrb[0].mxu0
      %v1806 = vadd.f32 %v1501, %v1805
      %v1807 = vpop.f32.mrb[0].mxu0
      %1808 = vmatprep.mubr.bf16.mxu0 %v959
      %1809 = vmatmul.mubr.bf16.gmra.mrb[0].mxu0 %v958
      %v1810 = vpop.f32.mrb[0].mxu0
      %v1811 = vadd.f32 %v1506, %v1810
      %v1812 = vpop.f32.mrb[0].mxu0
      %v1813 = vpop.f32.mrb[0].mxu0
      %v1814 = vadd.f32 %v1509, %v1813
      %v1815 = vpop.f32.mrb[0].mxu0
      %1816 = vmatprep.mubr.bf16.mxu0 %v962
      %1817 = vmatmul.mubr.bf16.gmra.mrb[0].mxu0 %v961
      %v1818 = vpop.f32.mrb[0].mxu0
      %v1819 = vadd.f32 %v1514, %v1818
      %v1820 = vpop.f32.mrb[0].mxu0
      %v1821 = vpop.f32.mrb[0].mxu0
      %v1822 = vadd.f32 %v1517, %v1821
      %v1823 = vpop.f32.mrb[0].mxu0
      %1824 = vmatprep.mubr.bf16.mxu0 %v965
      %1825 = vmatmul.mubr.bf16.gmra.mrb[0].mxu0 %v964
      %v1826 = vpop.f32.mrb[0].mxu0
      %v1827 = vadd.f32 %v1522, %v1826
      %v1828 = vpop.f32.mrb[0].mxu0
      %v1829 = vpop.f32.mrb[0].mxu0
      %v1830 = vadd.f32 %v1525, %v1829
      %v1831 = vpop.f32.mrb[0].mxu0
      %1832 = vmatprep.mubr.bf16.mxu0 %v968
      %1833 = vmatmul.mubr.bf16.gmra.mrb[0].mxu0 %v967
      %v1834 = vpop.f32.mrb[0].mxu0
      %v1835 = vadd.f32 %v1530, %v1834
      %v1836 = vpop.f32.mrb[0].mxu0
      %v1837 = vpop.f32.mrb[0].mxu0
      %v1838 = vadd.f32 %v1533, %v1837
      %v1839 = vpop.f32.mrb[0].mxu0
      %1840 = vmatprep.mubr.bf16.mxu0 %v971
      %1841 = vmatmul.mubr.bf16.gmra.mrb[0].mxu0 %v970
      %v1842 = vpop.f32.mrb[0].mxu0
      %v1843 = vadd.f32 %v1538, %v1842
      %v1844 = vpop.f32.mrb[0].mxu0
      %v1845 = vpop.f32.mrb[0].mxu0
      %v1846 = vadd.f32 %v1541, %v1845
      %v1847 = vpop.f32.mrb[0].mxu0
      %1848 = vmatprep.mubr.bf16.mxu0 %v974
      %1849 = vmatmul.mubr.bf16.gmra.mrb[0].mxu0 %v973
      %v1850 = vpop.f32.mrb[0].mxu0
      %v1851 = vadd.f32 %v1546, %v1850
      %v1852 = vpop.f32.mrb[0].mxu0
      %v1853 = vpop.f32.mrb[0].mxu0
      %v1854 = vadd.f32 %v1549, %v1853
      %v1855 = vpop.f32.mrb[0].mxu0
      %1856 = vmatprep.mubr.bf16.mxu0 %v977
      %1857 = vmatmul.mubr.bf16.gmra.mrb[0].mxu0 %v976
      %v1858 = vpop.f32.mrb[0].mxu0
      %v1859 = vadd.f32 %v1554, %v1858
      %v1860 = vpop.f32.mrb[0].mxu0
      %v1861 = vpop.f32.mrb[0].mxu0
      %v1862 = vadd.f32 %v1557, %v1861
      %v1863 = vpop.f32.mrb[0].mxu0
      %1864 = vmatprep.mubr.bf16.mxu0 %v980
      %1865 = vmatmul.mubr.bf16.gmra.mrb[0].mxu0 %v979
      %v1866 = vpop.f32.mrb[0].mxu0
      %v1867 = vadd.f32 %v1562, %v1866
      %v1868 = vpop.f32.mrb[0].mxu0
      %v1869 = vpop.f32.mrb[0].mxu0
      %v1870 = vadd.f32 %v1565, %v1869
      %v1871 = vpop.f32.mrb[0].mxu0
      %1872 = vmatprep.mubr.bf16.mxu0 %v983
      %1873 = vmatmul.mubr.bf16.gmra.mrb[0].mxu0 %v982
      %v1874 = vpop.f32.mrb[0].mxu0
      %v1875 = vadd.f32 %v1570, %v1874
      %v1876 = vpop.f32.mrb[0].mxu0
      %v1877 = vpop.f32.mrb[0].mxu0
      %v1878 = vadd.f32 %v1573, %v1877
      %v1879 = vpop.f32.mrb[0].mxu0
      %1880 = vmatprep.mubr.bf16.mxu0 %v986
      %1881 = vmatmul.mubr.bf16.gmra.mrb[0].mxu0 %v985
      %v1882 = vpop.f32.mrb[0].mxu0
      %v1883 = vadd.f32 %v1578, %v1882
      %v1884 = vpop.f32.mrb[0].mxu0
      %v1885 = vpop.f32.mrb[0].mxu0
      %v1886 = vadd.f32 %v1581, %v1885
      %v1887 = vpop.f32.mrb[0].mxu0
      %1888 = vmatprep.mubr.bf16.mxu0 %v989
      %1889 = vmatmul.mubr.bf16.gmra.mrb[0].mxu0 %v988
      %v1890 = vpop.f32.mrb[0].mxu0
      %v1891 = vadd.f32 %v1586, %v1890
      %v1892 = vpop.f32.mrb[0].mxu0
      %v1893 = vpop.f32.mrb[0].mxu0
      %v1894 = vadd.f32 %v1589, %v1893
      %v1895 = vpop.f32.mrb[0].mxu0
      %1896 = vmatprep.mubr.bf16.mxu0 %v992
      %1897 = vmatmul.mubr.bf16.gmra.mrb[0].mxu0 %v991
      %v1898 = vpop.f32.mrb[0].mxu0
      %v1899 = vadd.f32 %v1594, %v1898
      %v1900 = vpop.f32.mrb[0].mxu0
      %v1901 = vpop.f32.mrb[0].mxu0
      %v1902 = vadd.f32 %v1597, %v1901
      %v1903 = vpop.f32.mrb[0].mxu0
      %1904 = vmatprep.mubr.bf16.mxu0 %v995
      %1905 = vmatmul.mubr.bf16.gmra.mrb[0].mxu0 %v994
      %v1906 = vpop.f32.mrb[0].mxu0
      %v1907 = vadd.f32 %v1602, %v1906
      %v1908 = vpop.f32.mrb[0].mxu0
      %v1909 = vpop.f32.mrb[0].mxu0
      %v1910 = vadd.f32 %v1605, %v1909
      %v1911 = vpop.f32.mrb[0].mxu0
      %1912 = vdwg.mxu0
      %1913 = vmatprep.subr.bf16.mxu0 0
      %1914 = vmatpush1.bf16.msra.mxu0 %v1720
      %1915 = vmatprep.subr.bf16.mxu0 0
      %1916 = vmatpush1.bf16.msra.mxu0 %v1721
      %1917 = vmatprep.subr.bf16.mxu0 0
      %1918 = vmatpush1.bf16.msra.mxu0 %v1722
      %1919 = vmatprep.subr.bf16.mxu0 0
      %1920 = vmatpush1.bf16.msra.mxu0 %v1723
      %1921 = vmatprep.subr.bf16.mxu0 0
      %1922 = vmatpush1.bf16.msra.mxu0 %v1724
      %1923 = vmatprep.subr.bf16.mxu0 0
      %1924 = vmatpush1.bf16.msra.mxu0 %v1725
      %1925 = vmatprep.subr.bf16.mxu0 0
      %1926 = vmatpush1.bf16.msra.mxu0 %v1726
      %1927 = vmatprep.subr.bf16.mxu0 0
      %1928 = vmatpush1.bf16.msra.mxu0 %v1727
      %1929 = vmatprep.subr.bf16.mxu0 0
      %1930 = vmatpush1.bf16.msra.mxu0 0
      %1931 = vmatprep.subr.bf16.mxu0 0
      %1932 = vmatpush1.bf16.msra.mxu0 0
      %1933 = vmatprep.subr.bf16.mxu0 0
      %1934 = vmatpush1.bf16.msra.mxu0 0
      %1935 = vmatprep.subr.bf16.mxu0 0
      %1936 = vmatpush1.bf16.msra.mxu0 0
      %1937 = vmatprep.subr.bf16.mxu0 0
      %1938 = vmatpush1.bf16.msra.mxu0 0
      %1939 = vmatprep.subr.bf16.mxu0 0
      %1940 = vmatpush1.bf16.msra.mxu0 0
      %1941 = vmatprep.subr.bf16.mxu0 0
      %1942 = vmatpush1.bf16.msra.mxu0 0
      %1943 = vmatprep.subr.bf16.mxu0 0
      %1944 = vmatpush1.bf16.msra.mxu0 0
      %1945 = vmatprep.mubr.bf16.mxu0 0
      %1946 = vmatmul.mubr.bf16.gmra.mrb[0].mxu0 %v951
      %v1947 = vpop.f32.mrb[0].mxu0
      %v1948 = vadd.f32 %v1787, %v1947
      %v1949 = vpop.f32.mrb[0].mxu0
      %v1950 = vpop.f32.mrb[0].mxu0
      %v1951 = vadd.f32 %v1790, %v1950
      %v1952 = vpop.f32.mrb[0].mxu0
      %1953 = vmatprep.mubr.bf16.mxu0 0
      %1954 = vmatmul.mubr.bf16.gmra.mrb[0].mxu0 %v954
      %v1955 = vpop.f32.mrb[0].mxu0
      %v1956 = vadd.f32 %v1795, %v1955
      %v1957 = vpop.f32.mrb[0].mxu0
      %v1958 = vpop.f32.mrb[0].mxu0
      %v1959 = vadd.f32 %v1798, %v1958
      %v1960 = vpop.f32.mrb[0].mxu0
      %1961 = vmatprep.mubr.bf16.mxu0 0
      %1962 = vmatmul.mubr.bf16.gmra.mrb[0].mxu0 %v957
      %v1963 = vpop.f32.mrb[0].mxu0
      %v1964 = vadd.f32 %v1803, %v1963
      %v1965 = vpop.f32.mrb[0].mxu0
      %v1966 = vpop.f32.mrb[0].mxu0
      %v1967 = vadd.f32 %v1806, %v1966
      %v1968 = vpop.f32.mrb[0].mxu0
      %1969 = vmatprep.mubr.bf16.mxu0 0
      %1970 = vmatmul.mubr.bf16.gmra.mrb[0].mxu0 %v960
      %v1971 = vpop.f32.mrb[0].mxu0
      %v1972 = vadd.f32 %v1811, %v1971
      %v1973 = vpop.f32.mrb[0].mxu0
      %v1974 = vpop.f32.mrb[0].mxu0
      %v1975 = vadd.f32 %v1814, %v1974
      %v1976 = vpop.f32.mrb[0].mxu0
      %1977 = vmatprep.mubr.bf16.mxu0 0
      %1978 = vmatmul.mubr.bf16.gmra.mrb[0].mxu0 %v963
      %v1979 = vpop.f32.mrb[0].mxu0
      %v1980 = vadd.f32 %v1819, %v1979
      %v1981 = vpop.f32.mrb[0].mxu0
      %v1982 = vpop.f32.mrb[0].mxu0
      %v1983 = vadd.f32 %v1822, %v1982
      %v1984 = vpop.f32.mrb[0].mxu0
      %1985 = vmatprep.mubr.bf16.mxu0 0
      %1986 = vmatmul.mubr.bf16.gmra.mrb[0].mxu0 %v966
      %v1987 = vpop.f32.mrb[0].mxu0
      %v1988 = vadd.f32 %v1827, %v1987
      %v1989 = vpop.f32.mrb[0].mxu0
      %v1990 = vpop.f32.mrb[0].mxu0
      %v1991 = vadd.f32 %v1830, %v1990
      %v1992 = vpop.f32.mrb[0].mxu0
      %1993 = vmatprep.mubr.bf16.mxu0 0
      %1994 = vmatmul.mubr.bf16.gmra.mrb[0].mxu0 %v969
      %v1995 = vpop.f32.mrb[0].mxu0
      %v1996 = vadd.f32 %v1835, %v1995
      %v1997 = vpop.f32.mrb[0].mxu0
      %v1998 = vpop.f32.mrb[0].mxu0
      %v1999 = vadd.f32 %v1838, %v1998
      %v2000 = vpop.f32.mrb[0].mxu0
      %2001 = vmatprep.mubr.bf16.mxu0 0
      %2002 = vmatmul.mubr.bf16.gmra.mrb[0].mxu0 %v972
      %v2003 = vpop.f32.mrb[0].mxu0
      %v2004 = vadd.f32 %v1843, %v2003
      %v2005 = vpop.f32.mrb[0].mxu0
      %v2006 = vpop.f32.mrb[0].mxu0
      %v2007 = vadd.f32 %v1846, %v2006
      %v2008 = vpop.f32.mrb[0].mxu0
      %2009 = vmatprep.mubr.bf16.mxu0 0
      %2010 = vmatmul.mubr.bf16.gmra.mrb[0].mxu0 %v975
      %v2011 = vpop.f32.mrb[0].mxu0
      %v2012 = vadd.f32 %v1851, %v2011
      %v2013 = vpop.f32.mrb[0].mxu0
      %v2014 = vpop.f32.mrb[0].mxu0
      %v2015 = vadd.f32 %v1854, %v2014
      %v2016 = vpop.f32.mrb[0].mxu0
      %2017 = vmatprep.mubr.bf16.mxu0 0
      %2018 = vmatmul.mubr.bf16.gmra.mrb[0].mxu0 %v978
      %v2019 = vpop.f32.mrb[0].mxu0
      %v2020 = vadd.f32 %v1859, %v2019
      %v2021 = vpop.f32.mrb[0].mxu0
      %v2022 = vpop.f32.mrb[0].mxu0
      %v2023 = vadd.f32 %v1862, %v2022
      %v2024 = vpop.f32.mrb[0].mxu0
      %2025 = vmatprep.mubr.bf16.mxu0 0
      %2026 = vmatmul.mubr.bf16.gmra.mrb[0].mxu0 %v981
      %v2027 = vpop.f32.mrb[0].mxu0
      %v2028 = vadd.f32 %v1867, %v2027
      %v2029 = vpop.f32.mrb[0].mxu0
      %v2030 = vpop.f32.mrb[0].mxu0
      %v2031 = vadd.f32 %v1870, %v2030
      %v2032 = vpop.f32.mrb[0].mxu0
      %2033 = vmatprep.mubr.bf16.mxu0 0
      %2034 = vmatmul.mubr.bf16.gmra.mrb[0].mxu0 %v984
      %v2035 = vpop.f32.mrb[0].mxu0
      %v2036 = vadd.f32 %v1875, %v2035
      %v2037 = vpop.f32.mrb[0].mxu0
      %v2038 = vpop.f32.mrb[0].mxu0
      %v2039 = vadd.f32 %v1878, %v2038
      %v2040 = vpop.f32.mrb[0].mxu0
      %2041 = vmatprep.mubr.bf16.mxu0 0
      %2042 = vmatmul.mubr.bf16.gmra.mrb[0].mxu0 %v987
      %v2043 = vpop.f32.mrb[0].mxu0
      %v2044 = vadd.f32 %v1883, %v2043
      %v2045 = vpop.f32.mrb[0].mxu0
      %v2046 = vpop.f32.mrb[0].mxu0
      %v2047 = vadd.f32 %v1886, %v2046
      %v2048 = vpop.f32.mrb[0].mxu0
      %2049 = vmatprep.mubr.bf16.mxu0 0
      %2050 = vmatmul.mubr.bf16.gmra.mrb[0].mxu0 %v990
      %v2051 = vpop.f32.mrb[0].mxu0
      %v2052 = vadd.f32 %v1891, %v2051
      %v2053 = vpop.f32.mrb[0].mxu0
      %v2054 = vpop.f32.mrb[0].mxu0
      %v2055 = vadd.f32 %v1894, %v2054
      %v2056 = vpop.f32.mrb[0].mxu0
      %2057 = vmatprep.mubr.bf16.mxu0 0
      %2058 = vmatmul.mubr.bf16.gmra.mrb[0].mxu0 %v993
      %v2059 = vpop.f32.mrb[0].mxu0
      %v2060 = vadd.f32 %v1899, %v2059
      %v2061 = vpop.f32.mrb[0].mxu0
      %v2062 = vpop.f32.mrb[0].mxu0
      %v2063 = vadd.f32 %v1902, %v2062
      %v2064 = vpop.f32.mrb[0].mxu0
      %2065 = vmatprep.mubr.bf16.mxu0 0
      %2066 = vmatmul.mubr.bf16.gmra.mrb[0].mxu0 %v996
      %v2067 = vpop.f32.mrb[0].mxu0
      %v2068 = vadd.f32 %v1907, %v2067
      %v2069 = vpop.f32.mrb[0].mxu0
      %v2070 = vpop.f32.mrb[0].mxu0
      %v2071 = vadd.f32 %v1910, %v2070
      %v2072 = vpop.f32.mrb[0].mxu0
      %2073 = vdwg.mxu0
      %s2074 = scalar_lea.vmem [#allocation2], 48
      %v2075 = vld [vmem:[%s2074] sm:$0xff]
      %v2076 = vld [vmem:[%s2074 + $0x8] sm:$0xff]
      %v2077 = vld [vmem:[%s2074 + $0x10] sm:$0xff]
      %v2078 = vld [vmem:[%s2074 + $0x18] sm:$0xff]
      %v2079 = vld [vmem:[%s2074 + $0x20] sm:$0xff]
      %v2080 = vld [vmem:[%s2074 + $0x28] sm:$0xff]
      %v2081 = vld [vmem:[%s2074 + $0x30] sm:$0xff]
      %v2082 = vld [vmem:[%s2074 + $0x38] sm:$0xff]
      %v2083 = vld [vmem:[%s2074 + $0x40] sm:$0xff]
      %v2084 = vld [vmem:[%s2074 + $0x48] sm:$0xff]
      %v2085 = vld [vmem:[%s2074 + $0x50] sm:$0xff]
      %v2086 = vld [vmem:[%s2074 + $0x58] sm:$0xff]
      %v2087 = vld [vmem:[%s2074 + $0x60] sm:$0xff]
      %v2088 = vld [vmem:[%s2074 + $0x68] sm:$0xff]
      %v2089 = vld [vmem:[%s2074 + $0x70] sm:$0xff]
      %v2090 = vld [vmem:[%s2074 + $0x78] sm:$0xff]
      %v2091 = vld [vmem:[%s2074 + $0x80] sm:$0xff]
      %v2092 = vld [vmem:[%s2074 + $0x88] sm:$0xff]
      %v2093 = vld [vmem:[%s2074 + $0x90] sm:$0xff]
      %v2094 = vld [vmem:[%s2074 + $0x98] sm:$0xff]
      %v2095 = vld [vmem:[%s2074 + $0xa0] sm:$0xff]
      %v2096 = vld [vmem:[%s2074 + $0xa8] sm:$0xff]
      %v2097 = vld [vmem:[%s2074 + $0xb0] sm:$0xff]
      %v2098 = vld [vmem:[%s2074 + $0xb8] sm:$0xff]
      %v2099 = vld [vmem:[%s2074 + $0xc0] sm:$0xff]
      %v2100 = vld [vmem:[%s2074 + $0xc8] sm:$0xff]
      %v2101 = vld [vmem:[%s2074 + $0xd0] sm:$0xff]
      %v2102 = vld [vmem:[%s2074 + $0xd8] sm:$0xff]
      %v2103 = vld [vmem:[%s2074 + $0xe0] sm:$0xff]
      %v2104 = vld [vmem:[%s2074 + $0xe8] sm:$0xff]
      %v2105 = vld [vmem:[%s2074 + $0xf0] sm:$0xff]
      %v2106 = vld [vmem:[%s2074 + $0xf8] sm:$0xff]
      %v2107 = vld [vmem:[%s2074 + $0x100] sm:$0xff]
      %v2108 = vld [vmem:[%s2074 + $0x108] sm:$0xff]
      %v2109 = vld [vmem:[%s2074 + $0x110] sm:$0xff]
      %v2110 = vld [vmem:[%s2074 + $0x118] sm:$0xff]
      %v2111 = vld [vmem:[%s2074 + $0x120] sm:$0xff]
      %v2112 = vld [vmem:[%s2074 + $0x128] sm:$0xff]
      %v2113 = vld [vmem:[%s2074 + $0x130] sm:$0xff]
      %v2114 = vld [vmem:[%s2074 + $0x138] sm:$0xff]
      %v2115 = vld [vmem:[%s2074 + $0x140] sm:$0xff]
      %v2116 = vld [vmem:[%s2074 + $0x148] sm:$0xff]
      %v2117 = vld [vmem:[%s2074 + $0x150] sm:$0xff]
      %v2118 = vld [vmem:[%s2074 + $0x158] sm:$0xff]
      %v2119 = vld [vmem:[%s2074 + $0x160] sm:$0xff]
      %v2120 = vld [vmem:[%s2074 + $0x168] sm:$0xff]
      %v2121 = vld [vmem:[%s2074 + $0x170] sm:$0xff]
      %v2122 = vld [vmem:[%s2074 + $0x178] sm:$0xff]
      %s2123 = scalar_lea.vmem %s3, 384
      %v2124 = vld [vmem:[%s2123] sm:$0xf]
      %v2125 = vld [vmem:[%s2123 + $0x4] sm:$0xf]
      %v2126 = vld [vmem:[%s2123 + $0x8] sm:$0xf]
      %v2127 = vld [vmem:[%s2123 + $0xc] sm:$0xf]
      %v2128 = vld [vmem:[%s2123 + $0x10] sm:$0xf]
      %v2129 = vld [vmem:[%s2123 + $0x14] sm:$0xf]
      %v2130 = vld [vmem:[%s2123 + $0x18] sm:$0xf]
      %v2131 = vld [vmem:[%s2123 + $0x1c] sm:$0xf]
      %v2132 = vld [vmem:[%s2123 + $0x20] sm:$0xf]
      %v2133 = vld [vmem:[%s2123 + $0x24] sm:$0xf]
      %v2134 = vld [vmem:[%s2123 + $0x28] sm:$0xf]
      %v2135 = vld [vmem:[%s2123 + $0x2c] sm:$0xf]
      %v2136 = vld [vmem:[%s2123 + $0x30] sm:$0xf]
      %v2137 = vld [vmem:[%s2123 + $0x34] sm:$0xf]
      %v2138 = vld [vmem:[%s2123 + $0x38] sm:$0xf]
      %v2139 = vld [vmem:[%s2123 + $0x3c] sm:$0xf]
      %v2140 = vld [vmem:[%s2123 + $0x40] sm:$0xf]
      %v2141 = vld [vmem:[%s2123 + $0x44] sm:$0xf]
      %v2142 = vld [vmem:[%s2123 + $0x48] sm:$0xf]
      %v2143 = vld [vmem:[%s2123 + $0x4c] sm:$0xf]
      %v2144 = vld [vmem:[%s2123 + $0x50] sm:$0xf]
      %v2145 = vld [vmem:[%s2123 + $0x54] sm:$0xf]
      %v2146 = vld [vmem:[%s2123 + $0x58] sm:$0xf]
      %v2147 = vld [vmem:[%s2123 + $0x5c] sm:$0xf]
      %v2148 = vld [vmem:[%s2123 + $0x60] sm:$0xf]
      %v2149 = vld [vmem:[%s2123 + $0x64] sm:$0xf]
      %v2150 = vld [vmem:[%s2123 + $0x68] sm:$0xf]
      %v2151 = vld [vmem:[%s2123 + $0x6c] sm:$0xf]
      %v2152 = vld [vmem:[%s2123 + $0x70] sm:$0xf]
      %v2153 = vld [vmem:[%s2123 + $0x74] sm:$0xf]
      %v2154 = vld [vmem:[%s2123 + $0x78] sm:$0xf]
      %v2155 = vld [vmem:[%s2123 + $0x7c] sm:$0xf]
      %v2156 = vld [vmem:[%s2123 + $0x80] sm:$0xf]
      %v2157 = vld [vmem:[%s2123 + $0x84] sm:$0xf]
      %v2158 = vld [vmem:[%s2123 + $0x88] sm:$0xf]
      %v2159 = vld [vmem:[%s2123 + $0x8c] sm:$0xf]
      %v2160 = vld [vmem:[%s2123 + $0x90] sm:$0xf]
      %v2161 = vld [vmem:[%s2123 + $0x94] sm:$0xf]
      %v2162 = vld [vmem:[%s2123 + $0x98] sm:$0xf]
      %v2163 = vld [vmem:[%s2123 + $0x9c] sm:$0xf]
      %v2164 = vld [vmem:[%s2123 + $0xa0] sm:$0xf]
      %v2165 = vld [vmem:[%s2123 + $0xa4] sm:$0xf]
      %v2166 = vld [vmem:[%s2123 + $0xa8] sm:$0xf]
      %v2167 = vld [vmem:[%s2123 + $0xac] sm:$0xf]
      %v2168 = vld [vmem:[%s2123 + $0xb0] sm:$0xf]
      %v2169 = vld [vmem:[%s2123 + $0xb4] sm:$0xf]
      %v2170 = vld [vmem:[%s2123 + $0xb8] sm:$0xf]
      %v2171 = vld [vmem:[%s2123 + $0xbc] sm:$0xf]
      %v2220 = vunpack.c.l.b16 %v2124
      %v2221 = vunpack.c.l.b16 %v2125
      %v2222 = vunpack.c.l.b16 %v2126
      %v2223 = vunpack.c.l.b16 %v2127
      %v2224 = vunpack.c.l.b16 %v2128
      %v2225 = vunpack.c.l.b16 %v2129
      %v2226 = vunpack.c.l.b16 %v2130
      %v2227 = vunpack.c.l.b16 %v2131
      %v2228 = vunpack.c.l.b16 %v2132
      %v2229 = vunpack.c.l.b16 %v2133
      %v2230 = vunpack.c.l.b16 %v2134
      %v2231 = vunpack.c.l.b16 %v2135
      %v2232 = vunpack.c.l.b16 %v2136
      %v2233 = vunpack.c.l.b16 %v2137
      %v2234 = vunpack.c.l.b16 %v2138
      %v2235 = vunpack.c.l.b16 %v2139
      %v2236 = vunpack.c.l.b16 %v2140
      %v2237 = vunpack.c.l.b16 %v2141
      %v2238 = vunpack.c.l.b16 %v2142
      %v2239 = vunpack.c.l.b16 %v2143
      %v2240 = vunpack.c.l.b16 %v2144
      %v2241 = vunpack.c.l.b16 %v2145
      %v2242 = vunpack.c.l.b16 %v2146
      %v2243 = vunpack.c.l.b16 %v2147
      %v2244 = vunpack.c.l.b16 %v2148
      %v2245 = vunpack.c.l.b16 %v2149
      %v2246 = vunpack.c.l.b16 %v2150
      %v2247 = vunpack.c.l.b16 %v2151
      %v2248 = vunpack.c.l.b16 %v2152
      %v2249 = vunpack.c.l.b16 %v2153
      %v2250 = vunpack.c.l.b16 %v2154
      %v2251 = vunpack.c.l.b16 %v2155
      %v2252 = vunpack.c.l.b16 %v2156
      %v2253 = vunpack.c.l.b16 %v2157
      %v2254 = vunpack.c.l.b16 %v2158
      %v2255 = vunpack.c.l.b16 %v2159
      %v2256 = vunpack.c.l.b16 %v2160
      %v2257 = vunpack.c.l.b16 %v2161
      %v2258 = vunpack.c.l.b16 %v2162
      %v2259 = vunpack.c.l.b16 %v2163
      %v2260 = vunpack.c.l.b16 %v2164
      %v2261 = vunpack.c.l.b16 %v2165
      %v2262 = vunpack.c.l.b16 %v2166
      %v2263 = vunpack.c.l.b16 %v2167
      %v2264 = vunpack.c.l.b16 %v2168
      %v2265 = vunpack.c.l.b16 %v2169
      %v2266 = vunpack.c.l.b16 %v2170
      %v2267 = vunpack.c.l.b16 %v2171
      %v2268 = vpack.c.b16 %v2221, %v2220
      %v2269 = vpack.c.b16 %v2223, %v2222
      %v2270 = vpack.c.b16 %v2225, %v2224
      %v2271 = vpack.c.b16 %v2227, %v2226
      %v2272 = vpack.c.b16 %v2229, %v2228
      %v2273 = vpack.c.b16 %v2231, %v2230
      %v2274 = vpack.c.b16 %v2233, %v2232
      %v2275 = vpack.c.b16 %v2235, %v2234
      %v2276 = vpack.c.b16 %v2237, %v2236
      %v2277 = vpack.c.b16 %v2239, %v2238
      %v2278 = vpack.c.b16 %v2241, %v2240
      %v2279 = vpack.c.b16 %v2243, %v2242
      %v2280 = vpack.c.b16 %v2245, %v2244
      %v2281 = vpack.c.b16 %v2247, %v2246
      %v2282 = vpack.c.b16 %v2249, %v2248
      %v2283 = vpack.c.b16 %v2251, %v2250
      %v2284 = vpack.c.b16 %v2253, %v2252
      %v2285 = vpack.c.b16 %v2255, %v2254
      %v2286 = vpack.c.b16 %v2257, %v2256
      %v2287 = vpack.c.b16 %v2259, %v2258
      %v2288 = vpack.c.b16 %v2261, %v2260
      %v2289 = vpack.c.b16 %v2263, %v2262
      %v2290 = vpack.c.b16 %v2265, %v2264
      %v2291 = vpack.c.b16 %v2267, %v2266
      %2316 = vmatprep.subr.bf16.mxu0 0
      %2317 = vmatpush1.bf16.msra.mxu0 %v2268
      %2318 = vmatprep.subr.bf16.mxu0 0
      %2319 = vmatpush1.bf16.msra.mxu0 %v2269
      %2320 = vmatprep.subr.bf16.mxu0 0
      %2321 = vmatpush1.bf16.msra.mxu0 %v2270
      %2322 = vmatprep.subr.bf16.mxu0 0
      %2323 = vmatpush1.bf16.msra.mxu0 %v2271
      %2324 = vmatprep.subr.bf16.mxu0 0
      %2325 = vmatpush1.bf16.msra.mxu0 %v2272
      %2326 = vmatprep.subr.bf16.mxu0 0
      %2327 = vmatpush1.bf16.msra.mxu0 %v2273
      %2328 = vmatprep.subr.bf16.mxu0 0
      %2329 = vmatpush1.bf16.msra.mxu0 %v2274
      %2330 = vmatprep.subr.bf16.mxu0 0
      %2331 = vmatpush1.bf16.msra.mxu0 %v2275
      %2332 = vmatprep.subr.bf16.mxu0 0
      %2333 = vmatpush1.bf16.msra.mxu0 %v2276
      %2334 = vmatprep.subr.bf16.mxu0 0
      %2335 = vmatpush1.bf16.msra.mxu0 %v2277
      %2336 = vmatprep.subr.bf16.mxu0 0
      %2337 = vmatpush1.bf16.msra.mxu0 %v2278
      %2338 = vmatprep.subr.bf16.mxu0 0
      %2339 = vmatpush1.bf16.msra.mxu0 %v2279
      %2340 = vmatprep.subr.bf16.mxu0 0
      %2341 = vmatpush1.bf16.msra.mxu0 %v2280
      %2342 = vmatprep.subr.bf16.mxu0 0
      %2343 = vmatpush1.bf16.msra.mxu0 %v2281
      %2344 = vmatprep.subr.bf16.mxu0 0
      %2345 = vmatpush1.bf16.msra.mxu0 %v2282
      %2346 = vmatprep.subr.bf16.mxu0 0
      %2347 = vmatpush1.bf16.msra.mxu0 %v2283
      %2348 = vmatprep.mubr.bf16.mxu0 %v2076
      %2349 = vmatmul.mubr.bf16.gmra.mrb[0].mxu0 %v2075
      %v2350 = vpop.f32.mrb[0].mxu0
      %v2351 = vadd.f32 0.0, %v2350
      %v2352 = vpop.f32.mrb[0].mxu0
      %v2353 = vpop.f32.mrb[0].mxu0
      %v2354 = vadd.f32 0.0, %v2353
      %v2355 = vpop.f32.mrb[0].mxu0
      %2356 = vmatprep.mubr.bf16.mxu0 %v2079
      %2357 = vmatmul.mubr.bf16.gmra.mrb[0].mxu0 %v2078
      %v2358 = vpop.f32.mrb[0].mxu0
      %v2359 = vadd.f32 0.0, %v2358
      %v2360 = vpop.f32.mrb[0].mxu0
      %v2361 = vpop.f32.mrb[0].mxu0
      %v2362 = vadd.f32 0.0, %v2361
      %v2363 = vpop.f32.mrb[0].mxu0
      %2364 = vmatprep.mubr.bf16.mxu0 %v2082
      %2365 = vmatmul.mubr.bf16.gmra.mrb[0].mxu0 %v2081
      %v2366 = vpop.f32.mrb[0].mxu0
      %v2367 = vadd.f32 0.0, %v2366
      %v2368 = vpop.f32.mrb[0].mxu0
      %v2369 = vpop.f32.mrb[0].mxu0
      %v2370 = vadd.f32 0.0, %v2369
      %v2371 = vpop.f32.mrb[0].mxu0
      %2372 = vmatprep.mubr.bf16.mxu0 %v2085
      %2373 = vmatmul.mubr.bf16.gmra.mrb[0].mxu0 %v2084
      %v2374 = vpop.f32.mrb[0].mxu0
      %v2375 = vadd.f32 0.0, %v2374
      %v2376 = vpop.f32.mrb[0].mxu0
      %v2377 = vpop.f32.mrb[0].mxu0
      %v2378 = vadd.f32 0.0, %v2377
      %v2379 = vpop.f32.mrb[0].mxu0
      %2380 = vmatprep.mubr.bf16.mxu0 %v2088
      %2381 = vmatmul.mubr.bf16.gmra.mrb[0].mxu0 %v2087
      %v2382 = vpop.f32.mrb[0].mxu0
      %v2383 = vadd.f32 0.0, %v2382
      %v2384 = vpop.f32.mrb[0].mxu0
      %v2385 = vpop.f32.mrb[0].mxu0
      %v2386 = vadd.f32 0.0, %v2385
      %v2387 = vpop.f32.mrb[0].mxu0
      %2388 = vmatprep.mubr.bf16.mxu0 %v2091
      %2389 = vmatmul.mubr.bf16.gmra.mrb[0].mxu0 %v2090
      %v2390 = vpop.f32.mrb[0].mxu0
      %v2391 = vadd.f32 0.0, %v2390
      %v2392 = vpop.f32.mrb[0].mxu0
      %v2393 = vpop.f32.mrb[0].mxu0
      %v2394 = vadd.f32 0.0, %v2393
      %v2395 = vpop.f32.mrb[0].mxu0
      %2396 = vmatprep.mubr.bf16.mxu0 %v2094
      %2397 = vmatmul.mubr.bf16.gmra.mrb[0].mxu0 %v2093
      %v2398 = vpop.f32.mrb[0].mxu0
      %v2399 = vadd.f32 0.0, %v2398
      %v2400 = vpop.f32.mrb[0].mxu0
      %v2401 = vpop.f32.mrb[0].mxu0
      %v2402 = vadd.f32 0.0, %v2401
      %v2403 = vpop.f32.mrb[0].mxu0
      %2404 = vmatprep.mubr.bf16.mxu0 %v2097
      %2405 = vmatmul.mubr.bf16.gmra.mrb[0].mxu0 %v2096
      %v2406 = vpop.f32.mrb[0].mxu0
      %v2407 = vadd.f32 0.0, %v2406
      %v2408 = vpop.f32.mrb[0].mxu0
      %v2409 = vpop.f32.mrb[0].mxu0
      %v2410 = vadd.f32 0.0, %v2409
      %v2411 = vpop.f32.mrb[0].mxu0
      %2412 = vmatprep.mubr.bf16.mxu0 %v2100
      %2413 = vmatmul.mubr.bf16.gmra.mrb[0].mxu0 %v2099
      %v2414 = vpop.f32.mrb[0].mxu0
      %v2415 = vadd.f32 0.0, %v2414
      %v2416 = vpop.f32.mrb[0].mxu0
      %v2417 = vpop.f32.mrb[0].mxu0
      %v2418 = vadd.f32 0.0, %v2417
      %v2419 = vpop.f32.mrb[0].mxu0
      %2420 = vmatprep.mubr.bf16.mxu0 %v2103
      %2421 = vmatmul.mubr.bf16.gmra.mrb[0].mxu0 %v2102
      %v2422 = vpop.f32.mrb[0].mxu0
      %v2423 = vadd.f32 0.0, %v2422
      %v2424 = vpop.f32.mrb[0].mxu0
      %v2425 = vpop.f32.mrb[0].mxu0
      %v2426 = vadd.f32 0.0, %v2425
      %v2427 = vpop.f32.mrb[0].mxu0
      %2428 = vmatprep.mubr.bf16.mxu0 %v2106
      %2429 = vmatmul.mubr.bf16.gmra.mrb[0].mxu0 %v2105
      %v2430 = vpop.f32.mrb[0].mxu0
      %v2431 = vadd.f32 0.0, %v2430
      %v2432 = vpop.f32.mrb[0].mxu0
      %v2433 = vpop.f32.mrb[0].mxu0
      %v2434 = vadd.f32 0.0, %v2433
      %v2435 = vpop.f32.mrb[0].mxu0
      %2436 = vmatprep.mubr.bf16.mxu0 %v2109
      %2437 = vmatmul.mubr.bf16.gmra.mrb[0].mxu0 %v2108
      %v2438 = vpop.f32.mrb[0].mxu0
      %v2439 = vadd.f32 0.0, %v2438
      %v2440 = vpop.f32.mrb[0].mxu0
      %v2441 = vpop.f32.mrb[0].mxu0
      %v2442 = vadd.f32 0.0, %v2441
      %v2443 = vpop.f32.mrb[0].mxu0
      %2444 = vmatprep.mubr.bf16.mxu0 %v2112
      %2445 = vmatmul.mubr.bf16.gmra.mrb[0].mxu0 %v2111
      %v2446 = vpop.f32.mrb[0].mxu0
      %v2447 = vadd.f32 0.0, %v2446
      %v2448 = vpop.f32.mrb[0].mxu0
      %v2449 = vpop.f32.mrb[0].mxu0
      %v2450 = vadd.f32 0.0, %v2449
      %v2451 = vpop.f32.mrb[0].mxu0
      %2452 = vmatprep.mubr.bf16.mxu0 %v2115
      %2453 = vmatmul.mubr.bf16.gmra.mrb[0].mxu0 %v2114
      %v2454 = vpop.f32.mrb[0].mxu0
      %v2455 = vadd.f32 0.0, %v2454
      %v2456 = vpop.f32.mrb[0].mxu0
      %v2457 = vpop.f32.mrb[0].mxu0
      %v2458 = vadd.f32 0.0, %v2457
      %v2459 = vpop.f32.mrb[0].mxu0
      %2460 = vmatprep.mubr.bf16.mxu0 %v2118
      %2461 = vmatmul.mubr.bf16.gmra.mrb[0].mxu0 %v2117
      %v2462 = vpop.f32.mrb[0].mxu0
      %v2463 = vadd.f32 0.0, %v2462
      %v2464 = vpop.f32.mrb[0].mxu0
      %v2465 = vpop.f32.mrb[0].mxu0
      %v2466 = vadd.f32 0.0, %v2465
      %v2467 = vpop.f32.mrb[0].mxu0
      %2468 = vmatprep.mubr.bf16.mxu0 %v2121
      %2469 = vmatmul.mubr.bf16.gmra.mrb[0].mxu0 %v2120
      %v2470 = vpop.f32.mrb[0].mxu0
      %v2471 = vadd.f32 0.0, %v2470
      %v2472 = vpop.f32.mrb[0].mxu0
      %v2473 = vpop.f32.mrb[0].mxu0
      %v2474 = vadd.f32 0.0, %v2473
      %v2475 = vpop.f32.mrb[0].mxu0
      %2476 = vdwg.mxu0
      %2477 = vmatprep.subr.bf16.mxu0 0
      %2478 = vmatpush1.bf16.msra.mxu0 %v2284
      %2479 = vmatprep.subr.bf16.mxu0 0
      %2480 = vmatpush1.bf16.msra.mxu0 %v2285
      %2481 = vmatprep.subr.bf16.mxu0 0
      %2482 = vmatpush1.bf16.msra.mxu0 %v2286
      %2483 = vmatprep.subr.bf16.mxu0 0
      %2484 = vmatpush1.bf16.msra.mxu0 %v2287
      %2485 = vmatprep.subr.bf16.mxu0 0
      %2486 = vmatpush1.bf16.msra.mxu0 %v2288
      %2487 = vmatprep.subr.bf16.mxu0 0
      %2488 = vmatpush1.bf16.msra.mxu0 %v2289
      %2489 = vmatprep.subr.bf16.mxu0 0
      %2490 = vmatpush1.bf16.msra.mxu0 %v2290
      %2491 = vmatprep.subr.bf16.mxu0 0
      %2492 = vmatpush1.bf16.msra.mxu0 %v2291
      %2493 = vmatprep.subr.bf16.mxu0 0
      %2494 = vmatpush1.bf16.msra.mxu0 0
      %2495 = vmatprep.subr.bf16.mxu0 0
      %2496 = vmatpush1.bf16.msra.mxu0 0
      %2497 = vmatprep.subr.bf16.mxu0 0
      %2498 = vmatpush1.bf16.msra.mxu0 0
      %2499 = vmatprep.subr.bf16.mxu0 0
      %2500 = vmatpush1.bf16.msra.mxu0 0
      %2501 = vmatprep.subr.bf16.mxu0 0
      %2502 = vmatpush1.bf16.msra.mxu0 0
      %2503 = vmatprep.subr.bf16.mxu0 0
      %2504 = vmatpush1.bf16.msra.mxu0 0
      %2505 = vmatprep.subr.bf16.mxu0 0
      %2506 = vmatpush1.bf16.msra.mxu0 0
      %2507 = vmatprep.subr.bf16.mxu0 0
      %2508 = vmatpush1.bf16.msra.mxu0 0
      %2509 = vmatprep.mubr.bf16.mxu0 0
      %2510 = vmatmul.mubr.bf16.gmra.mrb[0].mxu0 %v2077
      %v2511 = vpop.f32.mrb[0].mxu0
      %v2512 = vadd.f32 %v2351, %v2511
      %v2513 = vpop.f32.mrb[0].mxu0
      %v2514 = vpop.f32.mrb[0].mxu0
      %v2515 = vadd.f32 %v2354, %v2514
      %v2516 = vpop.f32.mrb[0].mxu0
      %2517 = vmatprep.mubr.bf16.mxu0 0
      %2518 = vmatmul.mubr.bf16.gmra.mrb[0].mxu0 %v2080
      %v2519 = vpop.f32.mrb[0].mxu0
      %v2520 = vadd.f32 %v2359, %v2519
      %v2521 = vpop.f32.mrb[0].mxu0
      %v2522 = vpop.f32.mrb[0].mxu0
      %v2523 = vadd.f32 %v2362, %v2522
      %v2524 = vpop.f32.mrb[0].mxu0
      %2525 = vmatprep.mubr.bf16.mxu0 0
      %2526 = vmatmul.mubr.bf16.gmra.mrb[0].mxu0 %v2083
      %v2527 = vpop.f32.mrb[0].mxu0
      %v2528 = vadd.f32 %v2367, %v2527
      %v2529 = vpop.f32.mrb[0].mxu0
      %v2530 = vpop.f32.mrb[0].mxu0
      %v2531 = vadd.f32 %v2370, %v2530
      %v2532 = vpop.f32.mrb[0].mxu0
      %2533 = vmatprep.mubr.bf16.mxu0 0
      %2534 = vmatmul.mubr.bf16.gmra.mrb[0].mxu0 %v2086
      %v2535 = vpop.f32.mrb[0].mxu0
      %v2536 = vadd.f32 %v2375, %v2535
      %v2537 = vpop.f32.mrb[0].mxu0
      %v2538 = vpop.f32.mrb[0].mxu0
      %v2539 = vadd.f32 %v2378, %v2538
      %v2540 = vpop.f32.mrb[0].mxu0
      %2541 = vmatprep.mubr.bf16.mxu0 0
      %2542 = vmatmul.mubr.bf16.gmra.mrb[0].mxu0 %v2089
      %v2543 = vpop.f32.mrb[0].mxu0
      %v2544 = vadd.f32 %v2383, %v2543
      %v2545 = vpop.f32.mrb[0].mxu0
      %v2546 = vpop.f32.mrb[0].mxu0
      %v2547 = vadd.f32 %v2386, %v2546
      %v2548 = vpop.f32.mrb[0].mxu0
      %2549 = vmatprep.mubr.bf16.mxu0 0
      %2550 = vmatmul.mubr.bf16.gmra.mrb[0].mxu0 %v2092
      %v2551 = vpop.f32.mrb[0].mxu0
      %v2552 = vadd.f32 %v2391, %v2551
      %v2553 = vpop.f32.mrb[0].mxu0
      %v2554 = vpop.f32.mrb[0].mxu0
      %v2555 = vadd.f32 %v2394, %v2554
      %v2556 = vpop.f32.mrb[0].mxu0
      %2557 = vmatprep.mubr.bf16.mxu0 0
      %2558 = vmatmul.mubr.bf16.gmra.mrb[0].mxu0 %v2095
      %v2559 = vpop.f32.mrb[0].mxu0
      %v2560 = vadd.f32 %v2399, %v2559
      %v2561 = vpop.f32.mrb[0].mxu0
      %v2562 = vpop.f32.mrb[0].mxu0
      %v2563 = vadd.f32 %v2402, %v2562
      %v2564 = vpop.f32.mrb[0].mxu0
      %2565 = vmatprep.mubr.bf16.mxu0 0
      %2566 = vmatmul.mubr.bf16.gmra.mrb[0].mxu0 %v2098
      %v2567 = vpop.f32.mrb[0].mxu0
      %v2568 = vadd.f32 %v2407, %v2567
      %v2569 = vpop.f32.mrb[0].mxu0
      %v2570 = vpop.f32.mrb[0].mxu0
      %v2571 = vadd.f32 %v2410, %v2570
      %v2572 = vpop.f32.mrb[0].mxu0
      %2573 = vmatprep.mubr.bf16.mxu0 0
      %2574 = vmatmul.mubr.bf16.gmra.mrb[0].mxu0 %v2101
      %v2575 = vpop.f32.mrb[0].mxu0
      %v2576 = vadd.f32 %v2415, %v2575
      %v2577 = vpop.f32.mrb[0].mxu0
      %v2578 = vpop.f32.mrb[0].mxu0
      %v2579 = vadd.f32 %v2418, %v2578
      %v2580 = vpop.f32.mrb[0].mxu0
      %2581 = vmatprep.mubr.bf16.mxu0 0
      %2582 = vmatmul.mubr.bf16.gmra.mrb[0].mxu0 %v2104
      %v2583 = vpop.f32.mrb[0].mxu0
      %v2584 = vadd.f32 %v2423, %v2583
      %v2585 = vpop.f32.mrb[0].mxu0
      %v2586 = vpop.f32.mrb[0].mxu0
      %v2587 = vadd.f32 %v2426, %v2586
      %v2588 = vpop.f32.mrb[0].mxu0
      %2589 = vmatprep.mubr.bf16.mxu0 0
      %2590 = vmatmul.mubr.bf16.gmra.mrb[0].mxu0 %v2107
      %v2591 = vpop.f32.mrb[0].mxu0
      %v2592 = vadd.f32 %v2431, %v2591
      %v2593 = vpop.f32.mrb[0].mxu0
      %v2594 = vpop.f32.mrb[0].mxu0
      %v2595 = vadd.f32 %v2434, %v2594
      %v2596 = vpop.f32.mrb[0].mxu0
      %2597 = vmatprep.mubr.bf16.mxu0 0
      %2598 = vmatmul.mubr.bf16.gmra.mrb[0].mxu0 %v2110
      %v2599 = vpop.f32.mrb[0].mxu0
      %v2600 = vadd.f32 %v2439, %v2599
      %v2601 = vpop.f32.mrb[0].mxu0
      %v2602 = vpop.f32.mrb[0].mxu0
      %v2603 = vadd.f32 %v2442, %v2602
      %v2604 = vpop.f32.mrb[0].mxu0
      %2605 = vmatprep.mubr.bf16.mxu0 0
      %2606 = vmatmul.mubr.bf16.gmra.mrb[0].mxu0 %v2113
      %v2607 = vpop.f32.mrb[0].mxu0
      %v2608 = vadd.f32 %v2447, %v2607
      %v2609 = vpop.f32.mrb[0].mxu0
      %v2610 = vpop.f32.mrb[0].mxu0
      %v2611 = vadd.f32 %v2450, %v2610
      %v2612 = vpop.f32.mrb[0].mxu0
      %2613 = vmatprep.mubr.bf16.mxu0 0
      %2614 = vmatmul.mubr.bf16.gmra.mrb[0].mxu0 %v2116
      %v2615 = vpop.f32.mrb[0].mxu0
      %v2616 = vadd.f32 %v2455, %v2615
      %v2617 = vpop.f32.mrb[0].mxu0
      %v2618 = vpop.f32.mrb[0].mxu0
      %v2619 = vadd.f32 %v2458, %v2618
      %v2620 = vpop.f32.mrb[0].mxu0
      %2621 = vmatprep.mubr.bf16.mxu0 0
      %2622 = vmatmul.mubr.bf16.gmra.mrb[0].mxu0 %v2119
      %v2623 = vpop.f32.mrb[0].mxu0
      %v2624 = vadd.f32 %v2463, %v2623
      %v2625 = vpop.f32.mrb[0].mxu0
      %v2626 = vpop.f32.mrb[0].mxu0
      %v2627 = vadd.f32 %v2466, %v2626
      %v2628 = vpop.f32.mrb[0].mxu0
      %2629 = vmatprep.mubr.bf16.mxu0 0
      %2630 = vmatmul.mubr.bf16.gmra.mrb[0].mxu0 %v2122
      %v2631 = vpop.f32.mrb[0].mxu0
      %v2632 = vadd.f32 %v2471, %v2631
      %v2633 = vpop.f32.mrb[0].mxu0
      %v2634 = vpop.f32.mrb[0].mxu0
      %v2635 = vadd.f32 %v2474, %v2634
      %v2636 = vpop.f32.mrb[0].mxu0
      %2637 = vdwg.mxu0
      %v2638 = vadd.f32 %v1948, %v2512
      %v2639 = vadd.f32 %v1951, %v2515
      %v2640 = vadd.f32 %v1956, %v2520
      %v2641 = vadd.f32 %v1959, %v2523
      %v2642 = vadd.f32 %v1964, %v2528
      %v2643 = vadd.f32 %v1967, %v2531
      %v2644 = vadd.f32 %v1972, %v2536
      %v2645 = vadd.f32 %v1975, %v2539
      %v2646 = vadd.f32 %v1980, %v2544
      %v2647 = vadd.f32 %v1983, %v2547
      %v2648 = vadd.f32 %v1988, %v2552
      %v2649 = vadd.f32 %v1991, %v2555
      %v2650 = vadd.f32 %v1996, %v2560
      %v2651 = vadd.f32 %v1999, %v2563
      %v2652 = vadd.f32 %v2004, %v2568
      %v2653 = vadd.f32 %v2007, %v2571
      %v2654 = vadd.f32 %v2012, %v2576
      %v2655 = vadd.f32 %v2015, %v2579
      %v2656 = vadd.f32 %v2020, %v2584
      %v2657 = vadd.f32 %v2023, %v2587
      %v2658 = vadd.f32 %v2028, %v2592
      %v2659 = vadd.f32 %v2031, %v2595
      %v2660 = vadd.f32 %v2036, %v2600
      %v2661 = vadd.f32 %v2039, %v2603
      %v2662 = vadd.f32 %v2044, %v2608
      %v2663 = vadd.f32 %v2047, %v2611
      %v2664 = vadd.f32 %v2052, %v2616
      %v2665 = vadd.f32 %v2055, %v2619
      %v2666 = vadd.f32 %v2060, %v2624
      %v2667 = vadd.f32 %v2063, %v2627
      %v2668 = vadd.f32 %v2068, %v2632
      %v2669 = vadd.f32 %v2071, %v2635
      %v2670 = vld [vmem:[%s4] sm:$0x1]
      %v2672 = vlaneseq
      %v2673 = vshrl.u32 %v2672, 7
      %v2674 = vsub.s32 0, %v2673
      %v2675 = vrot.slane %v2670, %v2674
      %v2677 = vadd.f32 %v2638, %v2675
      %v2678 = vadd.f32 %v2639, %v2675
      %v2679 = vadd.f32 %v2640, %v2675
      %v2680 = vadd.f32 %v2641, %v2675
      %v2681 = vadd.f32 %v2642, %v2675
      %v2682 = vadd.f32 %v2643, %v2675
      %v2683 = vadd.f32 %v2644, %v2675
      %v2684 = vadd.f32 %v2645, %v2675
      %v2685 = vadd.f32 %v2646, %v2675
      %v2686 = vadd.f32 %v2647, %v2675
      %v2687 = vadd.f32 %v2648, %v2675
      %v2688 = vadd.f32 %v2649, %v2675
      %v2689 = vadd.f32 %v2650, %v2675
      %v2690 = vadd.f32 %v2651, %v2675
      %v2691 = vadd.f32 %v2652, %v2675
      %v2692 = vadd.f32 %v2653, %v2675
      %v2693 = vadd.f32 %v2654, %v2675
      %v2694 = vadd.f32 %v2655, %v2675
      %v2695 = vadd.f32 %v2656, %v2675
      %v2696 = vadd.f32 %v2657, %v2675
      %v2697 = vadd.f32 %v2658, %v2675
      %v2698 = vadd.f32 %v2659, %v2675
      %v2699 = vadd.f32 %v2660, %v2675
      %v2700 = vadd.f32 %v2661, %v2675
      %v2701 = vadd.f32 %v2662, %v2675
      %v2702 = vadd.f32 %v2663, %v2675
      %v2703 = vadd.f32 %v2664, %v2675
      %v2704 = vadd.f32 %v2665, %v2675
      %v2705 = vadd.f32 %v2666, %v2675
      %v2706 = vadd.f32 %v2667, %v2675
      %v2707 = vadd.f32 %v2668, %v2675
      %v2708 = vadd.f32 %v2669, %v2675
      %v2709 = vmax.f32 %v2677, 0.0
      %v2710 = vmax.f32 %v2678, 0.0
      %v2711 = vmax.f32 %v2679, 0.0
      %v2712 = vmax.f32 %v2680, 0.0
      %v2713 = vmax.f32 %v2681, 0.0
      %v2714 = vmax.f32 %v2682, 0.0
      %v2715 = vmax.f32 %v2683, 0.0
      %v2716 = vmax.f32 %v2684, 0.0
      %v2717 = vmax.f32 %v2685, 0.0
      %v2718 = vmax.f32 %v2686, 0.0
      %v2719 = vmax.f32 %v2687, 0.0
      %v2720 = vmax.f32 %v2688, 0.0
      %v2721 = vmax.f32 %v2689, 0.0
      %v2722 = vmax.f32 %v2690, 0.0
      %v2723 = vmax.f32 %v2691, 0.0
      %v2724 = vmax.f32 %v2692, 0.0
      %v2725 = vmax.f32 %v2693, 0.0
      %v2726 = vmax.f32 %v2694, 0.0
      %v2727 = vmax.f32 %v2695, 0.0
      %v2728 = vmax.f32 %v2696, 0.0
      %v2729 = vmax.f32 %v2697, 0.0
      %v2730 = vmax.f32 %v2698, 0.0
      %v2731 = vmax.f32 %v2699, 0.0
      %v2732 = vmax.f32 %v2700, 0.0
      %v2733 = vmax.f32 %v2701, 0.0
      %v2734 = vmax.f32 %v2702, 0.0
      %v2735 = vmax.f32 %v2703, 0.0
      %v2736 = vmax.f32 %v2704, 0.0
      %v2737 = vmax.f32 %v2705, 0.0
      %v2738 = vmax.f32 %v2706, 0.0
      %v2739 = vmax.f32 %v2707, 0.0
      %v2740 = vmax.f32 %v2708, 0.0
      %v2741 = vpack.c.bf16 %v2710, %v2709
      %v2742 = vpack.c.bf16 %v2712, %v2711
      %v2743 = vpack.c.bf16 %v2714, %v2713
      %v2744 = vpack.c.bf16 %v2716, %v2715
      %v2745 = vpack.c.bf16 %v2718, %v2717
      %v2746 = vpack.c.bf16 %v2720, %v2719
      %v2747 = vpack.c.bf16 %v2722, %v2721
      %v2748 = vpack.c.bf16 %v2724, %v2723
      %v2749 = vpack.c.bf16 %v2726, %v2725
      %v2750 = vpack.c.bf16 %v2728, %v2727
      %v2751 = vpack.c.bf16 %v2730, %v2729
      %v2752 = vpack.c.bf16 %v2732, %v2731
      %v2753 = vpack.c.bf16 %v2734, %v2733
      %v2754 = vpack.c.bf16 %v2736, %v2735
      %v2755 = vpack.c.bf16 %v2738, %v2737
      %v2756 = vpack.c.bf16 %v2740, %v2739
      %v2773 = vunpack.c.l.b16 %v2741
      %v2774 = vunpack.c.h.b16 %v2741
      %v2775 = vunpack.c.l.b16 %v2742
      %v2776 = vunpack.c.h.b16 %v2742
      %v2777 = vunpack.c.l.b16 %v2743
      %v2778 = vunpack.c.h.b16 %v2743
      %v2779 = vunpack.c.l.b16 %v2744
      %v2780 = vunpack.c.h.b16 %v2744
      %v2781 = vunpack.c.l.b16 %v2745
      %v2782 = vunpack.c.h.b16 %v2745
      %v2783 = vunpack.c.l.b16 %v2746
      %v2784 = vunpack.c.h.b16 %v2746
      %v2785 = vunpack.c.l.b16 %v2747
      %v2786 = vunpack.c.h.b16 %v2747
      %v2787 = vunpack.c.l.b16 %v2748
      %v2788 = vunpack.c.h.b16 %v2748
      %v2789 = vunpack.c.l.b16 %v2749
      %v2790 = vunpack.c.h.b16 %v2749
      %v2791 = vunpack.c.l.b16 %v2750
      %v2792 = vunpack.c.h.b16 %v2750
      %v2793 = vunpack.c.l.b16 %v2751
      %v2794 = vunpack.c.h.b16 %v2751
      %v2795 = vunpack.c.l.b16 %v2752
      %v2796 = vunpack.c.h.b16 %v2752
      %v2797 = vunpack.c.l.b16 %v2753
      %v2798 = vunpack.c.h.b16 %v2753
      %v2799 = vunpack.c.l.b16 %v2754
      %v2800 = vunpack.c.h.b16 %v2754
      %v2801 = vunpack.c.l.b16 %v2755
      %v2802 = vunpack.c.h.b16 %v2755
      %v2803 = vunpack.c.l.b16 %v2756
      %v2804 = vunpack.c.h.b16 %v2756
      %v2805 = vpack.c.b16 %v2773, %v2773
      %v2806 = vpack.c.b16 %v2774, %v2774
      %v2807 = vpack.c.b16 %v2775, %v2775
      %v2808 = vpack.c.b16 %v2776, %v2776
      %v2809 = vpack.c.b16 %v2777, %v2777
      %v2810 = vpack.c.b16 %v2778, %v2778
      %v2811 = vpack.c.b16 %v2779, %v2779
      %v2812 = vpack.c.b16 %v2780, %v2780
      %v2813 = vpack.c.b16 %v2781, %v2781
      %v2814 = vpack.c.b16 %v2782, %v2782
      %v2815 = vpack.c.b16 %v2783, %v2783
      %v2816 = vpack.c.b16 %v2784, %v2784
      %v2817 = vpack.c.b16 %v2785, %v2785
      %v2818 = vpack.c.b16 %v2786, %v2786
      %v2819 = vpack.c.b16 %v2787, %v2787
      %v2820 = vpack.c.b16 %v2788, %v2788
      %v2821 = vpack.c.b16 %v2789, %v2789
      %v2822 = vpack.c.b16 %v2790, %v2790
      %v2823 = vpack.c.b16 %v2791, %v2791
      %v2824 = vpack.c.b16 %v2792, %v2792
      %v2825 = vpack.c.b16 %v2793, %v2793
      %v2826 = vpack.c.b16 %v2794, %v2794
      %v2827 = vpack.c.b16 %v2795, %v2795
      %v2828 = vpack.c.b16 %v2796, %v2796
      %v2829 = vpack.c.b16 %v2797, %v2797
      %v2830 = vpack.c.b16 %v2798, %v2798
      %v2831 = vpack.c.b16 %v2799, %v2799
      %v2832 = vpack.c.b16 %v2800, %v2800
      %v2833 = vpack.c.b16 %v2801, %v2801
      %v2834 = vpack.c.b16 %v2802, %v2802
      %v2835 = vpack.c.b16 %v2803, %v2803
      %v2836 = vpack.c.b16 %v2804, %v2804
      %2869 = vst [vmem:[%s224] sm:$0xf] %v2805
      %2870 = vst [vmem:[%s224 + $0x4] sm:$0xf] %v2806
      %2871 = vst [vmem:[%s224 + $0x8] sm:$0xf] %v2807
      %2872 = vst [vmem:[%s224 + $0xc] sm:$0xf] %v2808
      %2873 = vst [vmem:[%s224 + $0x10] sm:$0xf] %v2809
      %2874 = vst [vmem:[%s224 + $0x14] sm:$0xf] %v2810
      %2875 = vst [vmem:[%s224 + $0x18] sm:$0xf] %v2811
      %2876 = vst [vmem:[%s224 + $0x1c] sm:$0xf] %v2812
      %2877 = vst [vmem:[%s224 + $0x20] sm:$0xf] %v2813
      %2878 = vst [vmem:[%s224 + $0x24] sm:$0xf] %v2814
      %2879 = vst [vmem:[%s224 + $0x28] sm:$0xf] %v2815
      %2880 = vst [vmem:[%s224 + $0x2c] sm:$0xf] %v2816
      %2881 = vst [vmem:[%s224 + $0x30] sm:$0xf] %v2817
      %2882 = vst [vmem:[%s224 + $0x34] sm:$0xf] %v2818
      %2883 = vst [vmem:[%s224 + $0x38] sm:$0xf] %v2819
      %2884 = vst [vmem:[%s224 + $0x3c] sm:$0xf] %v2820
      %2885 = vst [vmem:[%s224 + $0x40] sm:$0xf] %v2821
      %2886 = vst [vmem:[%s224 + $0x44] sm:$0xf] %v2822
      %2887 = vst [vmem:[%s224 + $0x48] sm:$0xf] %v2823
      %2888 = vst [vmem:[%s224 + $0x4c] sm:$0xf] %v2824
      %2889 = vst [vmem:[%s224 + $0x50] sm:$0xf] %v2825
      %2890 = vst [vmem:[%s224 + $0x54] sm:$0xf] %v2826
      %2891 = vst [vmem:[%s224 + $0x58] sm:$0xf] %v2827
      %2892 = vst [vmem:[%s224 + $0x5c] sm:$0xf] %v2828
      %2893 = vst [vmem:[%s224 + $0x60] sm:$0xf] %v2829
      %2894 = vst [vmem:[%s224 + $0x64] sm:$0xf] %v2830
      %2895 = vst [vmem:[%s224 + $0x68] sm:$0xf] %v2831
      %2896 = vst [vmem:[%s224 + $0x6c] sm:$0xf] %v2832
      %2897 = vst [vmem:[%s224 + $0x70] sm:$0xf] %v2833
      %2898 = vst [vmem:[%s224 + $0x74] sm:$0xf] %v2834
      %2899 = vst [vmem:[%s224 + $0x78] sm:$0xf] %v2835
      %2900 = vst [vmem:[%s224 + $0x7c] sm:$0xf] %v2836
      %s2901 = smul.u32 32, %s16
      %p2902 = scmp.lt.s32.totalorder %s2901, 63
      %s2903 = scalar_select %p2902, %s2901, 63
      %s2904 = smul.addr %s2903, 4
      %s2905 = scalar_lea.vmem %s5, %s2904
      // Predicated region
      $region41: #{bottleneck_forward.2} parent=39 // pred_check
        %p2906 = pneg %p144
      $region42: #{bottleneck_forward.2} parent=39 // pred_check_branch
        %2908 = sbr.rel (%p2906) target = $region44
      $region43: #{bottleneck_forward.2} parent=39 // pred_region
        %s2909 = smul.u32 32, %s16
      $region44: #{bottleneck_forward.2} parent=39 // pred_fallthru
        _
    $region40: #{bottleneck_forward.2} parent=5 // pred_fallthru
      _
    %p2910 = scmp.le.s32.totalorder 2, %s11
    // Predicated region
    $region45: #{bottleneck_forward.2} parent=5 // pred_check
      %p2911 = pneg %p2910
    $region46: #{bottleneck_forward.2} parent=5 // pred_check_branch
      %2913 = sbr.rel (%p2911) target = $region48
    $region47: #{bottleneck_forward.2} parent=5 // pred_region
      %s2914 = ssub.s32 %s11, 2
      // Predicated region
      $region49: #{bottleneck_forward.2} parent=47 // pred_check
        %p2915 = pneg %p150
      $region50: #{bottleneck_forward.2} parent=47 // pred_check_branch
        %2917 = sbr.rel (%p2915) target = $region52
      $region51: #{bottleneck_forward.2} parent=47 // pred_region
        %s2918 = smul.u32 32, %s17
        %p2919 = scmp.lt.s32.totalorder %s2918, 63
        %s2920 = scalar_select %p2919, %s2918, 63
        %s2921 = smul.addr %s2920, 4
        %s2922 = scalar_lea.vmem %s5, %s2921
      $region52: #{bottleneck_forward.2} parent=47 // pred_fallthru
        _
    $region48: #{bottleneck_forward.2} parent=5 // pred_fallthru
      _
  $region6: #{bottleneck_forward.2} parent=0 // loop_footer
    %s15 = sadd.s32 1, %s11
  $region7: #{bottleneck_forward.2} parent=0 // loop_footer_branch
    %10 = sbr.rel target = $region3
  $region8: #{bottleneck_forward.2} parent=0 // loop_exit
    _

</llo_original>
